<compile_context>
chip_gen: v5e
topology: v5e:2x2
jax: 0.10.0
libtpu: 0.0.40
codegen_flags: <defaults>
</compile_context>

<pallas_src>
import functools

import numpy as np
import jax
import jax.numpy as jnp
from jax import lax
from jax.experimental import pallas as pl
from jax.experimental.pallas import tpu as pltpu


def make_mask_b_np(kh, kw):
    """PixelCNN type-'B' per-tap mask (1 = live tap), static numpy."""
    m = np.ones((kh, kw), np.float32)
    m[kh // 2, kw // 2 + 1:] = 0.0
    m[kh // 2 + 1:, :] = 0.0
    return m


def _live_taps(tap_mask):
    """(ki, kj) pairs whose tap is not fully masked, row-major order."""
    kh, kw = tap_mask.shape
    return tuple((ki, kj) for ki in range(kh) for kj in range(kw)
                 if tap_mask[ki, kj] != 0.0)


def _residual_block_kernel(x_ref, w1_ref, b1_ref, w2_ref, b2_ref, o_ref,
                           pbuf_ref, col_ref, *, pad, live, C):
    """Fused PixelCNN residual block for one batch element.

    x_ref   : (1, H, W, C)        f32  input (true channel count in HBM)
    w*_ref  : (n_live*CP, CP)     bf16 masked, tap-folded, channel-padded weights
    b*_ref  : (1, CP)             f32  channel-padded biases
    o_ref   : (1, H, W, C)        f32  output
    pbuf_ref: (Hp, Wp8, CP)       bf16 scratch: spatially padded activations
    col_ref : (H, W, n_live*CP)   bf16 scratch: im2col patches of the live taps
    """
    _, H, W, _ = x_ref.shape
    CP = pbuf_ref.shape[-1]
    Hp, Wp8 = pbuf_ref.shape[0], pbuf_ref.shape[1]
    Kp = len(live) * CP

    # ---- zero halo (and padded-channel interior) ONCE per grid step --------
    # Everything the convs read is rewritten this step, so the batch grid axis
    # is safely "parallel".
    pbuf_ref[0:pad, :, :] = jnp.zeros((pad, Wp8, CP), jnp.bfloat16)
    pbuf_ref[pad + H:Hp, :, :] = jnp.zeros((Hp - pad - H, Wp8, CP), jnp.bfloat16)
    pbuf_ref[pad:pad + H, 0:pad, :] = jnp.zeros((H, pad, CP), jnp.bfloat16)
    pbuf_ref[pad:pad + H, pad + W:Wp8, :] = (
        jnp.zeros((H, Wp8 - pad - W, CP), jnp.bfloat16))
    if C < CP:
        # Padded input channels must hold finite values: the matching weight
        # rows are zero, but uninitialized VMEM could be NaN/Inf (0*NaN = NaN).
        pbuf_ref[pad:pad + H, pad:pad + W, C:CP] = (
            jnp.zeros((H, W, CP - C), jnp.bfloat16))

    def conv_relu(w_ref, b_ref):
        # Gather live-tap patches (bf16, no per-tap reshape/cast) into the
        # im2col scratch, then one wide matmul with f32 accumulation.
        for t, (ki, kj) in enumerate(live):
            col_ref[:, :, t * CP:(t + 1) * CP] = pbuf_ref[ki:ki + H, kj:kj + W, :]
        y = jnp.dot(col_ref[...].reshape(H * W, Kp), w_ref[...],
                    preferred_element_type=jnp.float32)
        # Bias / ReLU in f32 (v5e has no bf16 VPU path).
        return jnp.maximum(y + b_ref[0], 0.0)               # (H*W, CP) f32

    # ---- conv1 + ReLU -------------------------------------------------------
    pbuf_ref[pad:pad + H, pad:pad + W, 0:C] = x_ref[0].astype(jnp.bfloat16)
    h1 = conv_relu(w1_ref, b1_ref)

    # ---- conv2 + ReLU (h1's padded out-channels are exactly zero, so the
    # full-width interior store preserves the zero padded-channel invariant) --
    pbuf_ref[pad:pad + H, pad:pad + W, :] = h1.reshape(H, W, CP).astype(jnp.bfloat16)
    h2 = conv_relu(w2_ref, b2_ref)

    # ---- residual add (f32) and store of the true C channels ---------------
    o_ref[0] = (h2.reshape(H, W, CP)[:, :, 0:C] + x_ref[0]).astype(o_ref.dtype)


def residual_block(x_nchw, w1, b1, w2, b2, *, padding):
    """x: (N,C,H,W); w1/w2: (Cout,Cin,KH,KW) PyTorch layout (unmasked); b: (Cout,)."""
    N, C, H, W = x_nchw.shape
    Cout, Cin, KH, KW = w1.shape
    assert Cout == Cin == C, "residual add requires out_channels == in_channels"
    assert KH % 2 == 1 and KW % 2 == 1 and padding == KH // 2 == KW // 2, \
        "kernel assumes 'same' padding (pad == kernel_size // 2)"

    tap_mask = make_mask_b_np(KH, KW)
    live = _live_taps(tap_mask)                  # e.g. 5 of 9 taps for 3x3 'B'
    n_live = len(live)

    CP = ((C + 127) // 128) * 128                # in-kernel matmul channel width
    Kp = n_live * CP                             # folded im2col contraction dim
    mask_oihw = jnp.asarray(tap_mask)[None, None, :, :]

    def prep_w(w):
        hwio = jnp.transpose(w * mask_oihw, (2, 3, 1, 0))      # (KH,KW,Cin,Cout)
        slabs = [jnp.pad(hwio[ki, kj], ((0, CP - Cin), (0, CP - Cout)))
                 for (ki, kj) in live]
        return jnp.concatenate(slabs, axis=0).astype(jnp.bfloat16)   # (Kp, CP)

    def prep_b(b):
        return jnp.pad(b, (0, CP - Cout)).reshape(1, CP).astype(jnp.float32)

    w1k, w2k = prep_w(w1), prep_w(w2)
    b1k, b2k = prep_b(b1), prep_b(b2)

    # NCHW -> NHWC; channels stay at the true C in HBM (no padded HBM traffic).
    x = jnp.transpose(x_nchw, (0, 2, 3, 1)).astype(jnp.float32)

    Hp = H + 2 * padding
    Wp8 = ((W + 2 * padding + 7) // 8) * 8       # sublane-friendly scratch width

    # Explicit VMEM budget: double-buffered blocks + scratch + f32 temporaries.
    est = (2 * 2 * (H * W * C * 4)                    # x / out blocks, x2 buffers
           + 2 * 2 * (Kp * CP * 2 + CP * 4)           # conv1/conv2 weights+bias
           + Hp * Wp8 * CP * 2                        # padded activation (bf16)
           + H * W * Kp * 2                           # im2col scratch (bf16)
           + 3 * H * W * CP * 4)                      # f32 matmul result / h1 / out
    vmem_limit = int(min(max(2 * est, 32 * 1024 * 1024), 64 * 1024 * 1024))
    # TODO(synk): if 2*est exceeds the 64 MiB v7x ceiling, use row-band tiling
    # (see header TODO) instead of whole-image blocks.

    kernel = functools.partial(_residual_block_kernel,
                               pad=padding, live=live, C=C)

    out_nhwc = pl.pallas_call(
        kernel,
        out_shape=jax.ShapeDtypeStruct((N, H, W, C), jnp.float32),
        grid_spec=pltpu.PrefetchScalarGridSpec(
            num_scalar_prefetch=0,
            grid=(N,),
            in_specs=[
                pl.BlockSpec((1, H, W, C), lambda b: (b, 0, 0, 0)),
                pl.BlockSpec((Kp, CP), lambda b: (0, 0)),
                pl.BlockSpec((1, CP), lambda b: (0, 0)),
                pl.BlockSpec((Kp, CP), lambda b: (0, 0)),
                pl.BlockSpec((1, CP), lambda b: (0, 0)),
            ],
            out_specs=pl.BlockSpec((1, H, W, C), lambda b: (b, 0, 0, 0)),
            scratch_shapes=[
                pltpu.VMEM((Hp, Wp8, CP), jnp.bfloat16),   # padded activations
                pltpu.VMEM((H, W, Kp), jnp.bfloat16),      # im2col patches
            ],
        ),
        compiler_params=pltpu.CompilerParams(
            dimension_semantics=("parallel",),
            vmem_limit_bytes=vmem_limit),
    )(x, w1k, b1k, w2k, b2k)

    return jnp.transpose(out_nhwc, (0, 3, 1, 2))    # back to NCHW


def residual_block_ref(x, w1, b1, w2, b2, *, padding):
    """Pure-JAX f32 reference mirroring the PyTorch forward (NCHW)."""
    Cout, Cin, KH, KW = w1.shape
    mask = jnp.asarray(make_mask_b_np(KH, KW))[None, None, :, :]

    def conv(inp, w, b):
        y = lax.conv_general_dilated(
            inp, w * mask, window_strides=(1, 1),
            padding=[(padding, padding), (padding, padding)],
            dimension_numbers=('NCHW', 'OIHW', 'NCHW'))
        return y + b.reshape(1, -1, 1, 1)

    h = jax.nn.relu(conv(x, w1, b1))
    h = jax.nn.relu(conv(h, w2, b2))
    return h + x


if __name__ == "__main__":
    # Small shapes: batch=2, channels=8, spatial=16x16, kernel=3, padding=1
    N, C, H, W = 2, 8, 16, 16
    KH = KW = 3
    PAD = 1

    key = jax.random.PRNGKey(0)
    kx, kw1, kb1, kw2, kb2 = jax.random.split(key, 5)

    x = jax.random.normal(kx, (N, C, H, W), dtype=jnp.float32)
    fan_in = C * KH * KW
    w1 = jax.random.normal(kw1, (C, C, KH, KW), dtype=jnp.float32) / jnp.sqrt(fan_in)
    b1 = jax.random.normal(kb1, (C,), dtype=jnp.float32) * 0.1
    w2 = jax.random.normal(kw2, (C, C, KH, KW), dtype=jnp.float32) / jnp.sqrt(fan_in)
    b2 = jax.random.normal(kb2, (C,), dtype=jnp.float32) * 0.1

    out = residual_block(x, w1, b1, w2, b2, padding=PAD)
    out = jax.block_until_ready(out)

    ref = residual_block_ref(x, w1, b1, w2, b2, padding=PAD)
    ref = jax.block_until_ready(ref)

    assert out.shape == (N, C, H, W)
    max_err = jnp.max(jnp.abs(out - ref))
    # bf16 matmul operands (f32 accumulation) -> loosened tolerance vs f32 ref.
    assert jnp.allclose(out, ref, atol=5e-2, rtol=5e-2), f"max abs err = {max_err}"

    print("KERNEL_OK")
</pallas_src>

<mosaic_0001>
module attributes {stable_mosaic.version = 11 : i64} {
  func.func @_residual_block_kernel(%arg0: i32, %arg1: memref<1x16x16x8xf32, #tpu.memory_space<vmem>>, %arg2: memref<640x128xbf16, #tpu.memory_space<vmem>>, %arg3: memref<1x128xf32, #tpu.memory_space<vmem>>, %arg4: memref<640x128xbf16, #tpu.memory_space<vmem>>, %arg5: memref<1x128xf32, #tpu.memory_space<vmem>>, %arg6: memref<1x16x16x8xf32, #tpu.memory_space<vmem>>, %arg7: memref<18x24x128xbf16, #tpu.memory_space<vmem>>, %arg8: memref<16x16x640xbf16, #tpu.memory_space<vmem>>) attributes {dimension_semantics = [#tpu.dimension_semantics<parallel>], iteration_bounds = array<i64: 2>, scalar_prefetch = 0 : i64, scratch_operands = 2 : i64, tpu.core_type = #tpu.core_type<tc>, window_params = [{transform_indices = @transform_0, window_bounds = array<i64: 1, 16, 16, 8>}, {pipeline_mode = #tpu.pipeline_mode<synchronous>, transform_indices = @transform_1, window_bounds = array<i64: 640, 128>}, {pipeline_mode = #tpu.pipeline_mode<synchronous>, transform_indices = @transform_2, window_bounds = array<i64: 1, 128>}, {pipeline_mode = #tpu.pipeline_mode<synchronous>, transform_indices = @transform_3, window_bounds = array<i64: 640, 128>}, {pipeline_mode = #tpu.pipeline_mode<synchronous>, transform_indices = @transform_4, window_bounds = array<i64: 1, 128>}, {transform_indices = @transform_5, window_bounds = array<i64: 1, 16, 16, 8>}]} {
    %cst = arith.constant 0.000000e+00 : bf16
    %0 = vector.broadcast %cst : bf16 to vector<1x24x128xbf16>
    %c0 = arith.constant 0 : index
    %c0_0 = arith.constant 0 : index
    %c0_1 = arith.constant 0 : index
    %1 = vector.load %arg7[%c0, %c0_0, %c0_1] : memref<18x24x128xbf16, #tpu.memory_space<vmem>>, vector<1x24x128xbf16>
    tpu.vector_store %arg7[%c0, %c0_0, %c0_1], %0 {strides = array<i32>} : memref<18x24x128xbf16, #tpu.memory_space<vmem>>, vector<1x24x128xbf16>,
    %cst_2 = arith.constant 0.000000e+00 : bf16
    %2 = vector.broadcast %cst_2 : bf16 to vector<1x24x128xbf16>
    %c17 = arith.constant 17 : index
    %c0_3 = arith.constant 0 : index
    %c0_4 = arith.constant 0 : index
    %3 = vector.load %arg7[%c17, %c0_3, %c0_4] : memref<18x24x128xbf16, #tpu.memory_space<vmem>>, vector<1x24x128xbf16>
    tpu.vector_store %arg7[%c17, %c0_3, %c0_4], %2 {strides = array<i32>} : memref<18x24x128xbf16, #tpu.memory_space<vmem>>, vector<1x24x128xbf16>,
    %cst_5 = arith.constant 0.000000e+00 : bf16
    %4 = vector.broadcast %cst_5 : bf16 to vector<16x1x128xbf16>
    %c1 = arith.constant 1 : index
    %c0_6 = arith.constant 0 : index
    %c0_7 = arith.constant 0 : index
    %5 = vector.load %arg7[%c1, %c0_6, %c0_7] : memref<18x24x128xbf16, #tpu.memory_space<vmem>>, vector<16x1x128xbf16>
    tpu.vector_store %arg7[%c1, %c0_6, %c0_7], %4 {strides = array<i32>} : memref<18x24x128xbf16, #tpu.memory_space<vmem>>, vector<16x1x128xbf16>,
    %cst_8 = arith.constant 0.000000e+00 : bf16
    %6 = vector.broadcast %cst_8 : bf16 to vector<16x7x128xbf16>
    %c1_9 = arith.constant 1 : index
    %c17_10 = arith.constant 17 : index
    %c0_11 = arith.constant 0 : index
    %7 = vector.load %arg7[%c1_9, %c17_10, %c0_11] : memref<18x24x128xbf16, #tpu.memory_space<vmem>>, vector<16x7x128xbf16>
    tpu.vector_store %arg7[%c1_9, %c17_10, %c0_11], %6 {strides = array<i32>} : memref<18x24x128xbf16, #tpu.memory_space<vmem>>, vector<16x7x128xbf16>,
    %cst_12 = arith.constant 0.000000e+00 : bf16
    %8 = vector.broadcast %cst_12 : bf16 to vector<16x16x120xbf16>
    %c1_13 = arith.constant 1 : index
    %c1_14 = arith.constant 1 : index
    %c8 = arith.constant 8 : index
    %9 = vector.load %arg7[%c1_13, %c1_14, %c8] : memref<18x24x128xbf16, #tpu.memory_space<vmem>>, vector<16x16x120xbf16>
    tpu.vector_store %arg7[%c1_13, %c1_14, %c8], %8 {strides = array<i32>} : memref<18x24x128xbf16, #tpu.memory_space<vmem>>, vector<16x16x120xbf16>,
    %c0_15 = arith.constant 0 : index
    %c0_16 = arith.constant 0 : index
    %c0_17 = arith.constant 0 : index
    %c0_18 = arith.constant 0 : index
    %10 = vector.load %arg1[%c0_15, %c0_16, %c0_17, %c0_18] : memref<1x16x16x8xf32, #tpu.memory_space<vmem>>, vector<1x16x16x8xf32>
    %11 = vector.shape_cast %10 : vector<1x16x16x8xf32> to vector<16x16x8xf32>
    %12 = arith.truncf %11 : vector<16x16x8xf32> to vector<16x16x8xbf16>
    %c1_19 = arith.constant 1 : index
    %c1_20 = arith.constant 1 : index
    %c0_21 = arith.constant 0 : index
    %13 = vector.load %arg7[%c1_19, %c1_20, %c0_21] : memref<18x24x128xbf16, #tpu.memory_space<vmem>>, vector<16x16x8xbf16>
    tpu.vector_store %arg7[%c1_19, %c1_20, %c0_21], %12 {strides = array<i32>} : memref<18x24x128xbf16, #tpu.memory_space<vmem>>, vector<16x16x8xbf16>,
    %c0_22 = arith.constant 0 : index
    %c0_23 = arith.constant 0 : index
    %c0_24 = arith.constant 0 : index
    %14 = vector.load %arg7[%c0_22, %c0_23, %c0_24] : memref<18x24x128xbf16, #tpu.memory_space<vmem>>, vector<16x16x128xbf16>
    %c0_25 = arith.constant 0 : index
    %c0_26 = arith.constant 0 : index
    %c0_27 = arith.constant 0 : index
    %15 = vector.load %arg8[%c0_25, %c0_26, %c0_27] : memref<16x16x640xbf16, #tpu.memory_space<vmem>>, vector<16x16x128xbf16>
    tpu.vector_store %arg8[%c0_25, %c0_26, %c0_27], %14 {strides = array<i32>} : memref<16x16x640xbf16, #tpu.memory_space<vmem>>, vector<16x16x128xbf16>,
    %c0_28 = arith.constant 0 : index
    %c1_29 = arith.constant 1 : index
    %c0_30 = arith.constant 0 : index
    %16 = vector.load %arg7[%c0_28, %c1_29, %c0_30] : memref<18x24x128xbf16, #tpu.memory_space<vmem>>, vector<16x16x128xbf16>
    %c0_31 = arith.constant 0 : index
    %c0_32 = arith.constant 0 : index
    %c128 = arith.constant 128 : index
    %17 = vector.load %arg8[%c0_31, %c0_32, %c128] : memref<16x16x640xbf16, #tpu.memory_space<vmem>>, vector<16x16x128xbf16>
    tpu.vector_store %arg8[%c0_31, %c0_32, %c128], %16 {strides = array<i32>} : memref<16x16x640xbf16, #tpu.memory_space<vmem>>, vector<16x16x128xbf16>,
    %c0_33 = arith.constant 0 : index
    %c2 = arith.constant 2 : index
    %c0_34 = arith.constant 0 : index
    %18 = vector.load %arg7[%c0_33, %c2, %c0_34] : memref<18x24x128xbf16, #tpu.memory_space<vmem>>, vector<16x16x128xbf16>
    %c0_35 = arith.constant 0 : index
    %c0_36 = arith.constant 0 : index
    %c256 = arith.constant 256 : index
    %19 = vector.load %arg8[%c0_35, %c0_36, %c256] : memref<16x16x640xbf16, #tpu.memory_space<vmem>>, vector<16x16x128xbf16>
    tpu.vector_store %arg8[%c0_35, %c0_36, %c256], %18 {strides = array<i32>} : memref<16x16x640xbf16, #tpu.memory_space<vmem>>, vector<16x16x128xbf16>,
    %c1_37 = arith.constant 1 : index
    %c0_38 = arith.constant 0 : index
    %c0_39 = arith.constant 0 : index
    %20 = vector.load %arg7[%c1_37, %c0_38, %c0_39] : memref<18x24x128xbf16, #tpu.memory_space<vmem>>, vector<16x16x128xbf16>
    %c0_40 = arith.constant 0 : index
    %c0_41 = arith.constant 0 : index
    %c384 = arith.constant 384 : index
    %21 = vector.load %arg8[%c0_40, %c0_41, %c384] : memref<16x16x640xbf16, #tpu.memory_space<vmem>>, vector<16x16x128xbf16>
    tpu.vector_store %arg8[%c0_40, %c0_41, %c384], %20 {strides = array<i32>} : memref<16x16x640xbf16, #tpu.memory_space<vmem>>, vector<16x16x128xbf16>,
    %c1_42 = arith.constant 1 : index
    %c1_43 = arith.constant 1 : index
    %c0_44 = arith.constant 0 : index
    %22 = vector.load %arg7[%c1_42, %c1_43, %c0_44] : memref<18x24x128xbf16, #tpu.memory_space<vmem>>, vector<16x16x128xbf16>
    %c0_45 = arith.constant 0 : index
    %c0_46 = arith.constant 0 : index
    %c512 = arith.constant 512 : index
    %23 = vector.load %arg8[%c0_45, %c0_46, %c512] : memref<16x16x640xbf16, #tpu.memory_space<vmem>>, vector<16x16x128xbf16>
    tpu.vector_store %arg8[%c0_45, %c0_46, %c512], %22 {strides = array<i32>} : memref<16x16x640xbf16, #tpu.memory_space<vmem>>, vector<16x16x128xbf16>,
    %c0_47 = arith.constant 0 : index
    %c0_48 = arith.constant 0 : index
    %c0_49 = arith.constant 0 : index
    %24 = vector.load %arg8[%c0_47, %c0_48, %c0_49] : memref<16x16x640xbf16, #tpu.memory_space<vmem>>, vector<16x16x640xbf16>
    %25 = vector.shape_cast %24 : vector<16x16x640xbf16> to vector<256x640xbf16>
    %c0_50 = arith.constant 0 : index
    %c0_51 = arith.constant 0 : index
    %26 = vector.load %arg2[%c0_50, %c0_51] : memref<640x128xbf16, #tpu.memory_space<vmem>>, vector<640x128xbf16>
    %cst_52 = arith.constant dense<0.000000e+00> : vector<256x128xf32>
    %27 = tpu.matmul %25, %26, %cst_52 {dimension_numbers = #tpu.dot_dimension_numbers<[1], [0], [0], [1], [0, 0, 1, 1], [], []>} : vector<256x640xbf16>, vector<640x128xbf16>, vector<256x128xf32> -> vector<256x128xf32>
    %c0_53 = arith.constant 0 : index
    %c0_54 = arith.constant 0 : index
    %28 = vector.load %arg3[%c0_53, %c0_54] : memref<1x128xf32, #tpu.memory_space<vmem>>, vector<1x128xf32>
    %29 = vector.shape_cast %28 : vector<1x128xf32> to vector<128xf32>
    %30 = vector.shape_cast %29 : vector<128xf32> to vector<1x128xf32>
    %31 = vector.broadcast %30 : vector<1x128xf32> to vector<256x128xf32>
    %32 = arith.addf %27, %31 : vector<256x128xf32>
    %cst_55 = arith.constant 0.000000e+00 : f32
    %33 = vector.broadcast %cst_55 : f32 to vector<256x128xf32>
    %34 = arith.maximumf %32, %33 : vector<256x128xf32>
    %35 = vector.shape_cast %34 : vector<256x128xf32> to vector<16x16x128xf32>
    %36 = arith.truncf %35 : vector<16x16x128xf32> to vector<16x16x128xbf16>
    %c1_56 = arith.constant 1 : index
    %c1_57 = arith.constant 1 : index
    %c0_58 = arith.constant 0 : index
    %37 = vector.load %arg7[%c1_56, %c1_57, %c0_58] : memref<18x24x128xbf16, #tpu.memory_space<vmem>>, vector<16x16x128xbf16>
    tpu.vector_store %arg7[%c1_56, %c1_57, %c0_58], %36 {strides = array<i32>} : memref<18x24x128xbf16, #tpu.memory_space<vmem>>, vector<16x16x128xbf16>,
    %c0_59 = arith.constant 0 : index
    %c0_60 = arith.constant 0 : index
    %c0_61 = arith.constant 0 : index
    %38 = vector.load %arg7[%c0_59, %c0_60, %c0_61] : memref<18x24x128xbf16, #tpu.memory_space<vmem>>, vector<16x16x128xbf16>
    %c0_62 = arith.constant 0 : index
    %c0_63 = arith.constant 0 : index
    %c0_64 = arith.constant 0 : index
    %39 = vector.load %arg8[%c0_62, %c0_63, %c0_64] : memref<16x16x640xbf16, #tpu.memory_space<vmem>>, vector<16x16x128xbf16>
    tpu.vector_store %arg8[%c0_62, %c0_63, %c0_64], %38 {strides = array<i32>} : memref<16x16x640xbf16, #tpu.memory_space<vmem>>, vector<16x16x128xbf16>,
    %c0_65 = arith.constant 0 : index
    %c1_66 = arith.constant 1 : index
    %c0_67 = arith.constant 0 : index
    %40 = vector.load %arg7[%c0_65, %c1_66, %c0_67] : memref<18x24x128xbf16, #tpu.memory_space<vmem>>, vector<16x16x128xbf16>
    %c0_68 = arith.constant 0 : index
    %c0_69 = arith.constant 0 : index
    %c128_70 = arith.constant 128 : index
    %41 = vector.load %arg8[%c0_68, %c0_69, %c128_70] : memref<16x16x640xbf16, #tpu.memory_space<vmem>>, vector<16x16x128xbf16>
    tpu.vector_store %arg8[%c0_68, %c0_69, %c128_70], %40 {strides = array<i32>} : memref<16x16x640xbf16, #tpu.memory_space<vmem>>, vector<16x16x128xbf16>,
    %c0_71 = arith.constant 0 : index
    %c2_72 = arith.constant 2 : index
    %c0_73 = arith.constant 0 : index
    %42 = vector.load %arg7[%c0_71, %c2_72, %c0_73] : memref<18x24x128xbf16, #tpu.memory_space<vmem>>, vector<16x16x128xbf16>
    %c0_74 = arith.constant 0 : index
    %c0_75 = arith.constant 0 : index
    %c256_76 = arith.constant 256 : index
    %43 = vector.load %arg8[%c0_74, %c0_75, %c256_76] : memref<16x16x640xbf16, #tpu.memory_space<vmem>>, vector<16x16x128xbf16>
    tpu.vector_store %arg8[%c0_74, %c0_75, %c256_76], %42 {strides = array<i32>} : memref<16x16x640xbf16, #tpu.memory_space<vmem>>, vector<16x16x128xbf16>,
    %c1_77 = arith.constant 1 : index
    %c0_78 = arith.constant 0 : index
    %c0_79 = arith.constant 0 : index
    %44 = vector.load %arg7[%c1_77, %c0_78, %c0_79] : memref<18x24x128xbf16, #tpu.memory_space<vmem>>, vector<16x16x128xbf16>
    %c0_80 = arith.constant 0 : index
    %c0_81 = arith.constant 0 : index
    %c384_82 = arith.constant 384 : index
    %45 = vector.load %arg8[%c0_80, %c0_81, %c384_82] : memref<16x16x640xbf16, #tpu.memory_space<vmem>>, vector<16x16x128xbf16>
    tpu.vector_store %arg8[%c0_80, %c0_81, %c384_82], %44 {strides = array<i32>} : memref<16x16x640xbf16, #tpu.memory_space<vmem>>, vector<16x16x128xbf16>,
    %c1_83 = arith.constant 1 : index
    %c1_84 = arith.constant 1 : index
    %c0_85 = arith.constant 0 : index
    %46 = vector.load %arg7[%c1_83, %c1_84, %c0_85] : memref<18x24x128xbf16, #tpu.memory_space<vmem>>, vector<16x16x128xbf16>
    %c0_86 = arith.constant 0 : index
    %c0_87 = arith.constant 0 : index
    %c512_88 = arith.constant 512 : index
    %47 = vector.load %arg8[%c0_86, %c0_87, %c512_88] : memref<16x16x640xbf16, #tpu.memory_space<vmem>>, vector<16x16x128xbf16>
    tpu.vector_store %arg8[%c0_86, %c0_87, %c512_88], %46 {strides = array<i32>} : memref<16x16x640xbf16, #tpu.memory_space<vmem>>, vector<16x16x128xbf16>,
    %c0_89 = arith.constant 0 : index
    %c0_90 = arith.constant 0 : index
    %c0_91 = arith.constant 0 : index
    %48 = vector.load %arg8[%c0_89, %c0_90, %c0_91] : memref<16x16x640xbf16, #tpu.memory_space<vmem>>, vector<16x16x640xbf16>
    %49 = vector.shape_cast %48 : vector<16x16x640xbf16> to vector<256x640xbf16>
    %c0_92 = arith.constant 0 : index
    %c0_93 = arith.constant 0 : index
    %50 = vector.load %arg4[%c0_92, %c0_93] : memref<640x128xbf16, #tpu.memory_space<vmem>>, vector<640x128xbf16>
    %cst_94 = arith.constant dense<0.000000e+00> : vector<256x128xf32>
    %51 = tpu.matmul %49, %50, %cst_94 {dimension_numbers = #tpu.dot_dimension_numbers<[1], [0], [0], [1], [0, 0, 1, 1], [], []>} : vector<256x640xbf16>, vector<640x128xbf16>, vector<256x128xf32> -> vector<256x128xf32>
    %c0_95 = arith.constant 0 : index
    %c0_96 = arith.constant 0 : index
    %52 = vector.load %arg5[%c0_95, %c0_96] : memref<1x128xf32, #tpu.memory_space<vmem>>, vector<1x128xf32>
    %53 = vector.shape_cast %52 : vector<1x128xf32> to vector<128xf32>
    %54 = vector.shape_cast %53 : vector<128xf32> to vector<1x128xf32>
    %55 = vector.broadcast %54 : vector<1x128xf32> to vector<256x128xf32>
    %56 = arith.addf %51, %55 : vector<256x128xf32>
    %cst_97 = arith.constant 0.000000e+00 : f32
    %57 = vector.broadcast %cst_97 : f32 to vector<256x128xf32>
    %58 = arith.maximumf %56, %57 : vector<256x128xf32>
    %59 = vector.shape_cast %58 : vector<256x128xf32> to vector<16x16x128xf32>
    %60 = vector.extract_strided_slice %59 {offsets = [0, 0, 0], sizes = [16, 16, 8], strides = [1, 1, 1]} : vector<16x16x128xf32> to vector<16x16x8xf32>
    %c0_98 = arith.constant 0 : index
    %c0_99 = arith.constant 0 : index
    %c0_100 = arith.constant 0 : index
    %c0_101 = arith.constant 0 : index
    %61 = vector.load %arg1[%c0_98, %c0_99, %c0_100, %c0_101] : memref<1x16x16x8xf32, #tpu.memory_space<vmem>>, vector<1x16x16x8xf32>
    %62 = vector.shape_cast %61 : vector<1x16x16x8xf32> to vector<16x16x8xf32>
    %63 = arith.addf %60, %62 : vector<16x16x8xf32>
    %c0_102 = arith.constant 0 : index
    %c0_103 = arith.constant 0 : index
    %c0_104 = arith.constant 0 : index
    %c0_105 = arith.constant 0 : index
    %64 = vector.load %arg6[%c0_102, %c0_103, %c0_104, %c0_105] : memref<1x16x16x8xf32, #tpu.memory_space<vmem>>, vector<1x16x16x8xf32>
    %65 = vector.shape_cast %64 : vector<1x16x16x8xf32> to vector<16x16x8xf32>
    %66 = vector.shape_cast %63 : vector<16x16x8xf32> to vector<1x16x16x8xf32>
    tpu.vector_store %arg6[%c0_102, %c0_103, %c0_104, %c0_105], %66 {strides = array<i32>} : memref<1x16x16x8xf32, #tpu.memory_space<vmem>>, vector<1x16x16x8xf32>,
    return
  }
  func.func @transform_0(%arg0: i32) -> (i32, i32, i32, i32) {
    %c0_i32 = arith.constant 0 : i32
    %c0_i32_0 = arith.constant 0 : i32
    %c0_i32_1 = arith.constant 0 : i32
    %c0_i32_2 = arith.constant 0 : i32
    return %arg0, %c0_i32, %c0_i32_0, %c0_i32_1 : i32, i32, i32, i32
  }
  func.func @transform_1(%arg0: i32) -> (i32, i32) {
    %c0_i32 = arith.constant 0 : i32
    %c0_i32_0 = arith.constant 0 : i32
    %c0_i32_1 = arith.constant 0 : i32
    return %c0_i32, %c0_i32_0 : i32, i32
  }
  func.func @transform_2(%arg0: i32) -> (i32, i32) {
    %c0_i32 = arith.constant 0 : i32
    %c0_i32_0 = arith.constant 0 : i32
    %c0_i32_1 = arith.constant 0 : i32
    return %c0_i32, %c0_i32_0 : i32, i32
  }
  func.func @transform_3(%arg0: i32) -> (i32, i32) {
    %c0_i32 = arith.constant 0 : i32
    %c0_i32_0 = arith.constant 0 : i32
    %c0_i32_1 = arith.constant 0 : i32
    return %c0_i32, %c0_i32_0 : i32, i32
  }
  func.func @transform_4(%arg0: i32) -> (i32, i32) {
    %c0_i32 = arith.constant 0 : i32
    %c0_i32_0 = arith.constant 0 : i32
    %c0_i32_1 = arith.constant 0 : i32
    return %c0_i32, %c0_i32_0 : i32, i32
  }
  func.func @transform_5(%arg0: i32) -> (i32, i32, i32, i32) {
    %c0_i32 = arith.constant 0 : i32
    %c0_i32_0 = arith.constant 0 : i32
    %c0_i32_1 = arith.constant 0 : i32
    %c0_i32_2 = arith.constant 0 : i32
    return %arg0, %c0_i32, %c0_i32_0, %c0_i32_1 : i32, i32, i32, i32
  }
}

</mosaic_0001>

<llo_original>
// kernel: tpu_custom_call.1
$region0: #{tpu_custom_call.1}
  #allocation0 [shape = 'u32[]', space=smem, size = 0x4, offset = 0x4, fixed_abs, tag = 'smem constant byte address 0x4 - core index']
  #allocation1 [shape = 'u32[72,128]{1,0:T(1,128)}', space=vmem, size = 0x9000, scoped, tag = 'internal scratch']
  #allocation2 [shape = 'bf16[18,24,128]{2,1,0:T(8,128)(2,1)}', space=vmem, size = 0x1b000, scoped, tag = 'scratch operand']
  #allocation3 [shape = 'bf16[16,16,640]{2,1,0:T(8,128)(2,1)}', space=vmem, size = 0x50000, scoped, tag = 'scratch operand']
  %s0 = inlined_call_operand.vmem [shape: f32[2,16,16,8], index: 0, kind: input, shape index: {}]
  %s1 = inlined_call_operand.vmem [shape: bf16[640,128], index: 1, kind: input, shape index: {}]
  %s2 = inlined_call_operand.vmem [shape: f32[1,128], index: 2, kind: input, shape index: {}]
  %s3 = inlined_call_operand.vmem [shape: bf16[640,128], index: 3, kind: input, shape index: {}]
  %s4 = inlined_call_operand.vmem [shape: f32[1,128], index: 4, kind: input, shape index: {}]
  %s5 = inlined_call_operand.vmem [shape: f32[2,16,16,8], index: 5, kind: output, shape index: {}]
  %s6 = sld [smem:[#allocation0]]
  $region53: #{tpu_custom_call.1} parent=0
    _
  %s8 = ssub.s32 1, %s6
  %s9 = scalar_select 0, %s8, %s6
  loop: start=0, step=1, limit=4
  $region2: #{tpu_custom_call.1} parent=0 // loop_pre_header
    _
  $region3: #{tpu_custom_call.1} parent=0 // loop_header
    %s11 = sphi 0, %s15
    %p12 = scmp.ge.s32.totalorder %s11, 4
    %s21 = sphi 0, %s23
    %s24 = sphi 0, %s21
    %s25 = sphi 0, %s24
    %s41 = sphi 0, %s25
    %s45 = sphi 0, %s45
    %s47 = sphi 0, %s45
    %s48 = sphi 0, %s47
    %s62 = sphi 0, %s48
    %s66 = sphi 0, %s66
    %s68 = sphi 0, %s66
    %s69 = sphi 0, %s68
    %s83 = sphi 0, %s69
    %s87 = sphi 0, %s87
    %s89 = sphi 0, %s87
    %s90 = sphi 0, %s89
    %s104 = sphi 0, %s90
    %s108 = sphi 0, %s108
    %s110 = sphi 0, %s108
    %s111 = sphi 0, %s110
    %s125 = sphi 0, %s111
    %s131 = sphi 0, %s133
    %s134 = sphi 0, %s131
    %s135 = sphi 0, %s134
    %s151 = sphi 0, %s135
  $region4: #{tpu_custom_call.1} parent=0 // loop_header_branch
    %14 = sbr.rel (%p12) target = $region8
  $region5: #{tpu_custom_call.1} parent=0 // loop_body
    %s16 = ssub.s32 %s11, 1
    %s17 = ssub.s32 %s11, 2
    %s18 = sadd.s32 %s11, 1
    %s19 = ssub.s32 %s11, %s18
    %p20 = scmp.eq.s32.totalorder %s19, 0
    %s22 = sadd.s32 %s21, 1
    %s23 = scalar_select %p20, %s21, %s22
    %p26 = pneg %p20
    %p27 = scmp.eq.s32.totalorder %s11, 1
    %p28 = por %p26, %p27
    %p29 = scmp.ne.s32.totalorder %s21, %s24
    %p30 = scmp.eq.s32.totalorder %s11, 0
    %p31 = por %p29, %p30
    %p32 = scmp.ne.s32.totalorder %s21, %s24
    %p33 = scmp.eq.s32.totalorder %s16, 1
    %p34 = por %p32, %p33
    %p35 = scmp.ne.s32.totalorder %s24, %s25
    %p36 = scmp.eq.s32.totalorder %s16, 0
    %p37 = por %p35, %p36
    %p38 = scmp.ne.s32.totalorder %s24, %s25
    %p39 = scmp.eq.s32.totalorder %s17, 1
    %p40 = por %p38, %p39
    %p42 = scmp.ne.s32.totalorder %s25, %s41
    %p43 = scmp.eq.s32.totalorder %s17, 0
    %p44 = por %p42, %p43
    %s46 = sadd.s32 %s45, 1
    %p49 = scmp.eq.s32.totalorder %s11, 1
    %p50 = scmp.ne.s32.totalorder %s45, %s47
    %p51 = scmp.eq.s32.totalorder %s11, 0
    %p52 = por %p50, %p51
    %p53 = scmp.ne.s32.totalorder %s45, %s47
    %p54 = scmp.eq.s32.totalorder %s16, 1
    %p55 = por %p53, %p54
    %p56 = scmp.ne.s32.totalorder %s47, %s48
    %p57 = scmp.eq.s32.totalorder %s16, 0
    %p58 = por %p56, %p57
    %p59 = scmp.ne.s32.totalorder %s47, %s48
    %p60 = scmp.eq.s32.totalorder %s17, 1
    %p61 = por %p59, %p60
    %p63 = scmp.ne.s32.totalorder %s48, %s62
    %p64 = scmp.eq.s32.totalorder %s17, 0
    %p65 = por %p63, %p64
    %s67 = sadd.s32 %s66, 1
    %p70 = scmp.eq.s32.totalorder %s11, 1
    %p71 = scmp.ne.s32.totalorder %s66, %s68
    %p72 = scmp.eq.s32.totalorder %s11, 0
    %p73 = por %p71, %p72
    %p74 = scmp.ne.s32.totalorder %s66, %s68
    %p75 = scmp.eq.s32.totalorder %s16, 1
    %p76 = por %p74, %p75
    %p77 = scmp.ne.s32.totalorder %s68, %s69
    %p78 = scmp.eq.s32.totalorder %s16, 0
    %p79 = por %p77, %p78
    %p80 = scmp.ne.s32.totalorder %s68, %s69
    %p81 = scmp.eq.s32.totalorder %s17, 1
    %p82 = por %p80, %p81
    %p84 = scmp.ne.s32.totalorder %s69, %s83
    %p85 = scmp.eq.s32.totalorder %s17, 0
    %p86 = por %p84, %p85
    %s88 = sadd.s32 %s87, 1
    %p91 = scmp.eq.s32.totalorder %s11, 1
    %p92 = scmp.ne.s32.totalorder %s87, %s89
    %p93 = scmp.eq.s32.totalorder %s11, 0
    %p94 = por %p92, %p93
    %p95 = scmp.ne.s32.totalorder %s87, %s89
    %p96 = scmp.eq.s32.totalorder %s16, 1
    %p97 = por %p95, %p96
    %p98 = scmp.ne.s32.totalorder %s89, %s90
    %p99 = scmp.eq.s32.totalorder %s16, 0
    %p100 = por %p98, %p99
    %p101 = scmp.ne.s32.totalorder %s89, %s90
    %p102 = scmp.eq.s32.totalorder %s17, 1
    %p103 = por %p101, %p102
    %p105 = scmp.ne.s32.totalorder %s90, %s104
    %p106 = scmp.eq.s32.totalorder %s17, 0
    %p107 = por %p105, %p106
    %s109 = sadd.s32 %s108, 1
    %p112 = scmp.eq.s32.totalorder %s11, 1
    %p113 = scmp.ne.s32.totalorder %s108, %s110
    %p114 = scmp.eq.s32.totalorder %s11, 0
    %p115 = por %p113, %p114
    %p116 = scmp.ne.s32.totalorder %s108, %s110
    %p117 = scmp.eq.s32.totalorder %s16, 1
    %p118 = por %p116, %p117
    %p119 = scmp.ne.s32.totalorder %s110, %s111
    %p120 = scmp.eq.s32.totalorder %s16, 0
    %p121 = por %p119, %p120
    %p122 = scmp.ne.s32.totalorder %s110, %s111
    %p123 = scmp.eq.s32.totalorder %s17, 1
    %p124 = por %p122, %p123
    %p126 = scmp.ne.s32.totalorder %s111, %s125
    %p127 = scmp.eq.s32.totalorder %s17, 0
    %p128 = por %p126, %p127
    %s129 = ssub.s32 %s11, %s18
    %p130 = scmp.eq.s32.totalorder %s129, 0
    %s132 = sadd.s32 %s131, 1
    %s133 = scalar_select %p130, %s131, %s132
    %p136 = pneg %p130
    %p137 = scmp.eq.s32.totalorder %s11, 1
    %p138 = por %p136, %p137
    %p139 = scmp.ne.s32.totalorder %s131, %s134
    %p140 = scmp.eq.s32.totalorder %s11, 0
    %p141 = por %p139, %p140
    %p142 = scmp.ne.s32.totalorder %s131, %s134
    %p143 = scmp.eq.s32.totalorder %s16, 1
    %p144 = por %p142, %p143
    %p145 = scmp.ne.s32.totalorder %s134, %s135
    %p146 = scmp.eq.s32.totalorder %s16, 0
    %p147 = por %p145, %p146
    %p148 = scmp.ne.s32.totalorder %s134, %s135
    %p149 = scmp.eq.s32.totalorder %s17, 1
    %p150 = por %p148, %p149
    %p152 = scmp.ne.s32.totalorder %s135, %s151
    %p153 = scmp.eq.s32.totalorder %s17, 0
    %p154 = por %p152, %p153
    %p155 = scmp.le.s32.totalorder 1, %s11
    %p156 = scmp.lt.s32.totalorder %s11, 3
    %p157 = pnand %p155, %p156
    %p158 = pneg %p157
    // Predicated region
    $region9: #{tpu_custom_call.1} parent=5 // pred_check
      _
    $region10: #{tpu_custom_call.1} parent=5 // pred_check_branch
      %160 = sbr.rel (%p157) target = $region12
    $region11: #{tpu_custom_call.1} parent=5 // pred_region
      %s161 = ssub.s32 %s11, 1
      // Predicated region
      $region13: #{tpu_custom_call.1} parent=11 // pred_check
        %p162 = pneg %p58
      $region14: #{tpu_custom_call.1} parent=11 // pred_check_branch
        %164 = sbr.rel (%p162) target = $region16
      $region15: #{tpu_custom_call.1} parent=11 // pred_region
        _
      $region16: #{tpu_custom_call.1} parent=11 // pred_fallthru
        _
      // Predicated region
      $region17: #{tpu_custom_call.1} parent=11 // pred_check
        %p165 = pneg %p79
      $region18: #{tpu_custom_call.1} parent=11 // pred_check_branch
        %167 = sbr.rel (%p165) target = $region20
      $region19: #{tpu_custom_call.1} parent=11 // pred_region
        _
      $region20: #{tpu_custom_call.1} parent=11 // pred_fallthru
        _
      // Predicated region
      $region21: #{tpu_custom_call.1} parent=11 // pred_check
        %p168 = pneg %p100
      $region22: #{tpu_custom_call.1} parent=11 // pred_check_branch
        %170 = sbr.rel (%p168) target = $region24
      $region23: #{tpu_custom_call.1} parent=11 // pred_region
        _
      $region24: #{tpu_custom_call.1} parent=11 // pred_fallthru
        _
      // Predicated region
      $region25: #{tpu_custom_call.1} parent=11 // pred_check
        %p171 = pneg %p121
      $region26: #{tpu_custom_call.1} parent=11 // pred_check_branch
        %173 = sbr.rel (%p171) target = $region28
      $region27: #{tpu_custom_call.1} parent=11 // pred_region
        _
      $region28: #{tpu_custom_call.1} parent=11 // pred_fallthru
        _
    $region12: #{tpu_custom_call.1} parent=5 // pred_fallthru
      _
    %p174 = scmp.lt.s32.totalorder %s11, 2
    // Predicated region
    $region29: #{tpu_custom_call.1} parent=5 // pred_check
      %p175 = pneg %p174
    $region30: #{tpu_custom_call.1} parent=5 // pred_check_branch
      %177 = sbr.rel (%p175) target = $region32
    $region31: #{tpu_custom_call.1} parent=5 // pred_region
      // Predicated region
      $region33: #{tpu_custom_call.1} parent=31 // pred_check
        %p178 = pneg %p31
      $region34: #{tpu_custom_call.1} parent=31 // pred_check_branch
        %180 = sbr.rel (%p178) target = $region36
      $region35: #{tpu_custom_call.1} parent=31 // pred_region
        %p181 = scmp.lt.s32.totalorder %s11, 1
        %s182 = scalar_select %p181, %s11, 1
        %s183 = smul.addr %s182, 32
        %s184 = smul.addr %s183, 8
        %s185 = scalar_lea.vmem %s0, %s184
      $region36: #{tpu_custom_call.1} parent=31 // pred_fallthru
        _
    $region32: #{tpu_custom_call.1} parent=5 // pred_fallthru
      _
    %p186 = scmp.le.s32.totalorder 1, %s11
    %p187 = scmp.lt.s32.totalorder %s11, 3
    %p188 = pnand %p186, %p187
    %p189 = pneg %p188
    // Predicated region
    $region37: #{tpu_custom_call.1} parent=5 // pred_check
      _
    $region38: #{tpu_custom_call.1} parent=5 // pred_check_branch
      %191 = sbr.rel (%p188) target = $region40
    $region39: #{tpu_custom_call.1} parent=5 // pred_region
      %s192 = ssub.s32 %s11, 1
      %p193 = scmp.lt.s32.totalorder %s16, 1
      %s194 = scalar_select %p193, %s16, 1
      %s195 = smul.addr %s194, 32
      %s196 = smul.addr %s195, 8
      %s197 = scalar_lea.vmem %s0, %s196
      %p198 = pneg %p37
      %p199 = pneg %p34
      %p200 = pneg %p58
      %p201 = pneg %p55
      %p202 = pneg %p79
      %p203 = pneg %p76
      %p204 = pneg %p100
      %p205 = pneg %p97
      %p206 = pneg %p121
      %p207 = pneg %p118
      %p208 = pneg %p147
      %p209 = pneg %p144
      %p210 = scmp.lt.s32.totalorder %s16, 1
      %s211 = scalar_select %p210, %s16, 1
      %s212 = smul.addr %s211, 32
      %s213 = smul.addr %s212, 8
      %s214 = scalar_lea.vmem %s5, %s213
      %p215 = scmp.lt.s32.totalorder %s16, 1
      %s216 = scalar_select %p215, %s16, 1
      %s217 = smul.addr %s216, 32
      %s218 = smul.addr %s217, 8
      %s219 = scalar_lea.vmem %s0, %s218
      %p220 = scmp.lt.s32.totalorder %s16, 1
      %s221 = scalar_select %p220, %s16, 1
      %s222 = smul.addr %s221, 32
      %s223 = smul.addr %s222, 8
      %s224 = scalar_lea.vmem %s5, %s223
      %226 = vst [vmem:[#allocation2] sm:$0xf] 0
      %227 = vst [vmem:[#allocation2 + $0x4] sm:$0xf] 0
      %228 = vst [vmem:[#allocation2 + $0x8] sm:$0xf] 0
      %s229 = scalar_lea.vmem [#allocation2], 204
      %230 = vst [vmem:[%s229] sm:$0xf] 0
      %231 = vst [vmem:[%s229 + $0x4] sm:$0xf] 0
      %232 = vst [vmem:[%s229 + $0x8] sm:$0xf] 0
      %s233 = scalar_lea.vmem [#allocation2], 12
      %vm234 = vcmask 1040384
      %vm235 = vsmask.f32 256
      %vm236 = vmand %vm234, %vm235
      %v237 = vld [vmem:[%s233] sm:$0x1]
      %v238 = vsel %vm236, 0, %v237
      %239 = vst [vmem:[%s233] sm:$0x1] %v238
      %v240 = vld [vmem:[%s233 + $0xc] sm:$0x1]
      %v241 = vsel %vm236, 0, %v240
      %242 = vst [vmem:[%s233 + $0xc] sm:$0x1] %v241
      %v243 = vld [vmem:[%s233 + $0x18] sm:$0x1]
      %v244 = vsel %vm236, 0, %v243
      %245 = vst [vmem:[%s233 + $0x18] sm:$0x1] %v244
      %v246 = vld [vmem:[%s233 + $0x24] sm:$0x1]
      %v247 = vsel %vm236, 0, %v246
      %248 = vst [vmem:[%s233 + $0x24] sm:$0x1] %v247
      %v249 = vld [vmem:[%s233 + $0x30] sm:$0x1]
      %v250 = vsel %vm236, 0, %v249
      %251 = vst [vmem:[%s233 + $0x30] sm:$0x1] %v250
      %v252 = vld [vmem:[%s233 + $0x3c] sm:$0x1]
      %v253 = vsel %vm236, 0, %v252
      %254 = vst [vmem:[%s233 + $0x3c] sm:$0x1] %v253
      %v255 = vld [vmem:[%s233 + $0x48] sm:$0x1]
      %v256 = vsel %vm236, 0, %v255
      %257 = vst [vmem:[%s233 + $0x48] sm:$0x1] %v256
      %v258 = vld [vmem:[%s233 + $0x54] sm:$0x1]
      %v259 = vsel %vm236, 0, %v258
      %260 = vst [vmem:[%s233 + $0x54] sm:$0x1] %v259
      %v261 = vld [vmem:[%s233 + $0x60] sm:$0x1]
      %v262 = vsel %vm236, 0, %v261
      %263 = vst [vmem:[%s233 + $0x60] sm:$0x1] %v262
      %v264 = vld [vmem:[%s233 + $0x6c] sm:$0x1]
      %v265 = vsel %vm236, 0, %v264
      %266 = vst [vmem:[%s233 + $0x6c] sm:$0x1] %v265
      %v267 = vld [vmem:[%s233 + $0x78] sm:$0x1]
      %v268 = vsel %vm236, 0, %v267
      %269 = vst [vmem:[%s233 + $0x78] sm:$0x1] %v268
      %v270 = vld [vmem:[%s233 + $0x84] sm:$0x1]
      %v271 = vsel %vm236, 0, %v270
      %272 = vst [vmem:[%s233 + $0x84] sm:$0x1] %v271
      %v273 = vld [vmem:[%s233 + $0x90] sm:$0x1]
      %v274 = vsel %vm236, 0, %v273
      %275 = vst [vmem:[%s233 + $0x90] sm:$0x1] %v274
      %v276 = vld [vmem:[%s233 + $0x9c] sm:$0x1]
      %v277 = vsel %vm236, 0, %v276
      %278 = vst [vmem:[%s233 + $0x9c] sm:$0x1] %v277
      %v279 = vld [vmem:[%s233 + $0xa8] sm:$0x1]
      %v280 = vsel %vm236, 0, %v279
      %281 = vst [vmem:[%s233 + $0xa8] sm:$0x1] %v280
      %v282 = vld [vmem:[%s233 + $0xb4] sm:$0x1]
      %v283 = vsel %vm236, 0, %v282
      %284 = vst [vmem:[%s233 + $0xb4] sm:$0x1] %v283
      %vm285 = vcmask 1043456
      %vm286 = vsmask.f32 7938
      %vm287 = vmand %vm285, %vm286
      %v288 = vld [vmem:[%s233 + $0x8] sm:$0xf]
      %v289 = vsel %vm287, 0, %v288
      %290 = vst [vmem:[%s233 + $0x8] sm:$0xf] %v289
      %v291 = vld [vmem:[%s233 + $0x14] sm:$0xf]
      %v292 = vsel %vm287, 0, %v291
      %293 = vst [vmem:[%s233 + $0x14] sm:$0xf] %v292
      %v294 = vld [vmem:[%s233 + $0x20] sm:$0xf]
      %v295 = vsel %vm287, 0, %v294
      %296 = vst [vmem:[%s233 + $0x20] sm:$0xf] %v295
      %v297 = vld [vmem:[%s233 + $0x2c] sm:$0xf]
      %v298 = vsel %vm287, 0, %v297
      %299 = vst [vmem:[%s233 + $0x2c] sm:$0xf] %v298
      %v300 = vld [vmem:[%s233 + $0x38] sm:$0xf]
      %v301 = vsel %vm287, 0, %v300
      %302 = vst [vmem:[%s233 + $0x38] sm:$0xf] %v301
      %v303 = vld [vmem:[%s233 + $0x44] sm:$0xf]
      %v304 = vsel %vm287, 0, %v303
      %305 = vst [vmem:[%s233 + $0x44] sm:$0xf] %v304
      %v306 = vld [vmem:[%s233 + $0x50] sm:$0xf]
      %v307 = vsel %vm287, 0, %v306
      %308 = vst [vmem:[%s233 + $0x50] sm:$0xf] %v307
      %v309 = vld [vmem:[%s233 + $0x5c] sm:$0xf]
      %v310 = vsel %vm287, 0, %v309
      %311 = vst [vmem:[%s233 + $0x5c] sm:$0xf] %v310
      %v312 = vld [vmem:[%s233 + $0x68] sm:$0xf]
      %v313 = vsel %vm287, 0, %v312
      %314 = vst [vmem:[%s233 + $0x68] sm:$0xf] %v313
      %v315 = vld [vmem:[%s233 + $0x74] sm:$0xf]
      %v316 = vsel %vm287, 0, %v315
      %317 = vst [vmem:[%s233 + $0x74] sm:$0xf] %v316
      %v318 = vld [vmem:[%s233 + $0x80] sm:$0xf]
      %v319 = vsel %vm287, 0, %v318
      %320 = vst [vmem:[%s233 + $0x80] sm:$0xf] %v319
      %v321 = vld [vmem:[%s233 + $0x8c] sm:$0xf]
      %v322 = vsel %vm287, 0, %v321
      %323 = vst [vmem:[%s233 + $0x8c] sm:$0xf] %v322
      %v324 = vld [vmem:[%s233 + $0x98] sm:$0xf]
      %v325 = vsel %vm287, 0, %v324
      %326 = vst [vmem:[%s233 + $0x98] sm:$0xf] %v325
      %v327 = vld [vmem:[%s233 + $0xa4] sm:$0xf]
      %v328 = vsel %vm287, 0, %v327
      %329 = vst [vmem:[%s233 + $0xa4] sm:$0xf] %v328
      %v330 = vld [vmem:[%s233 + $0xb0] sm:$0xf]
      %v331 = vsel %vm287, 0, %v330
      %332 = vst [vmem:[%s233 + $0xb0] sm:$0xf] %v331
      %v333 = vld [vmem:[%s233 + $0xbc] sm:$0xf]
      %v334 = vsel %vm287, 0, %v333
      %335 = vst [vmem:[%s233 + $0xbc] sm:$0xf] %v334
      %vm336 = vcmask 1043520
      %vm337 = vmand %vm336, %vm286
      %v338 = vld [vmem:[%s233] sm:$0xf]
      %v339 = vsel %vm337, 0, %v338
      %340 = vst [vmem:[%s233] sm:$0xf] %v339
      %vm341 = vcmask 1043520
      %342 = vst.msk [vmem:[%s233 + $0x4] sm:$0xf] %vm341, 0
      %vm343 = vcmask 1040448
      %vm344 = vmand %vm343, %vm235
      %v345 = vld [vmem:[%s233 + $0x8] sm:$0x1]
      %v346 = vsel %vm344, 0, %v345
      %347 = vst [vmem:[%s233 + $0x8] sm:$0x1] %v346
      %v348 = vld [vmem:[%s233 + $0xc] sm:$0xf]
      %v349 = vsel %vm337, 0, %v348
      %350 = vst [vmem:[%s233 + $0xc] sm:$0xf] %v349
      %351 = vst.msk [vmem:[%s233 + $0x10] sm:$0xf] %vm341, 0
      %v352 = vld [vmem:[%s233 + $0x14] sm:$0x1]
      %v353 = vsel %vm344, 0, %v352
      %354 = vst [vmem:[%s233 + $0x14] sm:$0x1] %v353
      %v355 = vld [vmem:[%s233 + $0x18] sm:$0xf]
      %v356 = vsel %vm337, 0, %v355
      %357 = vst [vmem:[%s233 + $0x18] sm:$0xf] %v356
      %358 = vst.msk [vmem:[%s233 + $0x1c] sm:$0xf] %vm341, 0
      %v359 = vld [vmem:[%s233 + $0x20] sm:$0x1]
      %v360 = vsel %vm344, 0, %v359
      %361 = vst [vmem:[%s233 + $0x20] sm:$0x1] %v360
      %v362 = vld [vmem:[%s233 + $0x24] sm:$0xf]
      %v363 = vsel %vm337, 0, %v362
      %364 = vst [vmem:[%s233 + $0x24] sm:$0xf] %v363
      %365 = vst.msk [vmem:[%s233 + $0x28] sm:$0xf] %vm341, 0
      %v366 = vld [vmem:[%s233 + $0x2c] sm:$0x1]
      %v367 = vsel %vm344, 0, %v366
      %368 = vst [vmem:[%s233 + $0x2c] sm:$0x1] %v367
      %v369 = vld [vmem:[%s233 + $0x30] sm:$0xf]
      %v370 = vsel %vm337, 0, %v369
      %371 = vst [vmem:[%s233 + $0x30] sm:$0xf] %v370
      %372 = vst.msk [vmem:[%s233 + $0x34] sm:$0xf] %vm341, 0
      %v373 = vld [vmem:[%s233 + $0x38] sm:$0x1]
      %v374 = vsel %vm344, 0, %v373
      %375 = vst [vmem:[%s233 + $0x38] sm:$0x1] %v374
      %v376 = vld [vmem:[%s233 + $0x3c] sm:$0xf]
      %v377 = vsel %vm337, 0, %v376
      %378 = vst [vmem:[%s233 + $0x3c] sm:$0xf] %v377
      %379 = vst.msk [vmem:[%s233 + $0x40] sm:$0xf] %vm341, 0
      %v380 = vld [vmem:[%s233 + $0x44] sm:$0x1]
      %v381 = vsel %vm344, 0, %v380
      %382 = vst [vmem:[%s233 + $0x44] sm:$0x1] %v381
      %v383 = vld [vmem:[%s233 + $0x48] sm:$0xf]
      %v384 = vsel %vm337, 0, %v383
      %385 = vst [vmem:[%s233 + $0x48] sm:$0xf] %v384
      %386 = vst.msk [vmem:[%s233 + $0x4c] sm:$0xf] %vm341, 0
      %v387 = vld [vmem:[%s233 + $0x50] sm:$0x1]
      %v388 = vsel %vm344, 0, %v387
      %389 = vst [vmem:[%s233 + $0x50] sm:$0x1] %v388
      %v390 = vld [vmem:[%s233 + $0x54] sm:$0xf]
      %v391 = vsel %vm337, 0, %v390
      %392 = vst [vmem:[%s233 + $0x54] sm:$0xf] %v391
      %393 = vst.msk [vmem:[%s233 + $0x58] sm:$0xf] %vm341, 0
      %v394 = vld [vmem:[%s233 + $0x5c] sm:$0x1]
      %v395 = vsel %vm344, 0, %v394
      %396 = vst [vmem:[%s233 + $0x5c] sm:$0x1] %v395
      %v397 = vld [vmem:[%s233 + $0x60] sm:$0xf]
      %v398 = vsel %vm337, 0, %v397
      %399 = vst [vmem:[%s233 + $0x60] sm:$0xf] %v398
      %400 = vst.msk [vmem:[%s233 + $0x64] sm:$0xf] %vm341, 0
      %v401 = vld [vmem:[%s233 + $0x68] sm:$0x1]
      %v402 = vsel %vm344, 0, %v401
      %403 = vst [vmem:[%s233 + $0x68] sm:$0x1] %v402
      %v404 = vld [vmem:[%s233 + $0x6c] sm:$0xf]
      %v405 = vsel %vm337, 0, %v404
      %406 = vst [vmem:[%s233 + $0x6c] sm:$0xf] %v405
      %407 = vst.msk [vmem:[%s233 + $0x70] sm:$0xf] %vm341, 0
      %v408 = vld [vmem:[%s233 + $0x74] sm:$0x1]
      %v409 = vsel %vm344, 0, %v408
      %410 = vst [vmem:[%s233 + $0x74] sm:$0x1] %v409
      %v411 = vld [vmem:[%s233 + $0x78] sm:$0xf]
      %v412 = vsel %vm337, 0, %v411
      %413 = vst [vmem:[%s233 + $0x78] sm:$0xf] %v412
      %414 = vst.msk [vmem:[%s233 + $0x7c] sm:$0xf] %vm341, 0
      %v415 = vld [vmem:[%s233 + $0x80] sm:$0x1]
      %v416 = vsel %vm344, 0, %v415
      %417 = vst [vmem:[%s233 + $0x80] sm:$0x1] %v416
      %v418 = vld [vmem:[%s233 + $0x84] sm:$0xf]
      %v419 = vsel %vm337, 0, %v418
      %420 = vst [vmem:[%s233 + $0x84] sm:$0xf] %v419
      %421 = vst.msk [vmem:[%s233 + $0x88] sm:$0xf] %vm341, 0
      %v422 = vld [vmem:[%s233 + $0x8c] sm:$0x1]
      %v423 = vsel %vm344, 0, %v422
      %424 = vst [vmem:[%s233 + $0x8c] sm:$0x1] %v423
      %v425 = vld [vmem:[%s233 + $0x90] sm:$0xf]
      %v426 = vsel %vm337, 0, %v425
      %427 = vst [vmem:[%s233 + $0x90] sm:$0xf] %v426
      %428 = vst.msk [vmem:[%s233 + $0x94] sm:$0xf] %vm341, 0
      %v429 = vld [vmem:[%s233 + $0x98] sm:$0x1]
      %v430 = vsel %vm344, 0, %v429
      %431 = vst [vmem:[%s233 + $0x98] sm:$0x1] %v430
      %v432 = vld [vmem:[%s233 + $0x9c] sm:$0xf]
      %v433 = vsel %vm337, 0, %v432
      %434 = vst [vmem:[%s233 + $0x9c] sm:$0xf] %v433
      %435 = vst.msk [vmem:[%s233 + $0xa0] sm:$0xf] %vm341, 0
      %v436 = vld [vmem:[%s233 + $0xa4] sm:$0x1]
      %v437 = vsel %vm344, 0, %v436
      %438 = vst [vmem:[%s233 + $0xa4] sm:$0x1] %v437
      %v439 = vld [vmem:[%s233 + $0xa8] sm:$0xf]
      %v440 = vsel %vm337, 0, %v439
      %441 = vst [vmem:[%s233 + $0xa8] sm:$0xf] %v440
      %442 = vst.msk [vmem:[%s233 + $0xac] sm:$0xf] %vm341, 0
      %v443 = vld [vmem:[%s233 + $0xb0] sm:$0x1]
      %v444 = vsel %vm344, 0, %v443
      %445 = vst [vmem:[%s233 + $0xb0] sm:$0x1] %v444
      %v446 = vld [vmem:[%s233 + $0xb4] sm:$0xf]
      %v447 = vsel %vm337, 0, %v446
      %448 = vst [vmem:[%s233 + $0xb4] sm:$0xf] %v447
      %449 = vst.msk [vmem:[%s233 + $0xb8] sm:$0xf] %vm341, 0
      %v450 = vld [vmem:[%s233 + $0xbc] sm:$0x1]
      %v451 = vsel %vm344, 0, %v450
      %452 = vst [vmem:[%s233 + $0xbc] sm:$0x1] %v451
      %v453 = vld [vmem:[%s219] sm:$0xff]
      %v454 = vld [vmem:[%s219 + $0x8] sm:$0xff]
      %v455 = vld [vmem:[%s219 + $0x10] sm:$0xff]
      %v456 = vld [vmem:[%s219 + $0x18] sm:$0xff]
      %v457 = vld [vmem:[%s219 + $0x20] sm:$0xff]
      %v458 = vld [vmem:[%s219 + $0x28] sm:$0xff]
      %v459 = vld [vmem:[%s219 + $0x30] sm:$0xff]
      %v460 = vld [vmem:[%s219 + $0x38] sm:$0xff]
      %v461 = vld [vmem:[%s219 + $0x40] sm:$0xff]
      %v462 = vld [vmem:[%s219 + $0x48] sm:$0xff]
      %v463 = vld [vmem:[%s219 + $0x50] sm:$0xff]
      %v464 = vld [vmem:[%s219 + $0x58] sm:$0xff]
      %v465 = vld [vmem:[%s219 + $0x60] sm:$0xff]
      %v466 = vld [vmem:[%s219 + $0x68] sm:$0xff]
      %v467 = vld [vmem:[%s219 + $0x70] sm:$0xff]
      %v468 = vld [vmem:[%s219 + $0x78] sm:$0xff]
      %v469 = vld [vmem:[%s219 + $0x80] sm:$0xff]
      %v470 = vld [vmem:[%s219 + $0x88] sm:$0xff]
      %v471 = vld [vmem:[%s219 + $0x90] sm:$0xff]
      %v472 = vld [vmem:[%s219 + $0x98] sm:$0xff]
      %v473 = vld [vmem:[%s219 + $0xa0] sm:$0xff]
      %v474 = vld [vmem:[%s219 + $0xa8] sm:$0xff]
      %v475 = vld [vmem:[%s219 + $0xb0] sm:$0xff]
      %v476 = vld [vmem:[%s219 + $0xb8] sm:$0xff]
      %v477 = vld [vmem:[%s219 + $0xc0] sm:$0xff]
      %v478 = vld [vmem:[%s219 + $0xc8] sm:$0xff]
      %v479 = vld [vmem:[%s219 + $0xd0] sm:$0xff]
      %v480 = vld [vmem:[%s219 + $0xd8] sm:$0xff]
      %v481 = vld [vmem:[%s219 + $0xe0] sm:$0xff]
      %v482 = vld [vmem:[%s219 + $0xe8] sm:$0xff]
      %v483 = vld [vmem:[%s219 + $0xf0] sm:$0xff]
      %v484 = vld [vmem:[%s219 + $0xf8] sm:$0xff]
      %v485 = vpack.c.bf16 %v453, %v453
      %v486 = vpack.c.bf16 %v454, %v454
      %v487 = vpack.c.bf16 %v455, %v455
      %v488 = vpack.c.bf16 %v456, %v456
      %v489 = vpack.c.bf16 %v457, %v457
      %v490 = vpack.c.bf16 %v458, %v458
      %v491 = vpack.c.bf16 %v459, %v459
      %v492 = vpack.c.bf16 %v460, %v460
      %v493 = vpack.c.bf16 %v461, %v461
      %v494 = vpack.c.bf16 %v462, %v462
      %v495 = vpack.c.bf16 %v463, %v463
      %v496 = vpack.c.bf16 %v464, %v464
      %v497 = vpack.c.bf16 %v465, %v465
      %v498 = vpack.c.bf16 %v466, %v466
      %v499 = vpack.c.bf16 %v467, %v467
      %v500 = vpack.c.bf16 %v468, %v468
      %v501 = vpack.c.bf16 %v469, %v469
      %v502 = vpack.c.bf16 %v470, %v470
      %v503 = vpack.c.bf16 %v471, %v471
      %v504 = vpack.c.bf16 %v472, %v472
      %v505 = vpack.c.bf16 %v473, %v473
      %v506 = vpack.c.bf16 %v474, %v474
      %v507 = vpack.c.bf16 %v475, %v475
      %v508 = vpack.c.bf16 %v476, %v476
      %v509 = vpack.c.bf16 %v477, %v477
      %v510 = vpack.c.bf16 %v478, %v478
      %v511 = vpack.c.bf16 %v479, %v479
      %v512 = vpack.c.bf16 %v480, %v480
      %v513 = vpack.c.bf16 %v481, %v481
      %v514 = vpack.c.bf16 %v482, %v482
      %v515 = vpack.c.bf16 %v483, %v483
      %v516 = vpack.c.bf16 %v484, %v484
      %vm517 = vsmask.f32 4368
      %vm518 = vmor %vm235, %vm517
      %v520 = vshrl.u32 %v485, 16
      %v522 = vrot.slane %v520, 7
      %v523 = vshll.u32 %v485, 16
      %v525 = vor.u32 %v522, %v523
      %v526 = vrot.slane %v522, 4
      %v528 = vshrl.u32 %v486, 16
      %v530 = vrot.slane %v528, 7
      %v531 = vshll.u32 %v486, 16
      %v533 = vor.u32 %v530, %v531
      %v534 = vsel %vm518, %v526, %v533
      %v535 = vrot.slane %v530, 4
      %v537 = vshrl.u32 %v487, 16
      %v539 = vrot.slane %v537, 7
      %v540 = vshll.u32 %v487, 16
      %v542 = vor.u32 %v539, %v540
      %v543 = vrot.slane %v539, 4
      %v545 = vshrl.u32 %v488, 16
      %v547 = vrot.slane %v545, 7
      %v548 = vshll.u32 %v488, 16
      %v550 = vor.u32 %v547, %v548
      %v551 = vsel %vm518, %v543, %v550
      %v552 = vrot.slane %v547, 4
      %v554 = vshrl.u32 %v489, 16
      %v556 = vrot.slane %v554, 7
      %v557 = vshll.u32 %v489, 16
      %v559 = vor.u32 %v556, %v557
      %v560 = vrot.slane %v556, 4
      %v562 = vshrl.u32 %v490, 16
      %v564 = vrot.slane %v562, 7
      %v565 = vshll.u32 %v490, 16
      %v567 = vor.u32 %v564, %v565
      %v568 = vsel %vm518, %v560, %v567
      %v569 = vrot.slane %v564, 4
      %v571 = vshrl.u32 %v491, 16
      %v573 = vrot.slane %v571, 7
      %v574 = vshll.u32 %v491, 16
      %v576 = vor.u32 %v573, %v574
      %v577 = vrot.slane %v573, 4
      %v579 = vshrl.u32 %v492, 16
      %v581 = vrot.slane %v579, 7
      %v582 = vshll.u32 %v492, 16
      %v584 = vor.u32 %v581, %v582
      %v585 = vsel %vm518, %v577, %v584
      %v586 = vrot.slane %v581, 4
      %v588 = vshrl.u32 %v493, 16
      %v590 = vrot.slane %v588, 7
      %v591 = vshll.u32 %v493, 16
      %v593 = vor.u32 %v590, %v591
      %v594 = vrot.slane %v590, 4
      %v596 = vshrl.u32 %v494, 16
      %v598 = vrot.slane %v596, 7
      %v599 = vshll.u32 %v494, 16
      %v601 = vor.u32 %v598, %v599
      %v602 = vsel %vm518, %v594, %v601
      %v603 = vrot.slane %v598, 4
      %v605 = vshrl.u32 %v495, 16
      %v607 = vrot.slane %v605, 7
      %v608 = vshll.u32 %v495, 16
      %v610 = vor.u32 %v607, %v608
      %v611 = vrot.slane %v607, 4
      %v613 = vshrl.u32 %v496, 16
      %v615 = vrot.slane %v613, 7
      %v616 = vshll.u32 %v496, 16
      %v618 = vor.u32 %v615, %v616
      %v619 = vsel %vm518, %v611, %v618
      %v620 = vrot.slane %v615, 4
      %v622 = vshrl.u32 %v497, 16
      %v624 = vrot.slane %v622, 7
      %v625 = vshll.u32 %v497, 16
      %v627 = vor.u32 %v624, %v625
      %v628 = vrot.slane %v624, 4
      %v630 = vshrl.u32 %v498, 16
      %v632 = vrot.slane %v630, 7
      %v633 = vshll.u32 %v498, 16
      %v635 = vor.u32 %v632, %v633
      %v636 = vsel %vm518, %v628, %v635
      %v637 = vrot.slane %v632, 4
      %v639 = vshrl.u32 %v499, 16
      %v641 = vrot.slane %v639, 7
      %v642 = vshll.u32 %v499, 16
      %v644 = vor.u32 %v641, %v642
      %v645 = vrot.slane %v641, 4
      %v647 = vshrl.u32 %v500, 16
      %v649 = vrot.slane %v647, 7
      %v650 = vshll.u32 %v500, 16
      %v652 = vor.u32 %v649, %v650
      %v653 = vsel %vm518, %v645, %v652
      %v654 = vrot.slane %v649, 4
      %v656 = vshrl.u32 %v501, 16
      %v658 = vrot.slane %v656, 7
      %v659 = vshll.u32 %v501, 16
      %v661 = vor.u32 %v658, %v659
      %v662 = vrot.slane %v658, 4
      %v664 = vshrl.u32 %v502, 16
      %v666 = vrot.slane %v664, 7
      %v667 = vshll.u32 %v502, 16
      %v669 = vor.u32 %v666, %v667
      %v670 = vsel %vm518, %v662, %v669
      %v671 = vrot.slane %v666, 4
      %v673 = vshrl.u32 %v503, 16
      %v675 = vrot.slane %v673, 7
      %v676 = vshll.u32 %v503, 16
      %v678 = vor.u32 %v675, %v676
      %v679 = vrot.slane %v675, 4
      %v681 = vshrl.u32 %v504, 16
      %v683 = vrot.slane %v681, 7
      %v684 = vshll.u32 %v504, 16
      %v686 = vor.u32 %v683, %v684
      %v687 = vsel %vm518, %v679, %v686
      %v688 = vrot.slane %v683, 4
      %v690 = vshrl.u32 %v505, 16
      %v692 = vrot.slane %v690, 7
      %v693 = vshll.u32 %v505, 16
      %v695 = vor.u32 %v692, %v693
      %v696 = vrot.slane %v692, 4
      %v698 = vshrl.u32 %v506, 16
      %v700 = vrot.slane %v698, 7
      %v701 = vshll.u32 %v506, 16
      %v703 = vor.u32 %v700, %v701
      %v704 = vsel %vm518, %v696, %v703
      %v705 = vrot.slane %v700, 4
      %v707 = vshrl.u32 %v507, 16
      %v709 = vrot.slane %v707, 7
      %v710 = vshll.u32 %v507, 16
      %v712 = vor.u32 %v709, %v710
      %v713 = vrot.slane %v709, 4
      %v715 = vshrl.u32 %v508, 16
      %v717 = vrot.slane %v715, 7
      %v718 = vshll.u32 %v508, 16
      %v720 = vor.u32 %v717, %v718
      %v721 = vsel %vm518, %v713, %v720
      %v722 = vrot.slane %v717, 4
      %v724 = vshrl.u32 %v509, 16
      %v726 = vrot.slane %v724, 7
      %v727 = vshll.u32 %v509, 16
      %v729 = vor.u32 %v726, %v727
      %v730 = vrot.slane %v726, 4
      %v732 = vshrl.u32 %v510, 16
      %v734 = vrot.slane %v732, 7
      %v735 = vshll.u32 %v510, 16
      %v737 = vor.u32 %v734, %v735
      %v738 = vsel %vm518, %v730, %v737
      %v739 = vrot.slane %v734, 4
      %v741 = vshrl.u32 %v511, 16
      %v743 = vrot.slane %v741, 7
      %v744 = vshll.u32 %v511, 16
      %v746 = vor.u32 %v743, %v744
      %v747 = vrot.slane %v743, 4
      %v749 = vshrl.u32 %v512, 16
      %v751 = vrot.slane %v749, 7
      %v752 = vshll.u32 %v512, 16
      %v754 = vor.u32 %v751, %v752
      %v755 = vsel %vm518, %v747, %v754
      %v756 = vrot.slane %v751, 4
      %v758 = vshrl.u32 %v513, 16
      %v760 = vrot.slane %v758, 7
      %v761 = vshll.u32 %v513, 16
      %v763 = vor.u32 %v760, %v761
      %v764 = vrot.slane %v760, 4
      %v766 = vshrl.u32 %v514, 16
      %v768 = vrot.slane %v766, 7
      %v769 = vshll.u32 %v514, 16
      %v771 = vor.u32 %v768, %v769
      %v772 = vsel %vm518, %v764, %v771
      %v773 = vrot.slane %v768, 4
      %v775 = vshrl.u32 %v515, 16
      %v777 = vrot.slane %v775, 7
      %v778 = vshll.u32 %v515, 16
      %v780 = vor.u32 %v777, %v778
      %v781 = vrot.slane %v777, 4
      %v783 = vshrl.u32 %v516, 16
      %v785 = vrot.slane %v783, 7
      %v786 = vshll.u32 %v516, 16
      %v788 = vor.u32 %v785, %v786
      %v789 = vsel %vm518, %v781, %v788
      %v790 = vrot.slane %v785, 4
      %vm839 = vcmask 60416
      %vm840 = vmand %vm839, %vm286
      %v841 = vld [vmem:[%s233] sm:$0xf]
      %v842 = vsel %vm840, %v525, %v841
      %843 = vst [vmem:[%s233] sm:$0xf] %v842
      %vm844 = vcmask 60416
      %845 = vst.msk [vmem:[%s233 + $0x4] sm:$0xf] %vm844, %v534
      %vm846 = vcmask 57344
      %vm847 = vmand %vm846, %vm235
      %v848 = vld [vmem:[%s233 + $0x8] sm:$0x1]
      %v849 = vsel %vm847, %v535, %v848
      %850 = vst [vmem:[%s233 + $0x8] sm:$0x1] %v849
      %v851 = vld [vmem:[%s233 + $0xc] sm:$0xf]
      %v852 = vsel %vm840, %v542, %v851
      %853 = vst [vmem:[%s233 + $0xc] sm:$0xf] %v852
      %854 = vst.msk [vmem:[%s233 + $0x10] sm:$0xf] %vm844, %v551
      %v855 = vld [vmem:[%s233 + $0x14] sm:$0x1]
      %v856 = vsel %vm847, %v552, %v855
      %857 = vst [vmem:[%s233 + $0x14] sm:$0x1] %v856
      %v858 = vld [vmem:[%s233 + $0x18] sm:$0xf]
      %v859 = vsel %vm840, %v559, %v858
      %860 = vst [vmem:[%s233 + $0x18] sm:$0xf] %v859
      %861 = vst.msk [vmem:[%s233 + $0x1c] sm:$0xf] %vm844, %v568
      %v862 = vld [vmem:[%s233 + $0x20] sm:$0x1]
      %v863 = vsel %vm847, %v569, %v862
      %864 = vst [vmem:[%s233 + $0x20] sm:$0x1] %v863
      %v865 = vld [vmem:[%s233 + $0x24] sm:$0xf]
      %v866 = vsel %vm840, %v576, %v865
      %867 = vst [vmem:[%s233 + $0x24] sm:$0xf] %v866
      %868 = vst.msk [vmem:[%s233 + $0x28] sm:$0xf] %vm844, %v585
      %v869 = vld [vmem:[%s233 + $0x2c] sm:$0x1]
      %v870 = vsel %vm847, %v586, %v869
      %871 = vst [vmem:[%s233 + $0x2c] sm:$0x1] %v870
      %v872 = vld [vmem:[%s233 + $0x30] sm:$0xf]
      %v873 = vsel %vm840, %v593, %v872
      %874 = vst [vmem:[%s233 + $0x30] sm:$0xf] %v873
      %875 = vst.msk [vmem:[%s233 + $0x34] sm:$0xf] %vm844, %v602
      %v876 = vld [vmem:[%s233 + $0x38] sm:$0x1]
      %v877 = vsel %vm847, %v603, %v876
      %878 = vst [vmem:[%s233 + $0x38] sm:$0x1] %v877
      %v879 = vld [vmem:[%s233 + $0x3c] sm:$0xf]
      %v880 = vsel %vm840, %v610, %v879
      %881 = vst [vmem:[%s233 + $0x3c] sm:$0xf] %v880
      %882 = vst.msk [vmem:[%s233 + $0x40] sm:$0xf] %vm844, %v619
      %v883 = vld [vmem:[%s233 + $0x44] sm:$0x1]
      %v884 = vsel %vm847, %v620, %v883
      %885 = vst [vmem:[%s233 + $0x44] sm:$0x1] %v884
      %v886 = vld [vmem:[%s233 + $0x48] sm:$0xf]
      %v887 = vsel %vm840, %v627, %v886
      %888 = vst [vmem:[%s233 + $0x48] sm:$0xf] %v887
      %889 = vst.msk [vmem:[%s233 + $0x4c] sm:$0xf] %vm844, %v636
      %v890 = vld [vmem:[%s233 + $0x50] sm:$0x1]
      %v891 = vsel %vm847, %v637, %v890
      %892 = vst [vmem:[%s233 + $0x50] sm:$0x1] %v891
      %v893 = vld [vmem:[%s233 + $0x54] sm:$0xf]
      %v894 = vsel %vm840, %v644, %v893
      %895 = vst [vmem:[%s233 + $0x54] sm:$0xf] %v894
      %896 = vst.msk [vmem:[%s233 + $0x58] sm:$0xf] %vm844, %v653
      %v897 = vld [vmem:[%s233 + $0x5c] sm:$0x1]
      %v898 = vsel %vm847, %v654, %v897
      %899 = vst [vmem:[%s233 + $0x5c] sm:$0x1] %v898
      %v900 = vld [vmem:[%s233 + $0x60] sm:$0xf]
      %v901 = vsel %vm840, %v661, %v900
      %902 = vst [vmem:[%s233 + $0x60] sm:$0xf] %v901
      %903 = vst.msk [vmem:[%s233 + $0x64] sm:$0xf] %vm844, %v670
      %v904 = vld [vmem:[%s233 + $0x68] sm:$0x1]
      %v905 = vsel %vm847, %v671, %v904
      %906 = vst [vmem:[%s233 + $0x68] sm:$0x1] %v905
      %v907 = vld [vmem:[%s233 + $0x6c] sm:$0xf]
      %v908 = vsel %vm840, %v678, %v907
      %909 = vst [vmem:[%s233 + $0x6c] sm:$0xf] %v908
      %910 = vst.msk [vmem:[%s233 + $0x70] sm:$0xf] %vm844, %v687
      %v911 = vld [vmem:[%s233 + $0x74] sm:$0x1]
      %v912 = vsel %vm847, %v688, %v911
      %913 = vst [vmem:[%s233 + $0x74] sm:$0x1] %v912
      %v914 = vld [vmem:[%s233 + $0x78] sm:$0xf]
      %v915 = vsel %vm840, %v695, %v914
      %916 = vst [vmem:[%s233 + $0x78] sm:$0xf] %v915
      %917 = vst.msk [vmem:[%s233 + $0x7c] sm:$0xf] %vm844, %v704
      %v918 = vld [vmem:[%s233 + $0x80] sm:$0x1]
      %v919 = vsel %vm847, %v705, %v918
      %920 = vst [vmem:[%s233 + $0x80] sm:$0x1] %v919
      %v921 = vld [vmem:[%s233 + $0x84] sm:$0xf]
      %v922 = vsel %vm840, %v712, %v921
      %923 = vst [vmem:[%s233 + $0x84] sm:$0xf] %v922
      %924 = vst.msk [vmem:[%s233 + $0x88] sm:$0xf] %vm844, %v721
      %v925 = vld [vmem:[%s233 + $0x8c] sm:$0x1]
      %v926 = vsel %vm847, %v722, %v925
      %927 = vst [vmem:[%s233 + $0x8c] sm:$0x1] %v926
      %v928 = vld [vmem:[%s233 + $0x90] sm:$0xf]
      %v929 = vsel %vm840, %v729, %v928
      %930 = vst [vmem:[%s233 + $0x90] sm:$0xf] %v929
      %931 = vst.msk [vmem:[%s233 + $0x94] sm:$0xf] %vm844, %v738
      %v932 = vld [vmem:[%s233 + $0x98] sm:$0x1]
      %v933 = vsel %vm847, %v739, %v932
      %934 = vst [vmem:[%s233 + $0x98] sm:$0x1] %v933
      %v935 = vld [vmem:[%s233 + $0x9c] sm:$0xf]
      %v936 = vsel %vm840, %v746, %v935
      %937 = vst [vmem:[%s233 + $0x9c] sm:$0xf] %v936
      %938 = vst.msk [vmem:[%s233 + $0xa0] sm:$0xf] %vm844, %v755
      %v939 = vld [vmem:[%s233 + $0xa4] sm:$0x1]
      %v940 = vsel %vm847, %v756, %v939
      %941 = vst [vmem:[%s233 + $0xa4] sm:$0x1] %v940
      %v942 = vld [vmem:[%s233 + $0xa8] sm:$0xf]
      %v943 = vsel %vm840, %v763, %v942
      %944 = vst [vmem:[%s233 + $0xa8] sm:$0xf] %v943
      %945 = vst.msk [vmem:[%s233 + $0xac] sm:$0xf] %vm844, %v772
      %v946 = vld [vmem:[%s233 + $0xb0] sm:$0x1]
      %v947 = vsel %vm847, %v773, %v946
      %948 = vst [vmem:[%s233 + $0xb0] sm:$0x1] %v947
      %v949 = vld [vmem:[%s233 + $0xb4] sm:$0xf]
      %v950 = vsel %vm840, %v780, %v949
      %951 = vst [vmem:[%s233 + $0xb4] sm:$0xf] %v950
      %952 = vst.msk [vmem:[%s233 + $0xb8] sm:$0xf] %vm844, %v789
      %v953 = vld [vmem:[%s233 + $0xbc] sm:$0x1]
      %v954 = vsel %vm847, %v790, %v953
      %955 = vst [vmem:[%s233 + $0xbc] sm:$0x1] %v954
      %v956 = vld [vmem:[#allocation2] sm:$0xf]
      %v957 = vld [vmem:[#allocation2 + $0x4] sm:$0xf]
      %v958 = vld [vmem:[#allocation2 + $0xc] sm:$0xf]
      %v959 = vld [vmem:[#allocation2 + $0x10] sm:$0xf]
      %v960 = vld [vmem:[#allocation2 + $0x18] sm:$0xf]
      %v961 = vld [vmem:[#allocation2 + $0x1c] sm:$0xf]
      %v962 = vld [vmem:[#allocation2 + $0x24] sm:$0xf]
      %v963 = vld [vmem:[#allocation2 + $0x28] sm:$0xf]
      %v964 = vld [vmem:[#allocation2 + $0x30] sm:$0xf]
      %v965 = vld [vmem:[#allocation2 + $0x34] sm:$0xf]
      %v966 = vld [vmem:[#allocation2 + $0x3c] sm:$0xf]
      %v967 = vld [vmem:[#allocation2 + $0x40] sm:$0xf]
      %v968 = vld [vmem:[#allocation2 + $0x48] sm:$0xf]
      %v969 = vld [vmem:[#allocation2 + $0x4c] sm:$0xf]
      %v970 = vld [vmem:[#allocation2 + $0x54] sm:$0xf]
      %v971 = vld [vmem:[#allocation2 + $0x58] sm:$0xf]
      %v972 = vld [vmem:[#allocation2 + $0x60] sm:$0xf]
      %v973 = vld [vmem:[#allocation2 + $0x64] sm:$0xf]
      %v974 = vld [vmem:[#allocation2 + $0x6c] sm:$0xf]
      %v975 = vld [vmem:[#allocation2 + $0x70] sm:$0xf]
      %v976 = vld [vmem:[#allocation2 + $0x78] sm:$0xf]
      %v977 = vld [vmem:[#allocation2 + $0x7c] sm:$0xf]
      %v978 = vld [vmem:[#allocation2 + $0x84] sm:$0xf]
      %v979 = vld [vmem:[#allocation2 + $0x88] sm:$0xf]
      %v980 = vld [vmem:[#allocation2 + $0x90] sm:$0xf]
      %v981 = vld [vmem:[#allocation2 + $0x94] sm:$0xf]
      %v982 = vld [vmem:[#allocation2 + $0x9c] sm:$0xf]
      %v983 = vld [vmem:[#allocation2 + $0xa0] sm:$0xf]
      %v984 = vld [vmem:[#allocation2 + $0xa8] sm:$0xf]
      %v985 = vld [vmem:[#allocation2 + $0xac] sm:$0xf]
      %v986 = vld [vmem:[#allocation2 + $0xb4] sm:$0xf]
      %v987 = vld [vmem:[#allocation2 + $0xb8] sm:$0xf]
      %988 = vst [vmem:[#allocation3] sm:$0xf] %v956
      %989 = vst [vmem:[#allocation3 + $0x14] sm:$0xf] %v957
      %990 = vst [vmem:[#allocation3 + $0x28] sm:$0xf] %v958
      %991 = vst [vmem:[#allocation3 + $0x3c] sm:$0xf] %v959
      %992 = vst [vmem:[#allocation3 + $0x50] sm:$0xf] %v960
      %993 = vst [vmem:[#allocation3 + $0x64] sm:$0xf] %v961
      %994 = vst [vmem:[#allocation3 + $0x78] sm:$0xf] %v962
      %995 = vst [vmem:[#allocation3 + $0x8c] sm:$0xf] %v963
      %996 = vst [vmem:[#allocation3 + $0xa0] sm:$0xf] %v964
      %997 = vst [vmem:[#allocation3 + $0xb4] sm:$0xf] %v965
      %998 = vst [vmem:[#allocation3 + $0xc8] sm:$0xf] %v966
      %999 = vst [vmem:[#allocation3 + $0xdc] sm:$0xf] %v967
      %1000 = vst [vmem:[#allocation3 + $0xf0] sm:$0xf] %v968
      %1001 = vst [vmem:[#allocation3 + $0x104] sm:$0xf] %v969
      %1002 = vst [vmem:[#allocation3 + $0x118] sm:$0xf] %v970
      %1003 = vst [vmem:[#allocation3 + $0x12c] sm:$0xf] %v971
      %1004 = vst [vmem:[#allocation3 + $0x140] sm:$0xf] %v972
      %1005 = vst [vmem:[#allocation3 + $0x154] sm:$0xf] %v973
      %1006 = vst [vmem:[#allocation3 + $0x168] sm:$0xf] %v974
      %1007 = vst [vmem:[#allocation3 + $0x17c] sm:$0xf] %v975
      %1008 = vst [vmem:[#allocation3 + $0x190] sm:$0xf] %v976
      %1009 = vst [vmem:[#allocation3 + $0x1a4] sm:$0xf] %v977
      %1010 = vst [vmem:[#allocation3 + $0x1b8] sm:$0xf] %v978
      %1011 = vst [vmem:[#allocation3 + $0x1cc] sm:$0xf] %v979
      %1012 = vst [vmem:[#allocation3 + $0x1e0] sm:$0xf] %v980
      %1013 = vst [vmem:[#allocation3 + $0x1f4] sm:$0xf] %v981
      %1014 = vst [vmem:[#allocation3 + $0x208] sm:$0xf] %v982
      %1015 = vst [vmem:[#allocation3 + $0x21c] sm:$0xf] %v983
      %1016 = vst [vmem:[#allocation3 + $0x230] sm:$0xf] %v984
      %1017 = vst [vmem:[#allocation3 + $0x244] sm:$0xf] %v985
      %1018 = vst [vmem:[#allocation3 + $0x258] sm:$0xf] %v986
      %1019 = vst [vmem:[#allocation3 + $0x26c] sm:$0xf] %v987
      %v1020 = vld [vmem:[#allocation2] sm:$0xf]
      %v1021 = vld [vmem:[#allocation2 + $0x4] sm:$0xf]
      %v1022 = vld [vmem:[#allocation2 + $0x8] sm:$0x1]
      %v1023 = vld [vmem:[#allocation2 + $0xc] sm:$0xf]
      %v1024 = vld [vmem:[#allocation2 + $0x10] sm:$0xf]
      %v1025 = vld [vmem:[#allocation2 + $0x14] sm:$0x1]
      %v1026 = vld [vmem:[#allocation2 + $0x18] sm:$0xf]
      %v1027 = vld [vmem:[#allocation2 + $0x1c] sm:$0xf]
      %v1028 = vld [vmem:[#allocation2 + $0x20] sm:$0x1]
      %v1029 = vld [vmem:[#allocation2 + $0x24] sm:$0xf]
      %v1030 = vld [vmem:[#allocation2 + $0x28] sm:$0xf]
      %v1031 = vld [vmem:[#allocation2 + $0x2c] sm:$0x1]
      %v1032 = vld [vmem:[#allocation2 + $0x30] sm:$0xf]
      %v1033 = vld [vmem:[#allocation2 + $0x34] sm:$0xf]
      %v1034 = vld [vmem:[#allocation2 + $0x38] sm:$0x1]
      %v1035 = vld [vmem:[#allocation2 + $0x3c] sm:$0xf]
      %v1036 = vld [vmem:[#allocation2 + $0x40] sm:$0xf]
      %v1037 = vld [vmem:[#allocation2 + $0x44] sm:$0x1]
      %v1038 = vld [vmem:[#allocation2 + $0x48] sm:$0xf]
      %v1039 = vld [vmem:[#allocation2 + $0x4c] sm:$0xf]
      %v1040 = vld [vmem:[#allocation2 + $0x50] sm:$0x1]
      %v1041 = vld [vmem:[#allocation2 + $0x54] sm:$0xf]
      %v1042 = vld [vmem:[#allocation2 + $0x58] sm:$0xf]
      %v1043 = vld [vmem:[#allocation2 + $0x5c] sm:$0x1]
      %v1044 = vld [vmem:[#allocation2 + $0x60] sm:$0xf]
      %v1045 = vld [vmem:[#allocation2 + $0x64] sm:$0xf]
      %v1046 = vld [vmem:[#allocation2 + $0x68] sm:$0x1]
      %v1047 = vld [vmem:[#allocation2 + $0x6c] sm:$0xf]
      %v1048 = vld [vmem:[#allocation2 + $0x70] sm:$0xf]
      %v1049 = vld [vmem:[#allocation2 + $0x74] sm:$0x1]
      %v1050 = vld [vmem:[#allocation2 + $0x78] sm:$0xf]
      %v1051 = vld [vmem:[#allocation2 + $0x7c] sm:$0xf]
      %v1052 = vld [vmem:[#allocation2 + $0x80] sm:$0x1]
      %v1053 = vld [vmem:[#allocation2 + $0x84] sm:$0xf]
      %v1054 = vld [vmem:[#allocation2 + $0x88] sm:$0xf]
      %v1055 = vld [vmem:[#allocation2 + $0x8c] sm:$0x1]
      %v1056 = vld [vmem:[#allocation2 + $0x90] sm:$0xf]
      %v1057 = vld [vmem:[#allocation2 + $0x94] sm:$0xf]
      %v1058 = vld [vmem:[#allocation2 + $0x98] sm:$0x1]
      %v1059 = vld [vmem:[#allocation2 + $0x9c] sm:$0xf]
      %v1060 = vld [vmem:[#allocation2 + $0xa0] sm:$0xf]
      %v1061 = vld [vmem:[#allocation2 + $0xa4] sm:$0x1]
      %v1062 = vld [vmem:[#allocation2 + $0xa8] sm:$0xf]
      %v1063 = vld [vmem:[#allocation2 + $0xac] sm:$0xf]
      %v1064 = vld [vmem:[#allocation2 + $0xb0] sm:$0x1]
      %v1065 = vld [vmem:[#allocation2 + $0xb4] sm:$0xf]
      %v1066 = vld [vmem:[#allocation2 + $0xb8] sm:$0xf]
      %v1067 = vld [vmem:[#allocation2 + $0xbc] sm:$0x1]
      %vm1068 = vsmask.f32 3328
      %vm1069 = vsmask.f32 7440
      %vm1070 = vmor %vm1068, %vm1069
      %v1072 = vshrl.u32 %v1020, 16
      %v1074 = vrot.slane %v1072, 4
      %v1075 = vshll.u32 %v1020, 16
      %v1077 = vrot.slane %v1075, 5
      %v1078 = vor.u32 %v1074, %v1077
      %v1079 = vrot.slane %v1078, 4
      %v1081 = vshll.u32 %v1021, 16
      %v1083 = vrot.slane %v1081, 5
      %v1084 = vsel %vm1070, %v1079, %v1083
      %v1085 = vshrl.u32 %v1021, 16
      %v1087 = vrot.slane %v1085, 4
      %v1088 = vor.u32 %v1087, %v1083
      %v1089 = vrot.slane %v1088, 4
      %v1091 = vshll.u32 %v1022, 16
      %v1093 = vrot.slane %v1091, 5
      %v1094 = vsel %vm1070, %v1089, %v1093
      %v1096 = vshrl.u32 %v1023, 16
      %v1098 = vrot.slane %v1096, 4
      %v1099 = vshll.u32 %v1023, 16
      %v1101 = vrot.slane %v1099, 5
      %v1102 = vor.u32 %v1098, %v1101
      %v1103 = vrot.slane %v1102, 4
      %v1105 = vshll.u32 %v1024, 16
      %v1107 = vrot.slane %v1105, 5
      %v1108 = vsel %vm1070, %v1103, %v1107
      %v1109 = vshrl.u32 %v1024, 16
      %v1111 = vrot.slane %v1109, 4
      %v1112 = vor.u32 %v1111, %v1107
      %v1113 = vrot.slane %v1112, 4
      %v1115 = vshll.u32 %v1025, 16
      %v1117 = vrot.slane %v1115, 5
      %v1118 = vsel %vm1070, %v1113, %v1117
      %v1120 = vshrl.u32 %v1026, 16
      %v1122 = vrot.slane %v1120, 4
      %v1123 = vshll.u32 %v1026, 16
      %v1125 = vrot.slane %v1123, 5
      %v1126 = vor.u32 %v1122, %v1125
      %v1127 = vrot.slane %v1126, 4
      %v1129 = vshll.u32 %v1027, 16
      %v1131 = vrot.slane %v1129, 5
      %v1132 = vsel %vm1070, %v1127, %v1131
      %v1133 = vshrl.u32 %v1027, 16
      %v1135 = vrot.slane %v1133, 4
      %v1136 = vor.u32 %v1135, %v1131
      %v1137 = vrot.slane %v1136, 4
      %v1139 = vshll.u32 %v1028, 16
      %v1141 = vrot.slane %v1139, 5
      %v1142 = vsel %vm1070, %v1137, %v1141
      %v1144 = vshrl.u32 %v1029, 16
      %v1146 = vrot.slane %v1144, 4
      %v1147 = vshll.u32 %v1029, 16
      %v1149 = vrot.slane %v1147, 5
      %v1150 = vor.u32 %v1146, %v1149
      %v1151 = vrot.slane %v1150, 4
      %v1153 = vshll.u32 %v1030, 16
      %v1155 = vrot.slane %v1153, 5
      %v1156 = vsel %vm1070, %v1151, %v1155
      %v1157 = vshrl.u32 %v1030, 16
      %v1159 = vrot.slane %v1157, 4
      %v1160 = vor.u32 %v1159, %v1155
      %v1161 = vrot.slane %v1160, 4
      %v1163 = vshll.u32 %v1031, 16
      %v1165 = vrot.slane %v1163, 5
      %v1166 = vsel %vm1070, %v1161, %v1165
      %v1168 = vshrl.u32 %v1032, 16
      %v1170 = vrot.slane %v1168, 4
      %v1171 = vshll.u32 %v1032, 16
      %v1173 = vrot.slane %v1171, 5
      %v1174 = vor.u32 %v1170, %v1173
      %v1175 = vrot.slane %v1174, 4
      %v1177 = vshll.u32 %v1033, 16
      %v1179 = vrot.slane %v1177, 5
      %v1180 = vsel %vm1070, %v1175, %v1179
      %v1181 = vshrl.u32 %v1033, 16
      %v1183 = vrot.slane %v1181, 4
      %v1184 = vor.u32 %v1183, %v1179
      %v1185 = vrot.slane %v1184, 4
      %v1187 = vshll.u32 %v1034, 16
      %v1189 = vrot.slane %v1187, 5
      %v1190 = vsel %vm1070, %v1185, %v1189
      %v1192 = vshrl.u32 %v1035, 16
      %v1194 = vrot.slane %v1192, 4
      %v1195 = vshll.u32 %v1035, 16
      %v1197 = vrot.slane %v1195, 5
      %v1198 = vor.u32 %v1194, %v1197
      %v1199 = vrot.slane %v1198, 4
      %v1201 = vshll.u32 %v1036, 16
      %v1203 = vrot.slane %v1201, 5
      %v1204 = vsel %vm1070, %v1199, %v1203
      %v1205 = vshrl.u32 %v1036, 16
      %v1207 = vrot.slane %v1205, 4
      %v1208 = vor.u32 %v1207, %v1203
      %v1209 = vrot.slane %v1208, 4
      %v1211 = vshll.u32 %v1037, 16
      %v1213 = vrot.slane %v1211, 5
      %v1214 = vsel %vm1070, %v1209, %v1213
      %v1216 = vshrl.u32 %v1038, 16
      %v1218 = vrot.slane %v1216, 4
      %v1219 = vshll.u32 %v1038, 16
      %v1221 = vrot.slane %v1219, 5
      %v1222 = vor.u32 %v1218, %v1221
      %v1223 = vrot.slane %v1222, 4
      %v1225 = vshll.u32 %v1039, 16
      %v1227 = vrot.slane %v1225, 5
      %v1228 = vsel %vm1070, %v1223, %v1227
      %v1229 = vshrl.u32 %v1039, 16
      %v1231 = vrot.slane %v1229, 4
      %v1232 = vor.u32 %v1231, %v1227
      %v1233 = vrot.slane %v1232, 4
      %v1235 = vshll.u32 %v1040, 16
      %v1237 = vrot.slane %v1235, 5
      %v1238 = vsel %vm1070, %v1233, %v1237
      %v1240 = vshrl.u32 %v1041, 16
      %v1242 = vrot.slane %v1240, 4
      %v1243 = vshll.u32 %v1041, 16
      %v1245 = vrot.slane %v1243, 5
      %v1246 = vor.u32 %v1242, %v1245
      %v1247 = vrot.slane %v1246, 4
      %v1249 = vshll.u32 %v1042, 16
      %v1251 = vrot.slane %v1249, 5
      %v1252 = vsel %vm1070, %v1247, %v1251
      %v1253 = vshrl.u32 %v1042, 16
      %v1255 = vrot.slane %v1253, 4
      %v1256 = vor.u32 %v1255, %v1251
      %v1257 = vrot.slane %v1256, 4
      %v1259 = vshll.u32 %v1043, 16
      %v1261 = vrot.slane %v1259, 5
      %v1262 = vsel %vm1070, %v1257, %v1261
      %v1264 = vshrl.u32 %v1044, 16
      %v1266 = vrot.slane %v1264, 4
      %v1267 = vshll.u32 %v1044, 16
      %v1269 = vrot.slane %v1267, 5
      %v1270 = vor.u32 %v1266, %v1269
      %v1271 = vrot.slane %v1270, 4
      %v1273 = vshll.u32 %v1045, 16
      %v1275 = vrot.slane %v1273, 5
      %v1276 = vsel %vm1070, %v1271, %v1275
      %v1277 = vshrl.u32 %v1045, 16
      %v1279 = vrot.slane %v1277, 4
      %v1280 = vor.u32 %v1279, %v1275
      %v1281 = vrot.slane %v1280, 4
      %v1283 = vshll.u32 %v1046, 16
      %v1285 = vrot.slane %v1283, 5
      %v1286 = vsel %vm1070, %v1281, %v1285
      %v1288 = vshrl.u32 %v1047, 16
      %v1290 = vrot.slane %v1288, 4
      %v1291 = vshll.u32 %v1047, 16
      %v1293 = vrot.slane %v1291, 5
      %v1294 = vor.u32 %v1290, %v1293
      %v1295 = vrot.slane %v1294, 4
      %v1297 = vshll.u32 %v1048, 16
      %v1299 = vrot.slane %v1297, 5
      %v1300 = vsel %vm1070, %v1295, %v1299
      %v1301 = vshrl.u32 %v1048, 16
      %v1303 = vrot.slane %v1301, 4
      %v1304 = vor.u32 %v1303, %v1299
      %v1305 = vrot.slane %v1304, 4
      %v1307 = vshll.u32 %v1049, 16
      %v1309 = vrot.slane %v1307, 5
      %v1310 = vsel %vm1070, %v1305, %v1309
      %v1312 = vshrl.u32 %v1050, 16
      %v1314 = vrot.slane %v1312, 4
      %v1315 = vshll.u32 %v1050, 16
      %v1317 = vrot.slane %v1315, 5
      %v1318 = vor.u32 %v1314, %v1317
      %v1319 = vrot.slane %v1318, 4
      %v1321 = vshll.u32 %v1051, 16
      %v1323 = vrot.slane %v1321, 5
      %v1324 = vsel %vm1070, %v1319, %v1323
      %v1325 = vshrl.u32 %v1051, 16
      %v1327 = vrot.slane %v1325, 4
      %v1328 = vor.u32 %v1327, %v1323
      %v1329 = vrot.slane %v1328, 4
      %v1331 = vshll.u32 %v1052, 16
      %v1333 = vrot.slane %v1331, 5
      %v1334 = vsel %vm1070, %v1329, %v1333
      %v1336 = vshrl.u32 %v1053, 16
      %v1338 = vrot.slane %v1336, 4
      %v1339 = vshll.u32 %v1053, 16
      %v1341 = vrot.slane %v1339, 5
      %v1342 = vor.u32 %v1338, %v1341
      %v1343 = vrot.slane %v1342, 4
      %v1345 = vshll.u32 %v1054, 16
      %v1347 = vrot.slane %v1345, 5
      %v1348 = vsel %vm1070, %v1343, %v1347
      %v1349 = vshrl.u32 %v1054, 16
      %v1351 = vrot.slane %v1349, 4
      %v1352 = vor.u32 %v1351, %v1347
      %v1353 = vrot.slane %v1352, 4
      %v1355 = vshll.u32 %v1055, 16
      %v1357 = vrot.slane %v1355, 5
      %v1358 = vsel %vm1070, %v1353, %v1357
      %v1360 = vshrl.u32 %v1056, 16
      %v1362 = vrot.slane %v1360, 4
      %v1363 = vshll.u32 %v1056, 16
      %v1365 = vrot.slane %v1363, 5
      %v1366 = vor.u32 %v1362, %v1365
      %v1367 = vrot.slane %v1366, 4
      %v1369 = vshll.u32 %v1057, 16
      %v1371 = vrot.slane %v1369, 5
      %v1372 = vsel %vm1070, %v1367, %v1371
      %v1373 = vshrl.u32 %v1057, 16
      %v1375 = vrot.slane %v1373, 4
      %v1376 = vor.u32 %v1375, %v1371
      %v1377 = vrot.slane %v1376, 4
      %v1379 = vshll.u32 %v1058, 16
      %v1381 = vrot.slane %v1379, 5
      %v1382 = vsel %vm1070, %v1377, %v1381
      %v1384 = vshrl.u32 %v1059, 16
      %v1386 = vrot.slane %v1384, 4
      %v1387 = vshll.u32 %v1059, 16
      %v1389 = vrot.slane %v1387, 5
      %v1390 = vor.u32 %v1386, %v1389
      %v1391 = vrot.slane %v1390, 4
      %v1393 = vshll.u32 %v1060, 16
      %v1395 = vrot.slane %v1393, 5
      %v1396 = vsel %vm1070, %v1391, %v1395
      %v1397 = vshrl.u32 %v1060, 16
      %v1399 = vrot.slane %v1397, 4
      %v1400 = vor.u32 %v1399, %v1395
      %v1401 = vrot.slane %v1400, 4
      %v1403 = vshll.u32 %v1061, 16
      %v1405 = vrot.slane %v1403, 5
      %v1406 = vsel %vm1070, %v1401, %v1405
      %v1408 = vshrl.u32 %v1062, 16
      %v1410 = vrot.slane %v1408, 4
      %v1411 = vshll.u32 %v1062, 16
      %v1413 = vrot.slane %v1411, 5
      %v1414 = vor.u32 %v1410, %v1413
      %v1415 = vrot.slane %v1414, 4
      %v1417 = vshll.u32 %v1063, 16
      %v1419 = vrot.slane %v1417, 5
      %v1420 = vsel %vm1070, %v1415, %v1419
      %v1421 = vshrl.u32 %v1063, 16
      %v1423 = vrot.slane %v1421, 4
      %v1424 = vor.u32 %v1423, %v1419
      %v1425 = vrot.slane %v1424, 4
      %v1427 = vshll.u32 %v1064, 16
      %v1429 = vrot.slane %v1427, 5
      %v1430 = vsel %vm1070, %v1425, %v1429
      %v1432 = vshrl.u32 %v1065, 16
      %v1434 = vrot.slane %v1432, 4
      %v1435 = vshll.u32 %v1065, 16
      %v1437 = vrot.slane %v1435, 5
      %v1438 = vor.u32 %v1434, %v1437
      %v1439 = vrot.slane %v1438, 4
      %v1441 = vshll.u32 %v1066, 16
      %v1443 = vrot.slane %v1441, 5
      %v1444 = vsel %vm1070, %v1439, %v1443
      %v1445 = vshrl.u32 %v1066, 16
      %v1447 = vrot.slane %v1445, 4
      %v1448 = vor.u32 %v1447, %v1443
      %v1449 = vrot.slane %v1448, 4
      %v1451 = vshll.u32 %v1067, 16
      %v1453 = vrot.slane %v1451, 5
      %v1454 = vsel %vm1070, %v1449, %v1453
      %1487 = vst [vmem:[#allocation3 + $0x4] sm:$0xf] %v1084
      %1488 = vst [vmem:[#allocation3 + $0x18] sm:$0xf] %v1094
      %1489 = vst [vmem:[#allocation3 + $0x2c] sm:$0xf] %v1108
      %1490 = vst [vmem:[#allocation3 + $0x40] sm:$0xf] %v1118
      %1491 = vst [vmem:[#allocation3 + $0x54] sm:$0xf] %v1132
      %1492 = vst [vmem:[#allocation3 + $0x68] sm:$0xf] %v1142
      %1493 = vst [vmem:[#allocation3 + $0x7c] sm:$0xf] %v1156
      %1494 = vst [vmem:[#allocation3 + $0x90] sm:$0xf] %v1166
      %1495 = vst [vmem:[#allocation3 + $0xa4] sm:$0xf] %v1180
      %1496 = vst [vmem:[#allocation3 + $0xb8] sm:$0xf] %v1190
      %1497 = vst [vmem:[#allocation3 + $0xcc] sm:$0xf] %v1204
      %1498 = vst [vmem:[#allocation3 + $0xe0] sm:$0xf] %v1214
      %1499 = vst [vmem:[#allocation3 + $0xf4] sm:$0xf] %v1228
      %1500 = vst [vmem:[#allocation3 + $0x108] sm:$0xf] %v1238
      %1501 = vst [vmem:[#allocation3 + $0x11c] sm:$0xf] %v1252
      %1502 = vst [vmem:[#allocation3 + $0x130] sm:$0xf] %v1262
      %1503 = vst [vmem:[#allocation3 + $0x144] sm:$0xf] %v1276
      %1504 = vst [vmem:[#allocation3 + $0x158] sm:$0xf] %v1286
      %1505 = vst [vmem:[#allocation3 + $0x16c] sm:$0xf] %v1300
      %1506 = vst [vmem:[#allocation3 + $0x180] sm:$0xf] %v1310
      %1507 = vst [vmem:[#allocation3 + $0x194] sm:$0xf] %v1324
      %1508 = vst [vmem:[#allocation3 + $0x1a8] sm:$0xf] %v1334
      %1509 = vst [vmem:[#allocation3 + $0x1bc] sm:$0xf] %v1348
      %1510 = vst [vmem:[#allocation3 + $0x1d0] sm:$0xf] %v1358
      %1511 = vst [vmem:[#allocation3 + $0x1e4] sm:$0xf] %v1372
      %1512 = vst [vmem:[#allocation3 + $0x1f8] sm:$0xf] %v1382
      %1513 = vst [vmem:[#allocation3 + $0x20c] sm:$0xf] %v1396
      %1514 = vst [vmem:[#allocation3 + $0x220] sm:$0xf] %v1406
      %1515 = vst [vmem:[#allocation3 + $0x234] sm:$0xf] %v1420
      %1516 = vst [vmem:[#allocation3 + $0x248] sm:$0xf] %v1430
      %1517 = vst [vmem:[#allocation3 + $0x25c] sm:$0xf] %v1444
      %1518 = vst [vmem:[#allocation3 + $0x270] sm:$0xf] %v1454
      %v1519 = vld [vmem:[#allocation2] sm:$0xe]
      %v1520 = vld [vmem:[#allocation2 + $0x4] sm:$0xf]
      %v1521 = vld [vmem:[#allocation2 + $0x8] sm:$0x1]
      %v1522 = vld [vmem:[#allocation2 + $0xc] sm:$0xe]
      %v1523 = vld [vmem:[#allocation2 + $0x10] sm:$0xf]
      %v1524 = vld [vmem:[#allocation2 + $0x14] sm:$0x1]
      %v1525 = vld [vmem:[#allocation2 + $0x18] sm:$0xe]
      %v1526 = vld [vmem:[#allocation2 + $0x1c] sm:$0xf]
      %v1527 = vld [vmem:[#allocation2 + $0x20] sm:$0x1]
      %v1528 = vld [vmem:[#allocation2 + $0x24] sm:$0xe]
      %v1529 = vld [vmem:[#allocation2 + $0x28] sm:$0xf]
      %v1530 = vld [vmem:[#allocation2 + $0x2c] sm:$0x1]
      %v1531 = vld [vmem:[#allocation2 + $0x30] sm:$0xe]
      %v1532 = vld [vmem:[#allocation2 + $0x34] sm:$0xf]
      %v1533 = vld [vmem:[#allocation2 + $0x38] sm:$0x1]
      %v1534 = vld [vmem:[#allocation2 + $0x3c] sm:$0xe]
      %v1535 = vld [vmem:[#allocation2 + $0x40] sm:$0xf]
      %v1536 = vld [vmem:[#allocation2 + $0x44] sm:$0x1]
      %v1537 = vld [vmem:[#allocation2 + $0x48] sm:$0xe]
      %v1538 = vld [vmem:[#allocation2 + $0x4c] sm:$0xf]
      %v1539 = vld [vmem:[#allocation2 + $0x50] sm:$0x1]
      %v1540 = vld [vmem:[#allocation2 + $0x54] sm:$0xe]
      %v1541 = vld [vmem:[#allocation2 + $0x58] sm:$0xf]
      %v1542 = vld [vmem:[#allocation2 + $0x5c] sm:$0x1]
      %v1543 = vld [vmem:[#allocation2 + $0x60] sm:$0xe]
      %v1544 = vld [vmem:[#allocation2 + $0x64] sm:$0xf]
      %v1545 = vld [vmem:[#allocation2 + $0x68] sm:$0x1]
      %v1546 = vld [vmem:[#allocation2 + $0x6c] sm:$0xe]
      %v1547 = vld [vmem:[#allocation2 + $0x70] sm:$0xf]
      %v1548 = vld [vmem:[#allocation2 + $0x74] sm:$0x1]
      %v1549 = vld [vmem:[#allocation2 + $0x78] sm:$0xe]
      %v1550 = vld [vmem:[#allocation2 + $0x7c] sm:$0xf]
      %v1551 = vld [vmem:[#allocation2 + $0x80] sm:$0x1]
      %v1552 = vld [vmem:[#allocation2 + $0x84] sm:$0xe]
      %v1553 = vld [vmem:[#allocation2 + $0x88] sm:$0xf]
      %v1554 = vld [vmem:[#allocation2 + $0x8c] sm:$0x1]
      %v1555 = vld [vmem:[#allocation2 + $0x90] sm:$0xe]
      %v1556 = vld [vmem:[#allocation2 + $0x94] sm:$0xf]
      %v1557 = vld [vmem:[#allocation2 + $0x98] sm:$0x1]
      %v1558 = vld [vmem:[#allocation2 + $0x9c] sm:$0xe]
      %v1559 = vld [vmem:[#allocation2 + $0xa0] sm:$0xf]
      %v1560 = vld [vmem:[#allocation2 + $0xa4] sm:$0x1]
      %v1561 = vld [vmem:[#allocation2 + $0xa8] sm:$0xe]
      %v1562 = vld [vmem:[#allocation2 + $0xac] sm:$0xf]
      %v1563 = vld [vmem:[#allocation2 + $0xb0] sm:$0x1]
      %v1564 = vld [vmem:[#allocation2 + $0xb4] sm:$0xe]
      %v1565 = vld [vmem:[#allocation2 + $0xb8] sm:$0xf]
      %v1566 = vld [vmem:[#allocation2 + $0xbc] sm:$0x1]
      %vm1615 = vcmask 1042432
      %vm1616 = vcmask 1046532
      %vm1617 = vmor %vm1615, %vm1616
      %v1618 = vrot.slane %v1519, 5
      %v1619 = vrot.slane %v1618, 4
      %v1620 = vrot.slane %v1520, 5
      %v1621 = vsel %vm1617, %v1619, %v1620
      %v1622 = vrot.slane %v1620, 4
      %v1623 = vrot.slane %v1521, 5
      %v1624 = vsel %vm1617, %v1622, %v1623
      %v1625 = vrot.slane %v1522, 5
      %v1626 = vrot.slane %v1625, 4
      %v1627 = vrot.slane %v1523, 5
      %v1628 = vsel %vm1617, %v1626, %v1627
      %v1629 = vrot.slane %v1627, 4
      %v1630 = vrot.slane %v1524, 5
      %v1631 = vsel %vm1617, %v1629, %v1630
      %v1632 = vrot.slane %v1525, 5
      %v1633 = vrot.slane %v1632, 4
      %v1634 = vrot.slane %v1526, 5
      %v1635 = vsel %vm1617, %v1633, %v1634
      %v1636 = vrot.slane %v1634, 4
      %v1637 = vrot.slane %v1527, 5
      %v1638 = vsel %vm1617, %v1636, %v1637
      %v1639 = vrot.slane %v1528, 5
      %v1640 = vrot.slane %v1639, 4
      %v1641 = vrot.slane %v1529, 5
      %v1642 = vsel %vm1617, %v1640, %v1641
      %v1643 = vrot.slane %v1641, 4
      %v1644 = vrot.slane %v1530, 5
      %v1645 = vsel %vm1617, %v1643, %v1644
      %v1646 = vrot.slane %v1531, 5
      %v1647 = vrot.slane %v1646, 4
      %v1648 = vrot.slane %v1532, 5
      %v1649 = vsel %vm1617, %v1647, %v1648
      %v1650 = vrot.slane %v1648, 4
      %v1651 = vrot.slane %v1533, 5
      %v1652 = vsel %vm1617, %v1650, %v1651
      %v1653 = vrot.slane %v1534, 5
      %v1654 = vrot.slane %v1653, 4
      %v1655 = vrot.slane %v1535, 5
      %v1656 = vsel %vm1617, %v1654, %v1655
      %v1657 = vrot.slane %v1655, 4
      %v1658 = vrot.slane %v1536, 5
      %v1659 = vsel %vm1617, %v1657, %v1658
      %v1660 = vrot.slane %v1537, 5
      %v1661 = vrot.slane %v1660, 4
      %v1662 = vrot.slane %v1538, 5
      %v1663 = vsel %vm1617, %v1661, %v1662
      %v1664 = vrot.slane %v1662, 4
      %v1665 = vrot.slane %v1539, 5
      %v1666 = vsel %vm1617, %v1664, %v1665
      %v1667 = vrot.slane %v1540, 5
      %v1668 = vrot.slane %v1667, 4
      %v1669 = vrot.slane %v1541, 5
      %v1670 = vsel %vm1617, %v1668, %v1669
      %v1671 = vrot.slane %v1669, 4
      %v1672 = vrot.slane %v1542, 5
      %v1673 = vsel %vm1617, %v1671, %v1672
      %v1674 = vrot.slane %v1543, 5
      %v1675 = vrot.slane %v1674, 4
      %v1676 = vrot.slane %v1544, 5
      %v1677 = vsel %vm1617, %v1675, %v1676
      %v1678 = vrot.slane %v1676, 4
      %v1679 = vrot.slane %v1545, 5
      %v1680 = vsel %vm1617, %v1678, %v1679
      %v1681 = vrot.slane %v1546, 5
      %v1682 = vrot.slane %v1681, 4
      %v1683 = vrot.slane %v1547, 5
      %v1684 = vsel %vm1617, %v1682, %v1683
      %v1685 = vrot.slane %v1683, 4
      %v1686 = vrot.slane %v1548, 5
      %v1687 = vsel %vm1617, %v1685, %v1686
      %v1688 = vrot.slane %v1549, 5
      %v1689 = vrot.slane %v1688, 4
      %v1690 = vrot.slane %v1550, 5
      %v1691 = vsel %vm1617, %v1689, %v1690
      %v1692 = vrot.slane %v1690, 4
      %v1693 = vrot.slane %v1551, 5
      %v1694 = vsel %vm1617, %v1692, %v1693
      %v1695 = vrot.slane %v1552, 5
      %v1696 = vrot.slane %v1695, 4
      %v1697 = vrot.slane %v1553, 5
      %v1698 = vsel %vm1617, %v1696, %v1697
      %v1699 = vrot.slane %v1697, 4
      %v1700 = vrot.slane %v1554, 5
      %v1701 = vsel %vm1617, %v1699, %v1700
      %v1702 = vrot.slane %v1555, 5
      %v1703 = vrot.slane %v1702, 4
      %v1704 = vrot.slane %v1556, 5
      %v1705 = vsel %vm1617, %v1703, %v1704
      %v1706 = vrot.slane %v1704, 4
      %v1707 = vrot.slane %v1557, 5
      %v1708 = vsel %vm1617, %v1706, %v1707
      %v1709 = vrot.slane %v1558, 5
      %v1710 = vrot.slane %v1709, 4
      %v1711 = vrot.slane %v1559, 5
      %v1712 = vsel %vm1617, %v1710, %v1711
      %v1713 = vrot.slane %v1711, 4
      %v1714 = vrot.slane %v1560, 5
      %v1715 = vsel %vm1617, %v1713, %v1714
      %v1716 = vrot.slane %v1561, 5
      %v1717 = vrot.slane %v1716, 4
      %v1718 = vrot.slane %v1562, 5
      %v1719 = vsel %vm1617, %v1717, %v1718
      %v1720 = vrot.slane %v1718, 4
      %v1721 = vrot.slane %v1563, 5
      %v1722 = vsel %vm1617, %v1720, %v1721
      %v1723 = vrot.slane %v1564, 5
      %v1724 = vrot.slane %v1723, 4
      %v1725 = vrot.slane %v1565, 5
      %v1726 = vsel %vm1617, %v1724, %v1725
      %v1727 = vrot.slane %v1725, 4
      %v1728 = vrot.slane %v1566, 5
      %v1729 = vsel %vm1617, %v1727, %v1728
      %1762 = vst [vmem:[#allocation3 + $0x8] sm:$0xf] %v1621
      %1763 = vst [vmem:[#allocation3 + $0x1c] sm:$0xf] %v1624
      %1764 = vst [vmem:[#allocation3 + $0x30] sm:$0xf] %v1628
      %1765 = vst [vmem:[#allocation3 + $0x44] sm:$0xf] %v1631
      %1766 = vst [vmem:[#allocation3 + $0x58] sm:$0xf] %v1635
      %1767 = vst [vmem:[#allocation3 + $0x6c] sm:$0xf] %v1638
      %1768 = vst [vmem:[#allocation3 + $0x80] sm:$0xf] %v1642
      %1769 = vst [vmem:[#allocation3 + $0x94] sm:$0xf] %v1645
      %1770 = vst [vmem:[#allocation3 + $0xa8] sm:$0xf] %v1649
      %1771 = vst [vmem:[#allocation3 + $0xbc] sm:$0xf] %v1652
      %1772 = vst [vmem:[#allocation3 + $0xd0] sm:$0xf] %v1656
      %1773 = vst [vmem:[#allocation3 + $0xe4] sm:$0xf] %v1659
      %1774 = vst [vmem:[#allocation3 + $0xf8] sm:$0xf] %v1663
      %1775 = vst [vmem:[#allocation3 + $0x10c] sm:$0xf] %v1666
      %1776 = vst [vmem:[#allocation3 + $0x120] sm:$0xf] %v1670
      %1777 = vst [vmem:[#allocation3 + $0x134] sm:$0xf] %v1673
      %1778 = vst [vmem:[#allocation3 + $0x148] sm:$0xf] %v1677
      %1779 = vst [vmem:[#allocation3 + $0x15c] sm:$0xf] %v1680
      %1780 = vst [vmem:[#allocation3 + $0x170] sm:$0xf] %v1684
      %1781 = vst [vmem:[#allocation3 + $0x184] sm:$0xf] %v1687
      %1782 = vst [vmem:[#allocation3 + $0x198] sm:$0xf] %v1691
      %1783 = vst [vmem:[#allocation3 + $0x1ac] sm:$0xf] %v1694
      %1784 = vst [vmem:[#allocation3 + $0x1c0] sm:$0xf] %v1698
      %1785 = vst [vmem:[#allocation3 + $0x1d4] sm:$0xf] %v1701
      %1786 = vst [vmem:[#allocation3 + $0x1e8] sm:$0xf] %v1705
      %1787 = vst [vmem:[#allocation3 + $0x1fc] sm:$0xf] %v1708
      %1788 = vst [vmem:[#allocation3 + $0x210] sm:$0xf] %v1712
      %1789 = vst [vmem:[#allocation3 + $0x224] sm:$0xf] %v1715
      %1790 = vst [vmem:[#allocation3 + $0x238] sm:$0xf] %v1719
      %1791 = vst [vmem:[#allocation3 + $0x24c] sm:$0xf] %v1722
      %1792 = vst [vmem:[#allocation3 + $0x260] sm:$0xf] %v1726
      %1793 = vst [vmem:[#allocation3 + $0x274] sm:$0xf] %v1729
      %v1794 = vld [vmem:[%s233] sm:$0xf]
      %v1795 = vld [vmem:[%s233 + $0x4] sm:$0xf]
      %v1796 = vld [vmem:[%s233 + $0xc] sm:$0xf]
      %v1797 = vld [vmem:[%s233 + $0x10] sm:$0xf]
      %v1798 = vld [vmem:[%s233 + $0x18] sm:$0xf]
      %v1799 = vld [vmem:[%s233 + $0x1c] sm:$0xf]
      %v1800 = vld [vmem:[%s233 + $0x24] sm:$0xf]
      %v1801 = vld [vmem:[%s233 + $0x28] sm:$0xf]
      %v1802 = vld [vmem:[%s233 + $0x30] sm:$0xf]
      %v1803 = vld [vmem:[%s233 + $0x34] sm:$0xf]
      %v1804 = vld [vmem:[%s233 + $0x3c] sm:$0xf]
      %v1805 = vld [vmem:[%s233 + $0x40] sm:$0xf]
      %v1806 = vld [vmem:[%s233 + $0x48] sm:$0xf]
      %v1807 = vld [vmem:[%s233 + $0x4c] sm:$0xf]
      %v1808 = vld [vmem:[%s233 + $0x54] sm:$0xf]
      %v1809 = vld [vmem:[%s233 + $0x58] sm:$0xf]
      %v1810 = vld [vmem:[%s233 + $0x60] sm:$0xf]
      %v1811 = vld [vmem:[%s233 + $0x64] sm:$0xf]
      %v1812 = vld [vmem:[%s233 + $0x6c] sm:$0xf]
      %v1813 = vld [vmem:[%s233 + $0x70] sm:$0xf]
      %v1814 = vld [vmem:[%s233 + $0x78] sm:$0xf]
      %v1815 = vld [vmem:[%s233 + $0x7c] sm:$0xf]
      %v1816 = vld [vmem:[%s233 + $0x84] sm:$0xf]
      %v1817 = vld [vmem:[%s233 + $0x88] sm:$0xf]
      %v1818 = vld [vmem:[%s233 + $0x90] sm:$0xf]
      %v1819 = vld [vmem:[%s233 + $0x94] sm:$0xf]
      %v1820 = vld [vmem:[%s233 + $0x9c] sm:$0xf]
      %v1821 = vld [vmem:[%s233 + $0xa0] sm:$0xf]
      %v1822 = vld [vmem:[%s233 + $0xa8] sm:$0xf]
      %v1823 = vld [vmem:[%s233 + $0xac] sm:$0xf]
      %v1824 = vld [vmem:[%s233 + $0xb4] sm:$0xf]
      %v1825 = vld [vmem:[%s233 + $0xb8] sm:$0xf]
      %1826 = vst [vmem:[#allocation3 + $0xc] sm:$0xf] %v1794
      %1827 = vst [vmem:[#allocation3 + $0x20] sm:$0xf] %v1795
      %1828 = vst [vmem:[#allocation3 + $0x34] sm:$0xf] %v1796
      %1829 = vst [vmem:[#allocation3 + $0x48] sm:$0xf] %v1797
      %1830 = vst [vmem:[#allocation3 + $0x5c] sm:$0xf] %v1798
      %1831 = vst [vmem:[#allocation3 + $0x70] sm:$0xf] %v1799
      %1832 = vst [vmem:[#allocation3 + $0x84] sm:$0xf] %v1800
      %1833 = vst [vmem:[#allocation3 + $0x98] sm:$0xf] %v1801
      %1834 = vst [vmem:[#allocation3 + $0xac] sm:$0xf] %v1802
      %1835 = vst [vmem:[#allocation3 + $0xc0] sm:$0xf] %v1803
      %1836 = vst [vmem:[#allocation3 + $0xd4] sm:$0xf] %v1804
      %1837 = vst [vmem:[#allocation3 + $0xe8] sm:$0xf] %v1805
      %1838 = vst [vmem:[#allocation3 + $0xfc] sm:$0xf] %v1806
      %1839 = vst [vmem:[#allocation3 + $0x110] sm:$0xf] %v1807
      %1840 = vst [vmem:[#allocation3 + $0x124] sm:$0xf] %v1808
      %1841 = vst [vmem:[#allocation3 + $0x138] sm:$0xf] %v1809
      %1842 = vst [vmem:[#allocation3 + $0x14c] sm:$0xf] %v1810
      %1843 = vst [vmem:[#allocation3 + $0x160] sm:$0xf] %v1811
      %1844 = vst [vmem:[#allocation3 + $0x174] sm:$0xf] %v1812
      %1845 = vst [vmem:[#allocation3 + $0x188] sm:$0xf] %v1813
      %1846 = vst [vmem:[#allocation3 + $0x19c] sm:$0xf] %v1814
      %1847 = vst [vmem:[#allocation3 + $0x1b0] sm:$0xf] %v1815
      %1848 = vst [vmem:[#allocation3 + $0x1c4] sm:$0xf] %v1816
      %1849 = vst [vmem:[#allocation3 + $0x1d8] sm:$0xf] %v1817
      %1850 = vst [vmem:[#allocation3 + $0x1ec] sm:$0xf] %v1818
      %1851 = vst [vmem:[#allocation3 + $0x200] sm:$0xf] %v1819
      %1852 = vst [vmem:[#allocation3 + $0x214] sm:$0xf] %v1820
      %1853 = vst [vmem:[#allocation3 + $0x228] sm:$0xf] %v1821
      %1854 = vst [vmem:[#allocation3 + $0x23c] sm:$0xf] %v1822
      %1855 = vst [vmem:[#allocation3 + $0x250] sm:$0xf] %v1823
      %1856 = vst [vmem:[#allocation3 + $0x264] sm:$0xf] %v1824
      %1857 = vst [vmem:[#allocation3 + $0x278] sm:$0xf] %v1825
      %v1858 = vld [vmem:[%s233] sm:$0xf]
      %v1859 = vld [vmem:[%s233 + $0x4] sm:$0xf]
      %v1860 = vld [vmem:[%s233 + $0x8] sm:$0x1]
      %v1861 = vld [vmem:[%s233 + $0xc] sm:$0xf]
      %v1862 = vld [vmem:[%s233 + $0x10] sm:$0xf]
      %v1863 = vld [vmem:[%s233 + $0x14] sm:$0x1]
      %v1864 = vld [vmem:[%s233 + $0x18] sm:$0xf]
      %v1865 = vld [vmem:[%s233 + $0x1c] sm:$0xf]
      %v1866 = vld [vmem:[%s233 + $0x20] sm:$0x1]
      %v1867 = vld [vmem:[%s233 + $0x24] sm:$0xf]
      %v1868 = vld [vmem:[%s233 + $0x28] sm:$0xf]
      %v1869 = vld [vmem:[%s233 + $0x2c] sm:$0x1]
      %v1870 = vld [vmem:[%s233 + $0x30] sm:$0xf]
      %v1871 = vld [vmem:[%s233 + $0x34] sm:$0xf]
      %v1872 = vld [vmem:[%s233 + $0x38] sm:$0x1]
      %v1873 = vld [vmem:[%s233 + $0x3c] sm:$0xf]
      %v1874 = vld [vmem:[%s233 + $0x40] sm:$0xf]
      %v1875 = vld [vmem:[%s233 + $0x44] sm:$0x1]
      %v1876 = vld [vmem:[%s233 + $0x48] sm:$0xf]
      %v1877 = vld [vmem:[%s233 + $0x4c] sm:$0xf]
      %v1878 = vld [vmem:[%s233 + $0x50] sm:$0x1]
      %v1879 = vld [vmem:[%s233 + $0x54] sm:$0xf]
      %v1880 = vld [vmem:[%s233 + $0x58] sm:$0xf]
      %v1881 = vld [vmem:[%s233 + $0x5c] sm:$0x1]
      %v1882 = vld [vmem:[%s233 + $0x60] sm:$0xf]
      %v1883 = vld [vmem:[%s233 + $0x64] sm:$0xf]
      %v1884 = vld [vmem:[%s233 + $0x68] sm:$0x1]
      %v1885 = vld [vmem:[%s233 + $0x6c] sm:$0xf]
      %v1886 = vld [vmem:[%s233 + $0x70] sm:$0xf]
      %v1887 = vld [vmem:[%s233 + $0x74] sm:$0x1]
      %v1888 = vld [vmem:[%s233 + $0x78] sm:$0xf]
      %v1889 = vld [vmem:[%s233 + $0x7c] sm:$0xf]
      %v1890 = vld [vmem:[%s233 + $0x80] sm:$0x1]
      %v1891 = vld [vmem:[%s233 + $0x84] sm:$0xf]
      %v1892 = vld [vmem:[%s233 + $0x88] sm:$0xf]
      %v1893 = vld [vmem:[%s233 + $0x8c] sm:$0x1]
      %v1894 = vld [vmem:[%s233 + $0x90] sm:$0xf]
      %v1895 = vld [vmem:[%s233 + $0x94] sm:$0xf]
      %v1896 = vld [vmem:[%s233 + $0x98] sm:$0x1]
      %v1897 = vld [vmem:[%s233 + $0x9c] sm:$0xf]
      %v1898 = vld [vmem:[%s233 + $0xa0] sm:$0xf]
      %v1899 = vld [vmem:[%s233 + $0xa4] sm:$0x1]
      %v1900 = vld [vmem:[%s233 + $0xa8] sm:$0xf]
      %v1901 = vld [vmem:[%s233 + $0xac] sm:$0xf]
      %v1902 = vld [vmem:[%s233 + $0xb0] sm:$0x1]
      %v1903 = vld [vmem:[%s233 + $0xb4] sm:$0xf]
      %v1904 = vld [vmem:[%s233 + $0xb8] sm:$0xf]
      %v1905 = vld [vmem:[%s233 + $0xbc] sm:$0x1]
      %v1907 = vshrl.u32 %v1858, 16
      %v1909 = vrot.slane %v1907, 4
      %v1910 = vshll.u32 %v1858, 16
      %v1912 = vrot.slane %v1910, 5
      %v1913 = vor.u32 %v1909, %v1912
      %v1914 = vrot.slane %v1913, 4
      %v1916 = vshll.u32 %v1859, 16
      %v1918 = vrot.slane %v1916, 5
      %v1919 = vsel %vm1070, %v1914, %v1918
      %v1920 = vshrl.u32 %v1859, 16
      %v1922 = vrot.slane %v1920, 4
      %v1923 = vor.u32 %v1922, %v1918
      %v1924 = vrot.slane %v1923, 4
      %v1926 = vshll.u32 %v1860, 16
      %v1928 = vrot.slane %v1926, 5
      %v1929 = vsel %vm1070, %v1924, %v1928
      %v1931 = vshrl.u32 %v1861, 16
      %v1933 = vrot.slane %v1931, 4
      %v1934 = vshll.u32 %v1861, 16
      %v1936 = vrot.slane %v1934, 5
      %v1937 = vor.u32 %v1933, %v1936
      %v1938 = vrot.slane %v1937, 4
      %v1940 = vshll.u32 %v1862, 16
      %v1942 = vrot.slane %v1940, 5
      %v1943 = vsel %vm1070, %v1938, %v1942
      %v1944 = vshrl.u32 %v1862, 16
      %v1946 = vrot.slane %v1944, 4
      %v1947 = vor.u32 %v1946, %v1942
      %v1948 = vrot.slane %v1947, 4
      %v1950 = vshll.u32 %v1863, 16
      %v1952 = vrot.slane %v1950, 5
      %v1953 = vsel %vm1070, %v1948, %v1952
      %v1955 = vshrl.u32 %v1864, 16
      %v1957 = vrot.slane %v1955, 4
      %v1958 = vshll.u32 %v1864, 16
      %v1960 = vrot.slane %v1958, 5
      %v1961 = vor.u32 %v1957, %v1960
      %v1962 = vrot.slane %v1961, 4
      %v1964 = vshll.u32 %v1865, 16
      %v1966 = vrot.slane %v1964, 5
      %v1967 = vsel %vm1070, %v1962, %v1966
      %v1968 = vshrl.u32 %v1865, 16
      %v1970 = vrot.slane %v1968, 4
      %v1971 = vor.u32 %v1970, %v1966
      %v1972 = vrot.slane %v1971, 4
      %v1974 = vshll.u32 %v1866, 16
      %v1976 = vrot.slane %v1974, 5
      %v1977 = vsel %vm1070, %v1972, %v1976
      %v1979 = vshrl.u32 %v1867, 16
      %v1981 = vrot.slane %v1979, 4
      %v1982 = vshll.u32 %v1867, 16
      %v1984 = vrot.slane %v1982, 5
      %v1985 = vor.u32 %v1981, %v1984
      %v1986 = vrot.slane %v1985, 4
      %v1988 = vshll.u32 %v1868, 16
      %v1990 = vrot.slane %v1988, 5
      %v1991 = vsel %vm1070, %v1986, %v1990
      %v1992 = vshrl.u32 %v1868, 16
      %v1994 = vrot.slane %v1992, 4
      %v1995 = vor.u32 %v1994, %v1990
      %v1996 = vrot.slane %v1995, 4
      %v1998 = vshll.u32 %v1869, 16
      %v2000 = vrot.slane %v1998, 5
      %v2001 = vsel %vm1070, %v1996, %v2000
      %v2003 = vshrl.u32 %v1870, 16
      %v2005 = vrot.slane %v2003, 4
      %v2006 = vshll.u32 %v1870, 16
      %v2008 = vrot.slane %v2006, 5
      %v2009 = vor.u32 %v2005, %v2008
      %v2010 = vrot.slane %v2009, 4
      %v2012 = vshll.u32 %v1871, 16
      %v2014 = vrot.slane %v2012, 5
      %v2015 = vsel %vm1070, %v2010, %v2014
      %v2016 = vshrl.u32 %v1871, 16
      %v2018 = vrot.slane %v2016, 4
      %v2019 = vor.u32 %v2018, %v2014
      %v2020 = vrot.slane %v2019, 4
      %v2022 = vshll.u32 %v1872, 16
      %v2024 = vrot.slane %v2022, 5
      %v2025 = vsel %vm1070, %v2020, %v2024
      %v2027 = vshrl.u32 %v1873, 16
      %v2029 = vrot.slane %v2027, 4
      %v2030 = vshll.u32 %v1873, 16
      %v2032 = vrot.slane %v2030, 5
      %v2033 = vor.u32 %v2029, %v2032
      %v2034 = vrot.slane %v2033, 4
      %v2036 = vshll.u32 %v1874, 16
      %v2038 = vrot.slane %v2036, 5
      %v2039 = vsel %vm1070, %v2034, %v2038
      %v2040 = vshrl.u32 %v1874, 16
      %v2042 = vrot.slane %v2040, 4
      %v2043 = vor.u32 %v2042, %v2038
      %v2044 = vrot.slane %v2043, 4
      %v2046 = vshll.u32 %v1875, 16
      %v2048 = vrot.slane %v2046, 5
      %v2049 = vsel %vm1070, %v2044, %v2048
      %v2051 = vshrl.u32 %v1876, 16
      %v2053 = vrot.slane %v2051, 4
      %v2054 = vshll.u32 %v1876, 16
      %v2056 = vrot.slane %v2054, 5
      %v2057 = vor.u32 %v2053, %v2056
      %v2058 = vrot.slane %v2057, 4
      %v2060 = vshll.u32 %v1877, 16
      %v2062 = vrot.slane %v2060, 5
      %v2063 = vsel %vm1070, %v2058, %v2062
      %v2064 = vshrl.u32 %v1877, 16
      %v2066 = vrot.slane %v2064, 4
      %v2067 = vor.u32 %v2066, %v2062
      %v2068 = vrot.slane %v2067, 4
      %v2070 = vshll.u32 %v1878, 16
      %v2072 = vrot.slane %v2070, 5
      %v2073 = vsel %vm1070, %v2068, %v2072
      %v2075 = vshrl.u32 %v1879, 16
      %v2077 = vrot.slane %v2075, 4
      %v2078 = vshll.u32 %v1879, 16
      %v2080 = vrot.slane %v2078, 5
      %v2081 = vor.u32 %v2077, %v2080
      %v2082 = vrot.slane %v2081, 4
      %v2084 = vshll.u32 %v1880, 16
      %v2086 = vrot.slane %v2084, 5
      %v2087 = vsel %vm1070, %v2082, %v2086
      %v2088 = vshrl.u32 %v1880, 16
      %v2090 = vrot.slane %v2088, 4
      %v2091 = vor.u32 %v2090, %v2086
      %v2092 = vrot.slane %v2091, 4
      %v2094 = vshll.u32 %v1881, 16
      %v2096 = vrot.slane %v2094, 5
      %v2097 = vsel %vm1070, %v2092, %v2096
      %v2099 = vshrl.u32 %v1882, 16
      %v2101 = vrot.slane %v2099, 4
      %v2102 = vshll.u32 %v1882, 16
      %v2104 = vrot.slane %v2102, 5
      %v2105 = vor.u32 %v2101, %v2104
      %v2106 = vrot.slane %v2105, 4
      %v2108 = vshll.u32 %v1883, 16
      %v2110 = vrot.slane %v2108, 5
      %v2111 = vsel %vm1070, %v2106, %v2110
      %v2112 = vshrl.u32 %v1883, 16
      %v2114 = vrot.slane %v2112, 4
      %v2115 = vor.u32 %v2114, %v2110
      %v2116 = vrot.slane %v2115, 4
      %v2118 = vshll.u32 %v1884, 16
      %v2120 = vrot.slane %v2118, 5
      %v2121 = vsel %vm1070, %v2116, %v2120
      %v2123 = vshrl.u32 %v1885, 16
      %v2125 = vrot.slane %v2123, 4
      %v2126 = vshll.u32 %v1885, 16
      %v2128 = vrot.slane %v2126, 5
      %v2129 = vor.u32 %v2125, %v2128
      %v2130 = vrot.slane %v2129, 4
      %v2132 = vshll.u32 %v1886, 16
      %v2134 = vrot.slane %v2132, 5
      %v2135 = vsel %vm1070, %v2130, %v2134
      %v2136 = vshrl.u32 %v1886, 16
      %v2138 = vrot.slane %v2136, 4
      %v2139 = vor.u32 %v2138, %v2134
      %v2140 = vrot.slane %v2139, 4
      %v2142 = vshll.u32 %v1887, 16
      %v2144 = vrot.slane %v2142, 5
      %v2145 = vsel %vm1070, %v2140, %v2144
      %v2147 = vshrl.u32 %v1888, 16
      %v2149 = vrot.slane %v2147, 4
      %v2150 = vshll.u32 %v1888, 16
      %v2152 = vrot.slane %v2150, 5
      %v2153 = vor.u32 %v2149, %v2152
      %v2154 = vrot.slane %v2153, 4
      %v2156 = vshll.u32 %v1889, 16
      %v2158 = vrot.slane %v2156, 5
      %v2159 = vsel %vm1070, %v2154, %v2158
      %v2160 = vshrl.u32 %v1889, 16
      %v2162 = vrot.slane %v2160, 4
      %v2163 = vor.u32 %v2162, %v2158
      %v2164 = vrot.slane %v2163, 4
      %v2166 = vshll.u32 %v1890, 16
      %v2168 = vrot.slane %v2166, 5
      %v2169 = vsel %vm1070, %v2164, %v2168
      %v2171 = vshrl.u32 %v1891, 16
      %v2173 = vrot.slane %v2171, 4
      %v2174 = vshll.u32 %v1891, 16
      %v2176 = vrot.slane %v2174, 5
      %v2177 = vor.u32 %v2173, %v2176
      %v2178 = vrot.slane %v2177, 4
      %v2180 = vshll.u32 %v1892, 16
      %v2182 = vrot.slane %v2180, 5
      %v2183 = vsel %vm1070, %v2178, %v2182
      %v2184 = vshrl.u32 %v1892, 16
      %v2186 = vrot.slane %v2184, 4
      %v2187 = vor.u32 %v2186, %v2182
      %v2188 = vrot.slane %v2187, 4
      %v2190 = vshll.u32 %v1893, 16
      %v2192 = vrot.slane %v2190, 5
      %v2193 = vsel %vm1070, %v2188, %v2192
      %v2195 = vshrl.u32 %v1894, 16
      %v2197 = vrot.slane %v2195, 4
      %v2198 = vshll.u32 %v1894, 16
      %v2200 = vrot.slane %v2198, 5
      %v2201 = vor.u32 %v2197, %v2200
      %v2202 = vrot.slane %v2201, 4
      %v2204 = vshll.u32 %v1895, 16
      %v2206 = vrot.slane %v2204, 5
      %v2207 = vsel %vm1070, %v2202, %v2206
      %v2208 = vshrl.u32 %v1895, 16
      %v2210 = vrot.slane %v2208, 4
      %v2211 = vor.u32 %v2210, %v2206
      %v2212 = vrot.slane %v2211, 4
      %v2214 = vshll.u32 %v1896, 16
      %v2216 = vrot.slane %v2214, 5
      %v2217 = vsel %vm1070, %v2212, %v2216
      %v2219 = vshrl.u32 %v1897, 16
      %v2221 = vrot.slane %v2219, 4
      %v2222 = vshll.u32 %v1897, 16
      %v2224 = vrot.slane %v2222, 5
      %v2225 = vor.u32 %v2221, %v2224
      %v2226 = vrot.slane %v2225, 4
      %v2228 = vshll.u32 %v1898, 16
      %v2230 = vrot.slane %v2228, 5
      %v2231 = vsel %vm1070, %v2226, %v2230
      %v2232 = vshrl.u32 %v1898, 16
      %v2234 = vrot.slane %v2232, 4
      %v2235 = vor.u32 %v2234, %v2230
      %v2236 = vrot.slane %v2235, 4
      %v2238 = vshll.u32 %v1899, 16
      %v2240 = vrot.slane %v2238, 5
      %v2241 = vsel %vm1070, %v2236, %v2240
      %v2243 = vshrl.u32 %v1900, 16
      %v2245 = vrot.slane %v2243, 4
      %v2246 = vshll.u32 %v1900, 16
      %v2248 = vrot.slane %v2246, 5
      %v2249 = vor.u32 %v2245, %v2248
      %v2250 = vrot.slane %v2249, 4
      %v2252 = vshll.u32 %v1901, 16
      %v2254 = vrot.slane %v2252, 5
      %v2255 = vsel %vm1070, %v2250, %v2254
      %v2256 = vshrl.u32 %v1901, 16
      %v2258 = vrot.slane %v2256, 4
      %v2259 = vor.u32 %v2258, %v2254
      %v2260 = vrot.slane %v2259, 4
      %v2262 = vshll.u32 %v1902, 16
      %v2264 = vrot.slane %v2262, 5
      %v2265 = vsel %vm1070, %v2260, %v2264
      %v2267 = vshrl.u32 %v1903, 16
      %v2269 = vrot.slane %v2267, 4
      %v2270 = vshll.u32 %v1903, 16
      %v2272 = vrot.slane %v2270, 5
      %v2273 = vor.u32 %v2269, %v2272
      %v2274 = vrot.slane %v2273, 4
      %v2276 = vshll.u32 %v1904, 16
      %v2278 = vrot.slane %v2276, 5
      %v2279 = vsel %vm1070, %v2274, %v2278
      %v2280 = vshrl.u32 %v1904, 16
      %v2282 = vrot.slane %v2280, 4
      %v2283 = vor.u32 %v2282, %v2278
      %v2284 = vrot.slane %v2283, 4
      %v2286 = vshll.u32 %v1905, 16
      %v2288 = vrot.slane %v2286, 5
      %v2289 = vsel %vm1070, %v2284, %v2288
      %2322 = vst [vmem:[#allocation3 + $0x10] sm:$0xf] %v1919
      %2323 = vst [vmem:[#allocation3 + $0x24] sm:$0xf] %v1929
      %2324 = vst [vmem:[#allocation3 + $0x38] sm:$0xf] %v1943
      %2325 = vst [vmem:[#allocation3 + $0x4c] sm:$0xf] %v1953
      %2326 = vst [vmem:[#allocation3 + $0x60] sm:$0xf] %v1967
      %2327 = vst [vmem:[#allocation3 + $0x74] sm:$0xf] %v1977
      %2328 = vst [vmem:[#allocation3 + $0x88] sm:$0xf] %v1991
      %2329 = vst [vmem:[#allocation3 + $0x9c] sm:$0xf] %v2001
      %2330 = vst [vmem:[#allocation3 + $0xb0] sm:$0xf] %v2015
      %2331 = vst [vmem:[#allocation3 + $0xc4] sm:$0xf] %v2025
      %2332 = vst [vmem:[#allocation3 + $0xd8] sm:$0xf] %v2039
      %2333 = vst [vmem:[#allocation3 + $0xec] sm:$0xf] %v2049
      %2334 = vst [vmem:[#allocation3 + $0x100] sm:$0xf] %v2063
      %2335 = vst [vmem:[#allocation3 + $0x114] sm:$0xf] %v2073
      %2336 = vst [vmem:[#allocation3 + $0x128] sm:$0xf] %v2087
      %2337 = vst [vmem:[#allocation3 + $0x13c] sm:$0xf] %v2097
      %2338 = vst [vmem:[#allocation3 + $0x150] sm:$0xf] %v2111
      %2339 = vst [vmem:[#allocation3 + $0x164] sm:$0xf] %v2121
      %2340 = vst [vmem:[#allocation3 + $0x178] sm:$0xf] %v2135
      %2341 = vst [vmem:[#allocation3 + $0x18c] sm:$0xf] %v2145
      %2342 = vst [vmem:[#allocation3 + $0x1a0] sm:$0xf] %v2159
      %2343 = vst [vmem:[#allocation3 + $0x1b4] sm:$0xf] %v2169
      %2344 = vst [vmem:[#allocation3 + $0x1c8] sm:$0xf] %v2183
      %2345 = vst [vmem:[#allocation3 + $0x1dc] sm:$0xf] %v2193
      %2346 = vst [vmem:[#allocation3 + $0x1f0] sm:$0xf] %v2207
      %2347 = vst [vmem:[#allocation3 + $0x204] sm:$0xf] %v2217
      %2348 = vst [vmem:[#allocation3 + $0x218] sm:$0xf] %v2231
      %2349 = vst [vmem:[#allocation3 + $0x22c] sm:$0xf] %v2241
      %2350 = vst [vmem:[#allocation3 + $0x240] sm:$0xf] %v2255
      %2351 = vst [vmem:[#allocation3 + $0x254] sm:$0xf] %v2265
      %2352 = vst [vmem:[#allocation3 + $0x268] sm:$0xf] %v2279
      %2353 = vst [vmem:[#allocation3 + $0x27c] sm:$0xf] %v2289
      %v2354 = vld [vmem:[#allocation3] sm:$0xff]
      %v2355 = vld [vmem:[#allocation3 + $0x8] sm:$0xff]
      %v2356 = vld [vmem:[#allocation3 + $0x10] sm:$0xf]
      %v2357 = vld [vmem:[#allocation3 + $0x14] sm:$0xff]
      %v2358 = vld [vmem:[#allocation3 + $0x1c] sm:$0xff]
      %v2359 = vld [vmem:[#allocation3 + $0x24] sm:$0xf]
      %v2360 = vld [vmem:[#allocation3 + $0x28] sm:$0xff]
      %v2361 = vld [vmem:[#allocation3 + $0x30] sm:$0xff]
      %v2362 = vld [vmem:[#allocation3 + $0x38] sm:$0xf]
      %v2363 = vld [vmem:[#allocation3 + $0x3c] sm:$0xff]
      %v2364 = vld [vmem:[#allocation3 + $0x44] sm:$0xff]
      %v2365 = vld [vmem:[#allocation3 + $0x4c] sm:$0xf]
      %v2366 = vld [vmem:[#allocation3 + $0x50] sm:$0xff]
      %v2367 = vld [vmem:[#allocation3 + $0x58] sm:$0xff]
      %v2368 = vld [vmem:[#allocation3 + $0x60] sm:$0xf]
      %v2369 = vld [vmem:[#allocation3 + $0x64] sm:$0xff]
      %v2370 = vld [vmem:[#allocation3 + $0x6c] sm:$0xff]
      %v2371 = vld [vmem:[#allocation3 + $0x74] sm:$0xf]
      %v2372 = vld [vmem:[#allocation3 + $0x78] sm:$0xff]
      %v2373 = vld [vmem:[#allocation3 + $0x80] sm:$0xff]
      %v2374 = vld [vmem:[#allocation3 + $0x88] sm:$0xf]
      %v2375 = vld [vmem:[#allocation3 + $0x8c] sm:$0xff]
      %v2376 = vld [vmem:[#allocation3 + $0x94] sm:$0xff]
      %v2377 = vld [vmem:[#allocation3 + $0x9c] sm:$0xf]
      %v2378 = vld [vmem:[#allocation3 + $0xa0] sm:$0xff]
      %v2379 = vld [vmem:[#allocation3 + $0xa8] sm:$0xff]
      %v2380 = vld [vmem:[#allocation3 + $0xb0] sm:$0xf]
      %v2381 = vld [vmem:[#allocation3 + $0xb4] sm:$0xff]
      %v2382 = vld [vmem:[#allocation3 + $0xbc] sm:$0xff]
      %v2383 = vld [vmem:[#allocation3 + $0xc4] sm:$0xf]
      %v2384 = vld [vmem:[#allocation3 + $0xc8] sm:$0xff]
      %v2385 = vld [vmem:[#allocation3 + $0xd0] sm:$0xff]
      %v2386 = vld [vmem:[#allocation3 + $0xd8] sm:$0xf]
      %v2387 = vld [vmem:[#allocation3 + $0xdc] sm:$0xff]
      %v2388 = vld [vmem:[#allocation3 + $0xe4] sm:$0xff]
      %v2389 = vld [vmem:[#allocation3 + $0xec] sm:$0xf]
      %v2390 = vld [vmem:[#allocation3 + $0xf0] sm:$0xff]
      %v2391 = vld [vmem:[#allocation3 + $0xf8] sm:$0xff]
      %v2392 = vld [vmem:[#allocation3 + $0x100] sm:$0xf]
      %v2393 = vld [vmem:[#allocation3 + $0x104] sm:$0xff]
      %v2394 = vld [vmem:[#allocation3 + $0x10c] sm:$0xff]
      %v2395 = vld [vmem:[#allocation3 + $0x114] sm:$0xf]
      %v2396 = vld [vmem:[#allocation3 + $0x118] sm:$0xff]
      %v2397 = vld [vmem:[#allocation3 + $0x120] sm:$0xff]
      %v2398 = vld [vmem:[#allocation3 + $0x128] sm:$0xf]
      %v2399 = vld [vmem:[#allocation3 + $0x12c] sm:$0xff]
      %v2400 = vld [vmem:[#allocation3 + $0x134] sm:$0xff]
      %v2401 = vld [vmem:[#allocation3 + $0x13c] sm:$0xf]
      %v2402 = vld [vmem:[#allocation3 + $0x140] sm:$0xff]
      %v2403 = vld [vmem:[#allocation3 + $0x148] sm:$0xff]
      %v2404 = vld [vmem:[#allocation3 + $0x150] sm:$0xf]
      %v2405 = vld [vmem:[#allocation3 + $0x154] sm:$0xff]
      %v2406 = vld [vmem:[#allocation3 + $0x15c] sm:$0xff]
      %v2407 = vld [vmem:[#allocation3 + $0x164] sm:$0xf]
      %v2408 = vld [vmem:[#allocation3 + $0x168] sm:$0xff]
      %v2409 = vld [vmem:[#allocation3 + $0x170] sm:$0xff]
      %v2410 = vld [vmem:[#allocation3 + $0x178] sm:$0xf]
      %v2411 = vld [vmem:[#allocation3 + $0x17c] sm:$0xff]
      %v2412 = vld [vmem:[#allocation3 + $0x184] sm:$0xff]
      %v2413 = vld [vmem:[#allocation3 + $0x18c] sm:$0xf]
      %v2414 = vld [vmem:[#allocation3 + $0x190] sm:$0xff]
      %v2415 = vld [vmem:[#allocation3 + $0x198] sm:$0xff]
      %v2416 = vld [vmem:[#allocation3 + $0x1a0] sm:$0xf]
      %v2417 = vld [vmem:[#allocation3 + $0x1a4] sm:$0xff]
      %v2418 = vld [vmem:[#allocation3 + $0x1ac] sm:$0xff]
      %v2419 = vld [vmem:[#allocation3 + $0x1b4] sm:$0xf]
      %v2420 = vld [vmem:[#allocation3 + $0x1b8] sm:$0xff]
      %v2421 = vld [vmem:[#allocation3 + $0x1c0] sm:$0xff]
      %v2422 = vld [vmem:[#allocation3 + $0x1c8] sm:$0xf]
      %v2423 = vld [vmem:[#allocation3 + $0x1cc] sm:$0xff]
      %v2424 = vld [vmem:[#allocation3 + $0x1d4] sm:$0xff]
      %v2425 = vld [vmem:[#allocation3 + $0x1dc] sm:$0xf]
      %v2426 = vld [vmem:[#allocation3 + $0x1e0] sm:$0xff]
      %v2427 = vld [vmem:[#allocation3 + $0x1e8] sm:$0xff]
      %v2428 = vld [vmem:[#allocation3 + $0x1f0] sm:$0xf]
      %v2429 = vld [vmem:[#allocation3 + $0x1f4] sm:$0xff]
      %v2430 = vld [vmem:[#allocation3 + $0x1fc] sm:$0xff]
      %v2431 = vld [vmem:[#allocation3 + $0x204] sm:$0xf]
      %v2432 = vld [vmem:[#allocation3 + $0x208] sm:$0xff]
      %v2433 = vld [vmem:[#allocation3 + $0x210] sm:$0xff]
      %v2434 = vld [vmem:[#allocation3 + $0x218] sm:$0xf]
      %v2435 = vld [vmem:[#allocation3 + $0x21c] sm:$0xff]
      %v2436 = vld [vmem:[#allocation3 + $0x224] sm:$0xff]
      %v2437 = vld [vmem:[#allocation3 + $0x22c] sm:$0xf]
      %v2438 = vld [vmem:[#allocation3 + $0x230] sm:$0xff]
      %v2439 = vld [vmem:[#allocation3 + $0x238] sm:$0xff]
      %v2440 = vld [vmem:[#allocation3 + $0x240] sm:$0xf]
      %v2441 = vld [vmem:[#allocation3 + $0x244] sm:$0xff]
      %v2442 = vld [vmem:[#allocation3 + $0x24c] sm:$0xff]
      %v2443 = vld [vmem:[#allocation3 + $0x254] sm:$0xf]
      %v2444 = vld [vmem:[#allocation3 + $0x258] sm:$0xff]
      %v2445 = vld [vmem:[#allocation3 + $0x260] sm:$0xff]
      %v2446 = vld [vmem:[#allocation3 + $0x268] sm:$0xf]
      %v2447 = vld [vmem:[#allocation3 + $0x26c] sm:$0xff]
      %v2448 = vld [vmem:[#allocation3 + $0x274] sm:$0xff]
      %v2449 = vld [vmem:[#allocation3 + $0x27c] sm:$0xf]
      %v2450 = vld [vmem:[%s1] sm:$0xf]
      %v2451 = vld [vmem:[%s1 + $0x4] sm:$0xf]
      %v2452 = vld [vmem:[%s1 + $0x8] sm:$0xf]
      %v2453 = vld [vmem:[%s1 + $0xc] sm:$0xf]
      %v2454 = vld [vmem:[%s1 + $0x10] sm:$0xf]
      %v2455 = vld [vmem:[%s1 + $0x14] sm:$0xf]
      %v2456 = vld [vmem:[%s1 + $0x18] sm:$0xf]
      %v2457 = vld [vmem:[%s1 + $0x1c] sm:$0xf]
      %v2458 = vld [vmem:[%s1 + $0x20] sm:$0xf]
      %v2459 = vld [vmem:[%s1 + $0x24] sm:$0xf]
      %v2460 = vld [vmem:[%s1 + $0x28] sm:$0xf]
      %v2461 = vld [vmem:[%s1 + $0x2c] sm:$0xf]
      %v2462 = vld [vmem:[%s1 + $0x30] sm:$0xf]
      %v2463 = vld [vmem:[%s1 + $0x34] sm:$0xf]
      %v2464 = vld [vmem:[%s1 + $0x38] sm:$0xf]
      %v2465 = vld [vmem:[%s1 + $0x3c] sm:$0xf]
      %v2466 = vld [vmem:[%s1 + $0x40] sm:$0xf]
      %v2467 = vld [vmem:[%s1 + $0x44] sm:$0xf]
      %v2468 = vld [vmem:[%s1 + $0x48] sm:$0xf]
      %v2469 = vld [vmem:[%s1 + $0x4c] sm:$0xf]
      %v2470 = vld [vmem:[%s1 + $0x50] sm:$0xf]
      %v2471 = vld [vmem:[%s1 + $0x54] sm:$0xf]
      %v2472 = vld [vmem:[%s1 + $0x58] sm:$0xf]
      %v2473 = vld [vmem:[%s1 + $0x5c] sm:$0xf]
      %v2474 = vld [vmem:[%s1 + $0x60] sm:$0xf]
      %v2475 = vld [vmem:[%s1 + $0x64] sm:$0xf]
      %v2476 = vld [vmem:[%s1 + $0x68] sm:$0xf]
      %v2477 = vld [vmem:[%s1 + $0x6c] sm:$0xf]
      %v2478 = vld [vmem:[%s1 + $0x70] sm:$0xf]
      %v2479 = vld [vmem:[%s1 + $0x74] sm:$0xf]
      %v2480 = vld [vmem:[%s1 + $0x78] sm:$0xf]
      %v2481 = vld [vmem:[%s1 + $0x7c] sm:$0xf]
      %v2482 = vld [vmem:[%s1 + $0x80] sm:$0xf]
      %v2483 = vld [vmem:[%s1 + $0x84] sm:$0xf]
      %v2484 = vld [vmem:[%s1 + $0x88] sm:$0xf]
      %v2485 = vld [vmem:[%s1 + $0x8c] sm:$0xf]
      %v2486 = vld [vmem:[%s1 + $0x90] sm:$0xf]
      %v2487 = vld [vmem:[%s1 + $0x94] sm:$0xf]
      %v2488 = vld [vmem:[%s1 + $0x98] sm:$0xf]
      %v2489 = vld [vmem:[%s1 + $0x9c] sm:$0xf]
      %v2490 = vld [vmem:[%s1 + $0xa0] sm:$0xf]
      %v2491 = vld [vmem:[%s1 + $0xa4] sm:$0xf]
      %v2492 = vld [vmem:[%s1 + $0xa8] sm:$0xf]
      %v2493 = vld [vmem:[%s1 + $0xac] sm:$0xf]
      %v2494 = vld [vmem:[%s1 + $0xb0] sm:$0xf]
      %v2495 = vld [vmem:[%s1 + $0xb4] sm:$0xf]
      %v2496 = vld [vmem:[%s1 + $0xb8] sm:$0xf]
      %v2497 = vld [vmem:[%s1 + $0xbc] sm:$0xf]
      %v2498 = vld [vmem:[%s1 + $0xc0] sm:$0xf]
      %v2499 = vld [vmem:[%s1 + $0xc4] sm:$0xf]
      %v2500 = vld [vmem:[%s1 + $0xc8] sm:$0xf]
      %v2501 = vld [vmem:[%s1 + $0xcc] sm:$0xf]
      %v2502 = vld [vmem:[%s1 + $0xd0] sm:$0xf]
      %v2503 = vld [vmem:[%s1 + $0xd4] sm:$0xf]
      %v2504 = vld [vmem:[%s1 + $0xd8] sm:$0xf]
      %v2505 = vld [vmem:[%s1 + $0xdc] sm:$0xf]
      %v2506 = vld [vmem:[%s1 + $0xe0] sm:$0xf]
      %v2507 = vld [vmem:[%s1 + $0xe4] sm:$0xf]
      %v2508 = vld [vmem:[%s1 + $0xe8] sm:$0xf]
      %v2509 = vld [vmem:[%s1 + $0xec] sm:$0xf]
      %v2510 = vld [vmem:[%s1 + $0xf0] sm:$0xf]
      %v2511 = vld [vmem:[%s1 + $0xf4] sm:$0xf]
      %v2512 = vld [vmem:[%s1 + $0xf8] sm:$0xf]
      %v2513 = vld [vmem:[%s1 + $0xfc] sm:$0xf]
      %v2514 = vld [vmem:[%s1 + $0x100] sm:$0xf]
      %v2515 = vld [vmem:[%s1 + $0x104] sm:$0xf]
      %v2516 = vld [vmem:[%s1 + $0x108] sm:$0xf]
      %v2517 = vld [vmem:[%s1 + $0x10c] sm:$0xf]
      %v2518 = vld [vmem:[%s1 + $0x110] sm:$0xf]
      %v2519 = vld [vmem:[%s1 + $0x114] sm:$0xf]
      %v2520 = vld [vmem:[%s1 + $0x118] sm:$0xf]
      %v2521 = vld [vmem:[%s1 + $0x11c] sm:$0xf]
      %v2522 = vld [vmem:[%s1 + $0x120] sm:$0xf]
      %v2523 = vld [vmem:[%s1 + $0x124] sm:$0xf]
      %v2524 = vld [vmem:[%s1 + $0x128] sm:$0xf]
      %v2525 = vld [vmem:[%s1 + $0x12c] sm:$0xf]
      %v2526 = vld [vmem:[%s1 + $0x130] sm:$0xf]
      %v2527 = vld [vmem:[%s1 + $0x134] sm:$0xf]
      %v2528 = vld [vmem:[%s1 + $0x138] sm:$0xf]
      %v2529 = vld [vmem:[%s1 + $0x13c] sm:$0xf]
      %v2530 = vld [vmem:[%s2] sm:$0x1]
      %v2532 = vperm.slane %v2530, 0
      %v2630 = vunpack.c.l.b16 %v2354
      %v2631 = vunpack.c.h.b16 %v2354
      %v2632 = vunpack.c.l.b16 %v2355
      %v2633 = vunpack.c.h.b16 %v2355
      %v2634 = vunpack.c.l.b16 %v2356
      %v2635 = vunpack.c.l.b16 %v2357
      %v2636 = vunpack.c.h.b16 %v2357
      %v2637 = vunpack.c.l.b16 %v2358
      %v2638 = vunpack.c.h.b16 %v2358
      %v2639 = vunpack.c.l.b16 %v2359
      %v2640 = vunpack.c.l.b16 %v2360
      %v2641 = vunpack.c.h.b16 %v2360
      %v2642 = vunpack.c.l.b16 %v2361
      %v2643 = vunpack.c.h.b16 %v2361
      %v2644 = vunpack.c.l.b16 %v2362
      %v2645 = vunpack.c.l.b16 %v2363
      %v2646 = vunpack.c.h.b16 %v2363
      %v2647 = vunpack.c.l.b16 %v2364
      %v2648 = vunpack.c.h.b16 %v2364
      %v2649 = vunpack.c.l.b16 %v2365
      %v2650 = vunpack.c.l.b16 %v2366
      %v2651 = vunpack.c.h.b16 %v2366
      %v2652 = vunpack.c.l.b16 %v2367
      %v2653 = vunpack.c.h.b16 %v2367
      %v2654 = vunpack.c.l.b16 %v2368
      %v2655 = vunpack.c.l.b16 %v2369
      %v2656 = vunpack.c.h.b16 %v2369
      %v2657 = vunpack.c.l.b16 %v2370
      %v2658 = vunpack.c.h.b16 %v2370
      %v2659 = vunpack.c.l.b16 %v2371
      %v2660 = vunpack.c.l.b16 %v2372
      %v2661 = vunpack.c.h.b16 %v2372
      %v2662 = vunpack.c.l.b16 %v2373
      %v2663 = vunpack.c.h.b16 %v2373
      %v2664 = vunpack.c.l.b16 %v2374
      %v2665 = vunpack.c.l.b16 %v2375
      %v2666 = vunpack.c.h.b16 %v2375
      %v2667 = vunpack.c.l.b16 %v2376
      %v2668 = vunpack.c.h.b16 %v2376
      %v2669 = vunpack.c.l.b16 %v2377
      %v2670 = vunpack.c.l.b16 %v2378
      %v2671 = vunpack.c.h.b16 %v2378
      %v2672 = vunpack.c.l.b16 %v2379
      %v2673 = vunpack.c.h.b16 %v2379
      %v2674 = vunpack.c.l.b16 %v2380
      %v2675 = vunpack.c.l.b16 %v2381
      %v2676 = vunpack.c.h.b16 %v2381
      %v2677 = vunpack.c.l.b16 %v2382
      %v2678 = vunpack.c.h.b16 %v2382
      %v2679 = vunpack.c.l.b16 %v2383
      %v2680 = vunpack.c.l.b16 %v2384
      %v2681 = vunpack.c.h.b16 %v2384
      %v2682 = vunpack.c.l.b16 %v2385
      %v2683 = vunpack.c.h.b16 %v2385
      %v2684 = vunpack.c.l.b16 %v2386
      %v2685 = vunpack.c.l.b16 %v2387
      %v2686 = vunpack.c.h.b16 %v2387
      %v2687 = vunpack.c.l.b16 %v2388
      %v2688 = vunpack.c.h.b16 %v2388
      %v2689 = vunpack.c.l.b16 %v2389
      %v2690 = vunpack.c.l.b16 %v2390
      %v2691 = vunpack.c.h.b16 %v2390
      %v2692 = vunpack.c.l.b16 %v2391
      %v2693 = vunpack.c.h.b16 %v2391
      %v2694 = vunpack.c.l.b16 %v2392
      %v2695 = vunpack.c.l.b16 %v2393
      %v2696 = vunpack.c.h.b16 %v2393
      %v2697 = vunpack.c.l.b16 %v2394
      %v2698 = vunpack.c.h.b16 %v2394
      %v2699 = vunpack.c.l.b16 %v2395
      %v2700 = vunpack.c.l.b16 %v2396
      %v2701 = vunpack.c.h.b16 %v2396
      %v2702 = vunpack.c.l.b16 %v2397
      %v2703 = vunpack.c.h.b16 %v2397
      %v2704 = vunpack.c.l.b16 %v2398
      %v2705 = vunpack.c.l.b16 %v2399
      %v2706 = vunpack.c.h.b16 %v2399
      %v2707 = vunpack.c.l.b16 %v2400
      %v2708 = vunpack.c.h.b16 %v2400
      %v2709 = vunpack.c.l.b16 %v2401
      %v2710 = vunpack.c.l.b16 %v2402
      %v2711 = vunpack.c.h.b16 %v2402
      %v2712 = vunpack.c.l.b16 %v2403
      %v2713 = vunpack.c.h.b16 %v2403
      %v2714 = vunpack.c.l.b16 %v2404
      %v2715 = vunpack.c.l.b16 %v2405
      %v2716 = vunpack.c.h.b16 %v2405
      %v2717 = vunpack.c.l.b16 %v2406
      %v2718 = vunpack.c.h.b16 %v2406
      %v2719 = vunpack.c.l.b16 %v2407
      %v2720 = vunpack.c.l.b16 %v2408
      %v2721 = vunpack.c.h.b16 %v2408
      %v2722 = vunpack.c.l.b16 %v2409
      %v2723 = vunpack.c.h.b16 %v2409
      %v2724 = vunpack.c.l.b16 %v2410
      %v2725 = vunpack.c.l.b16 %v2411
      %v2726 = vunpack.c.h.b16 %v2411
      %v2727 = vunpack.c.l.b16 %v2412
      %v2728 = vunpack.c.h.b16 %v2412
      %v2729 = vunpack.c.l.b16 %v2413
      %v2730 = vunpack.c.l.b16 %v2414
      %v2731 = vunpack.c.h.b16 %v2414
      %v2732 = vunpack.c.l.b16 %v2415
      %v2733 = vunpack.c.h.b16 %v2415
      %v2734 = vunpack.c.l.b16 %v2416
      %v2735 = vunpack.c.l.b16 %v2417
      %v2736 = vunpack.c.h.b16 %v2417
      %v2737 = vunpack.c.l.b16 %v2418
      %v2738 = vunpack.c.h.b16 %v2418
      %v2739 = vunpack.c.l.b16 %v2419
      %v2740 = vunpack.c.l.b16 %v2420
      %v2741 = vunpack.c.h.b16 %v2420
      %v2742 = vunpack.c.l.b16 %v2421
      %v2743 = vunpack.c.h.b16 %v2421
      %v2744 = vunpack.c.l.b16 %v2422
      %v2745 = vunpack.c.l.b16 %v2423
      %v2746 = vunpack.c.h.b16 %v2423
      %v2747 = vunpack.c.l.b16 %v2424
      %v2748 = vunpack.c.h.b16 %v2424
      %v2749 = vunpack.c.l.b16 %v2425
      %v2750 = vunpack.c.l.b16 %v2426
      %v2751 = vunpack.c.h.b16 %v2426
      %v2752 = vunpack.c.l.b16 %v2427
      %v2753 = vunpack.c.h.b16 %v2427
      %v2754 = vunpack.c.l.b16 %v2428
      %v2755 = vunpack.c.l.b16 %v2429
      %v2756 = vunpack.c.h.b16 %v2429
      %v2757 = vunpack.c.l.b16 %v2430
      %v2758 = vunpack.c.h.b16 %v2430
      %v2759 = vunpack.c.l.b16 %v2431
      %v2760 = vunpack.c.l.b16 %v2432
      %v2761 = vunpack.c.h.b16 %v2432
      %v2762 = vunpack.c.l.b16 %v2433
      %v2763 = vunpack.c.h.b16 %v2433
      %v2764 = vunpack.c.l.b16 %v2434
      %v2765 = vunpack.c.l.b16 %v2435
      %v2766 = vunpack.c.h.b16 %v2435
      %v2767 = vunpack.c.l.b16 %v2436
      %v2768 = vunpack.c.h.b16 %v2436
      %v2769 = vunpack.c.l.b16 %v2437
      %v2770 = vunpack.c.l.b16 %v2438
      %v2771 = vunpack.c.h.b16 %v2438
      %v2772 = vunpack.c.l.b16 %v2439
      %v2773 = vunpack.c.h.b16 %v2439
      %v2774 = vunpack.c.l.b16 %v2440
      %v2775 = vunpack.c.l.b16 %v2441
      %v2776 = vunpack.c.h.b16 %v2441
      %v2777 = vunpack.c.l.b16 %v2442
      %v2778 = vunpack.c.h.b16 %v2442
      %v2779 = vunpack.c.l.b16 %v2443
      %v2780 = vunpack.c.l.b16 %v2444
      %v2781 = vunpack.c.h.b16 %v2444
      %v2782 = vunpack.c.l.b16 %v2445
      %v2783 = vunpack.c.h.b16 %v2445
      %v2784 = vunpack.c.l.b16 %v2446
      %v2785 = vunpack.c.l.b16 %v2447
      %v2786 = vunpack.c.h.b16 %v2447
      %v2787 = vunpack.c.l.b16 %v2448
      %v2788 = vunpack.c.h.b16 %v2448
      %v2789 = vunpack.c.l.b16 %v2449
      %v2790 = vpack.c.b16 %v2635, %v2630
      %v2791 = vpack.c.b16 %v2636, %v2631
      %v2792 = vpack.c.b16 %v2637, %v2632
      %v2793 = vpack.c.b16 %v2638, %v2633
      %v2794 = vpack.c.b16 %v2639, %v2634
      %v2795 = vpack.c.b16 %v2645, %v2640
      %v2796 = vpack.c.b16 %v2646, %v2641
      %v2797 = vpack.c.b16 %v2647, %v2642
      %v2798 = vpack.c.b16 %v2648, %v2643
      %v2799 = vpack.c.b16 %v2649, %v2644
      %v2800 = vpack.c.b16 %v2655, %v2650
      %v2801 = vpack.c.b16 %v2656, %v2651
      %v2802 = vpack.c.b16 %v2657, %v2652
      %v2803 = vpack.c.b16 %v2658, %v2653
      %v2804 = vpack.c.b16 %v2659, %v2654
      %v2805 = vpack.c.b16 %v2665, %v2660
      %v2806 = vpack.c.b16 %v2666, %v2661
      %v2807 = vpack.c.b16 %v2667, %v2662
      %v2808 = vpack.c.b16 %v2668, %v2663
      %v2809 = vpack.c.b16 %v2669, %v2664
      %v2810 = vpack.c.b16 %v2675, %v2670
      %v2811 = vpack.c.b16 %v2676, %v2671
      %v2812 = vpack.c.b16 %v2677, %v2672
      %v2813 = vpack.c.b16 %v2678, %v2673
      %v2814 = vpack.c.b16 %v2679, %v2674
      %v2815 = vpack.c.b16 %v2685, %v2680
      %v2816 = vpack.c.b16 %v2686, %v2681
      %v2817 = vpack.c.b16 %v2687, %v2682
      %v2818 = vpack.c.b16 %v2688, %v2683
      %v2819 = vpack.c.b16 %v2689, %v2684
      %v2820 = vpack.c.b16 %v2695, %v2690
      %v2821 = vpack.c.b16 %v2696, %v2691
      %v2822 = vpack.c.b16 %v2697, %v2692
      %v2823 = vpack.c.b16 %v2698, %v2693
      %v2824 = vpack.c.b16 %v2699, %v2694
      %v2825 = vpack.c.b16 %v2705, %v2700
      %v2826 = vpack.c.b16 %v2706, %v2701
      %v2827 = vpack.c.b16 %v2707, %v2702
      %v2828 = vpack.c.b16 %v2708, %v2703
      %v2829 = vpack.c.b16 %v2709, %v2704
      %v2830 = vpack.c.b16 %v2715, %v2710
      %v2831 = vpack.c.b16 %v2716, %v2711
      %v2832 = vpack.c.b16 %v2717, %v2712
      %v2833 = vpack.c.b16 %v2718, %v2713
      %v2834 = vpack.c.b16 %v2719, %v2714
      %v2835 = vpack.c.b16 %v2725, %v2720
      %v2836 = vpack.c.b16 %v2726, %v2721
      %v2837 = vpack.c.b16 %v2727, %v2722
      %v2838 = vpack.c.b16 %v2728, %v2723
      %v2839 = vpack.c.b16 %v2729, %v2724
      %v2840 = vpack.c.b16 %v2735, %v2730
      %v2841 = vpack.c.b16 %v2736, %v2731
      %v2842 = vpack.c.b16 %v2737, %v2732
      %v2843 = vpack.c.b16 %v2738, %v2733
      %v2844 = vpack.c.b16 %v2739, %v2734
      %v2845 = vpack.c.b16 %v2745, %v2740
      %v2846 = vpack.c.b16 %v2746, %v2741
      %v2847 = vpack.c.b16 %v2747, %v2742
      %v2848 = vpack.c.b16 %v2748, %v2743
      %v2849 = vpack.c.b16 %v2749, %v2744
      %v2850 = vpack.c.b16 %v2755, %v2750
      %v2851 = vpack.c.b16 %v2756, %v2751
      %v2852 = vpack.c.b16 %v2757, %v2752
      %v2853 = vpack.c.b16 %v2758, %v2753
      %v2854 = vpack.c.b16 %v2759, %v2754
      %v2855 = vpack.c.b16 %v2765, %v2760
      %v2856 = vpack.c.b16 %v2766, %v2761
      %v2857 = vpack.c.b16 %v2767, %v2762
      %v2858 = vpack.c.b16 %v2768, %v2763
      %v2859 = vpack.c.b16 %v2769, %v2764
      %v2860 = vpack.c.b16 %v2775, %v2770
      %v2861 = vpack.c.b16 %v2776, %v2771
      %v2862 = vpack.c.b16 %v2777, %v2772
      %v2863 = vpack.c.b16 %v2778, %v2773
      %v2864 = vpack.c.b16 %v2779, %v2774
      %v2865 = vpack.c.b16 %v2785, %v2780
      %v2866 = vpack.c.b16 %v2786, %v2781
      %v2867 = vpack.c.b16 %v2787, %v2782
      %v2868 = vpack.c.b16 %v2788, %v2783
      %v2869 = vpack.c.b16 %v2789, %v2784
      %v3030 = vunpack.c.l.b16 %v2450
      %v3031 = vunpack.c.l.b16 %v2451
      %v3032 = vunpack.c.l.b16 %v2452
      %v3033 = vunpack.c.l.b16 %v2453
      %v3034 = vunpack.c.l.b16 %v2454
      %v3035 = vunpack.c.l.b16 %v2455
      %v3036 = vunpack.c.l.b16 %v2456
      %v3037 = vunpack.c.l.b16 %v2457
      %v3038 = vunpack.c.l.b16 %v2458
      %v3039 = vunpack.c.l.b16 %v2459
      %v3040 = vunpack.c.l.b16 %v2460
      %v3041 = vunpack.c.l.b16 %v2461
      %v3042 = vunpack.c.l.b16 %v2462
      %v3043 = vunpack.c.l.b16 %v2463
      %v3044 = vunpack.c.l.b16 %v2464
      %v3045 = vunpack.c.l.b16 %v2465
      %v3046 = vunpack.c.l.b16 %v2466
      %v3047 = vunpack.c.l.b16 %v2467
      %v3048 = vunpack.c.l.b16 %v2468
      %v3049 = vunpack.c.l.b16 %v2469
      %v3050 = vunpack.c.l.b16 %v2470
      %v3051 = vunpack.c.l.b16 %v2471
      %v3052 = vunpack.c.l.b16 %v2472
      %v3053 = vunpack.c.l.b16 %v2473
      %v3054 = vunpack.c.l.b16 %v2474
      %v3055 = vunpack.c.l.b16 %v2475
      %v3056 = vunpack.c.l.b16 %v2476
      %v3057 = vunpack.c.l.b16 %v2477
      %v3058 = vunpack.c.l.b16 %v2478
      %v3059 = vunpack.c.l.b16 %v2479
      %v3060 = vunpack.c.l.b16 %v2480
      %v3061 = vunpack.c.l.b16 %v2481
      %v3062 = vunpack.c.l.b16 %v2482
      %v3063 = vunpack.c.l.b16 %v2483
      %v3064 = vunpack.c.l.b16 %v2484
      %v3065 = vunpack.c.l.b16 %v2485
      %v3066 = vunpack.c.l.b16 %v2486
      %v3067 = vunpack.c.l.b16 %v2487
      %v3068 = vunpack.c.l.b16 %v2488
      %v3069 = vunpack.c.l.b16 %v2489
      %v3070 = vunpack.c.l.b16 %v2490
      %v3071 = vunpack.c.l.b16 %v2491
      %v3072 = vunpack.c.l.b16 %v2492
      %v3073 = vunpack.c.l.b16 %v2493
      %v3074 = vunpack.c.l.b16 %v2494
      %v3075 = vunpack.c.l.b16 %v2495
      %v3076 = vunpack.c.l.b16 %v2496
      %v3077 = vunpack.c.l.b16 %v2497
      %v3078 = vunpack.c.l.b16 %v2498
      %v3079 = vunpack.c.l.b16 %v2499
      %v3080 = vunpack.c.l.b16 %v2500
      %v3081 = vunpack.c.l.b16 %v2501
      %v3082 = vunpack.c.l.b16 %v2502
      %v3083 = vunpack.c.l.b16 %v2503
      %v3084 = vunpack.c.l.b16 %v2504
      %v3085 = vunpack.c.l.b16 %v2505
      %v3086 = vunpack.c.l.b16 %v2506
      %v3087 = vunpack.c.l.b16 %v2507
      %v3088 = vunpack.c.l.b16 %v2508
      %v3089 = vunpack.c.l.b16 %v2509
      %v3090 = vunpack.c.l.b16 %v2510
      %v3091 = vunpack.c.l.b16 %v2511
      %v3092 = vunpack.c.l.b16 %v2512
      %v3093 = vunpack.c.l.b16 %v2513
      %v3094 = vunpack.c.l.b16 %v2514
      %v3095 = vunpack.c.l.b16 %v2515
      %v3096 = vunpack.c.l.b16 %v2516
      %v3097 = vunpack.c.l.b16 %v2517
      %v3098 = vunpack.c.l.b16 %v2518
      %v3099 = vunpack.c.l.b16 %v2519
      %v3100 = vunpack.c.l.b16 %v2520
      %v3101 = vunpack.c.l.b16 %v2521
      %v3102 = vunpack.c.l.b16 %v2522
      %v3103 = vunpack.c.l.b16 %v2523
      %v3104 = vunpack.c.l.b16 %v2524
      %v3105 = vunpack.c.l.b16 %v2525
      %v3106 = vunpack.c.l.b16 %v2526
      %v3107 = vunpack.c.l.b16 %v2527
      %v3108 = vunpack.c.l.b16 %v2528
      %v3109 = vunpack.c.l.b16 %v2529
      %v3110 = vpack.c.b16 %v3031, %v3030
      %v3111 = vpack.c.b16 %v3033, %v3032
      %v3112 = vpack.c.b16 %v3035, %v3034
      %v3113 = vpack.c.b16 %v3037, %v3036
      %v3114 = vpack.c.b16 %v3039, %v3038
      %v3115 = vpack.c.b16 %v3041, %v3040
      %v3116 = vpack.c.b16 %v3043, %v3042
      %v3117 = vpack.c.b16 %v3045, %v3044
      %v3118 = vpack.c.b16 %v3047, %v3046
      %v3119 = vpack.c.b16 %v3049, %v3048
      %v3120 = vpack.c.b16 %v3051, %v3050
      %v3121 = vpack.c.b16 %v3053, %v3052
      %v3122 = vpack.c.b16 %v3055, %v3054
      %v3123 = vpack.c.b16 %v3057, %v3056
      %v3124 = vpack.c.b16 %v3059, %v3058
      %v3125 = vpack.c.b16 %v3061, %v3060
      %v3126 = vpack.c.b16 %v3063, %v3062
      %v3127 = vpack.c.b16 %v3065, %v3064
      %v3128 = vpack.c.b16 %v3067, %v3066
      %v3129 = vpack.c.b16 %v3069, %v3068
      %v3130 = vpack.c.b16 %v3071, %v3070
      %v3131 = vpack.c.b16 %v3073, %v3072
      %v3132 = vpack.c.b16 %v3075, %v3074
      %v3133 = vpack.c.b16 %v3077, %v3076
      %v3134 = vpack.c.b16 %v3079, %v3078
      %v3135 = vpack.c.b16 %v3081, %v3080
      %v3136 = vpack.c.b16 %v3083, %v3082
      %v3137 = vpack.c.b16 %v3085, %v3084
      %v3138 = vpack.c.b16 %v3087, %v3086
      %v3139 = vpack.c.b16 %v3089, %v3088
      %v3140 = vpack.c.b16 %v3091, %v3090
      %v3141 = vpack.c.b16 %v3093, %v3092
      %v3142 = vpack.c.b16 %v3095, %v3094
      %v3143 = vpack.c.b16 %v3097, %v3096
      %v3144 = vpack.c.b16 %v3099, %v3098
      %v3145 = vpack.c.b16 %v3101, %v3100
      %v3146 = vpack.c.b16 %v3103, %v3102
      %v3147 = vpack.c.b16 %v3105, %v3104
      %v3148 = vpack.c.b16 %v3107, %v3106
      %v3149 = vpack.c.b16 %v3109, %v3108
      %3190 = vmatpush.bf16.msra.mxu0 %v3117
      %3191 = vmatpush.bf16.msra.mxu0 %v3116
      %3192 = vmatpush.bf16.msra.mxu0 %v3115
      %3193 = vmatpush.bf16.msra.mxu0 %v3114
      %3194 = vmatpush.bf16.msra.mxu0 %v3113
      %3195 = vmatpush.bf16.msra.mxu0 %v3112
      %3196 = vmatpush.bf16.msra.mxu0 %v3111
      %3197 = vmatpush.bf16.msra.mxu0 %v3110
      %3198 = vmatmul.bf16.gmra.mxu0 %v2790
      %v3199 = vpop.f32.mrf.mxu0
      %v3200 = vadd.f32 %v2532, %v3199
      %v3201 = vpop.f32.mrf.mxu0
      %v3202 = vadd.f32 %v2532, %v3201
      %3203 = vmatmul.bf16.gmra.mxu0 %v2795
      %v3204 = vpop.f32.mrf.mxu0
      %v3205 = vadd.f32 %v2532, %v3204
      %v3206 = vpop.f32.mrf.mxu0
      %v3207 = vadd.f32 %v2532, %v3206
      %3208 = vmatmul.bf16.gmra.mxu0 %v2800
      %v3209 = vpop.f32.mrf.mxu0
      %v3210 = vadd.f32 %v2532, %v3209
      %v3211 = vpop.f32.mrf.mxu0
      %v3212 = vadd.f32 %v2532, %v3211
      %3213 = vmatmul.bf16.gmra.mxu0 %v2805
      %v3214 = vpop.f32.mrf.mxu0
      %v3215 = vadd.f32 %v2532, %v3214
      %v3216 = vpop.f32.mrf.mxu0
      %v3217 = vadd.f32 %v2532, %v3216
      %3218 = vmatmul.bf16.gmra.mxu0 %v2810
      %v3219 = vpop.f32.mrf.mxu0
      %v3220 = vadd.f32 %v2532, %v3219
      %v3221 = vpop.f32.mrf.mxu0
      %v3222 = vadd.f32 %v2532, %v3221
      %3223 = vmatmul.bf16.gmra.mxu0 %v2815
      %v3224 = vpop.f32.mrf.mxu0
      %v3225 = vadd.f32 %v2532, %v3224
      %v3226 = vpop.f32.mrf.mxu0
      %v3227 = vadd.f32 %v2532, %v3226
      %3228 = vmatmul.bf16.gmra.mxu0 %v2820
      %v3229 = vpop.f32.mrf.mxu0
      %v3230 = vadd.f32 %v2532, %v3229
      %v3231 = vpop.f32.mrf.mxu0
      %v3232 = vadd.f32 %v2532, %v3231
      %3233 = vmatmul.bf16.gmra.mxu0 %v2825
      %v3234 = vpop.f32.mrf.mxu0
      %v3235 = vadd.f32 %v2532, %v3234
      %v3236 = vpop.f32.mrf.mxu0
      %v3237 = vadd.f32 %v2532, %v3236
      %3238 = vmatmul.bf16.gmra.mxu0 %v2830
      %v3239 = vpop.f32.mrf.mxu0
      %v3240 = vadd.f32 %v2532, %v3239
      %v3241 = vpop.f32.mrf.mxu0
      %v3242 = vadd.f32 %v2532, %v3241
      %3243 = vmatmul.bf16.gmra.mxu0 %v2835
      %v3244 = vpop.f32.mrf.mxu0
      %v3245 = vadd.f32 %v2532, %v3244
      %v3246 = vpop.f32.mrf.mxu0
      %v3247 = vadd.f32 %v2532, %v3246
      %3248 = vmatmul.bf16.gmra.mxu0 %v2840
      %v3249 = vpop.f32.mrf.mxu0
      %v3250 = vadd.f32 %v2532, %v3249
      %v3251 = vpop.f32.mrf.mxu0
      %v3252 = vadd.f32 %v2532, %v3251
      %3253 = vmatmul.bf16.gmra.mxu0 %v2845
      %v3254 = vpop.f32.mrf.mxu0
      %v3255 = vadd.f32 %v2532, %v3254
      %v3256 = vpop.f32.mrf.mxu0
      %v3257 = vadd.f32 %v2532, %v3256
      %3258 = vmatmul.bf16.gmra.mxu0 %v2850
      %v3259 = vpop.f32.mrf.mxu0
      %v3260 = vadd.f32 %v2532, %v3259
      %v3261 = vpop.f32.mrf.mxu0
      %v3262 = vadd.f32 %v2532, %v3261
      %3263 = vmatmul.bf16.gmra.mxu0 %v2855
      %v3264 = vpop.f32.mrf.mxu0
      %v3265 = vadd.f32 %v2532, %v3264
      %v3266 = vpop.f32.mrf.mxu0
      %v3267 = vadd.f32 %v2532, %v3266
      %3268 = vmatmul.bf16.gmra.mxu0 %v2860
      %v3269 = vpop.f32.mrf.mxu0
      %v3270 = vadd.f32 %v2532, %v3269
      %v3271 = vpop.f32.mrf.mxu0
      %v3272 = vadd.f32 %v2532, %v3271
      %3273 = vmatmul.bf16.gmra.mxu0 %v2865
      %v3274 = vpop.f32.mrf.mxu0
      %v3275 = vadd.f32 %v2532, %v3274
      %v3276 = vpop.f32.mrf.mxu0
      %v3277 = vadd.f32 %v2532, %v3276
      %3278 = vdwg.mxu0
      %3279 = vmatpush.bf16.msra.mxu0 %v3125
      %3280 = vmatpush.bf16.msra.mxu0 %v3124
      %3281 = vmatpush.bf16.msra.mxu0 %v3123
      %3282 = vmatpush.bf16.msra.mxu0 %v3122
      %3283 = vmatpush.bf16.msra.mxu0 %v3121
      %3284 = vmatpush.bf16.msra.mxu0 %v3120
      %3285 = vmatpush.bf16.msra.mxu0 %v3119
      %3286 = vmatpush.bf16.msra.mxu0 %v3118
      %3287 = vmatmul.bf16.gmra.mxu0 %v2791
      %v3288 = vpop.f32.mrf.mxu0
      %v3289 = vadd.f32 %v3200, %v3288
      %v3290 = vpop.f32.mrf.mxu0
      %v3291 = vadd.f32 %v3202, %v3290
      %3292 = vmatmul.bf16.gmra.mxu0 %v2796
      %v3293 = vpop.f32.mrf.mxu0
      %v3294 = vadd.f32 %v3205, %v3293
      %v3295 = vpop.f32.mrf.mxu0
      %v3296 = vadd.f32 %v3207, %v3295
      %3297 = vmatmul.bf16.gmra.mxu0 %v2801
      %v3298 = vpop.f32.mrf.mxu0
      %v3299 = vadd.f32 %v3210, %v3298
      %v3300 = vpop.f32.mrf.mxu0
      %v3301 = vadd.f32 %v3212, %v3300
      %3302 = vmatmul.bf16.gmra.mxu0 %v2806
      %v3303 = vpop.f32.mrf.mxu0
      %v3304 = vadd.f32 %v3215, %v3303
      %v3305 = vpop.f32.mrf.mxu0
      %v3306 = vadd.f32 %v3217, %v3305
      %3307 = vmatmul.bf16.gmra.mxu0 %v2811
      %v3308 = vpop.f32.mrf.mxu0
      %v3309 = vadd.f32 %v3220, %v3308
      %v3310 = vpop.f32.mrf.mxu0
      %v3311 = vadd.f32 %v3222, %v3310
      %3312 = vmatmul.bf16.gmra.mxu0 %v2816
      %v3313 = vpop.f32.mrf.mxu0
      %v3314 = vadd.f32 %v3225, %v3313
      %v3315 = vpop.f32.mrf.mxu0
      %v3316 = vadd.f32 %v3227, %v3315
      %3317 = vmatmul.bf16.gmra.mxu0 %v2821
      %v3318 = vpop.f32.mrf.mxu0
      %v3319 = vadd.f32 %v3230, %v3318
      %v3320 = vpop.f32.mrf.mxu0
      %v3321 = vadd.f32 %v3232, %v3320
      %3322 = vmatmul.bf16.gmra.mxu0 %v2826
      %v3323 = vpop.f32.mrf.mxu0
      %v3324 = vadd.f32 %v3235, %v3323
      %v3325 = vpop.f32.mrf.mxu0
      %v3326 = vadd.f32 %v3237, %v3325
      %3327 = vmatmul.bf16.gmra.mxu0 %v2831
      %v3328 = vpop.f32.mrf.mxu0
      %v3329 = vadd.f32 %v3240, %v3328
      %v3330 = vpop.f32.mrf.mxu0
      %v3331 = vadd.f32 %v3242, %v3330
      %3332 = vmatmul.bf16.gmra.mxu0 %v2836
      %v3333 = vpop.f32.mrf.mxu0
      %v3334 = vadd.f32 %v3245, %v3333
      %v3335 = vpop.f32.mrf.mxu0
      %v3336 = vadd.f32 %v3247, %v3335
      %3337 = vmatmul.bf16.gmra.mxu0 %v2841
      %v3338 = vpop.f32.mrf.mxu0
      %v3339 = vadd.f32 %v3250, %v3338
      %v3340 = vpop.f32.mrf.mxu0
      %v3341 = vadd.f32 %v3252, %v3340
      %3342 = vmatmul.bf16.gmra.mxu0 %v2846
      %v3343 = vpop.f32.mrf.mxu0
      %v3344 = vadd.f32 %v3255, %v3343
      %v3345 = vpop.f32.mrf.mxu0
      %v3346 = vadd.f32 %v3257, %v3345
      %3347 = vmatmul.bf16.gmra.mxu0 %v2851
      %v3348 = vpop.f32.mrf.mxu0
      %v3349 = vadd.f32 %v3260, %v3348
      %v3350 = vpop.f32.mrf.mxu0
      %v3351 = vadd.f32 %v3262, %v3350
      %3352 = vmatmul.bf16.gmra.mxu0 %v2856
      %v3353 = vpop.f32.mrf.mxu0
      %v3354 = vadd.f32 %v3265, %v3353
      %v3355 = vpop.f32.mrf.mxu0
      %v3356 = vadd.f32 %v3267, %v3355
      %3357 = vmatmul.bf16.gmra.mxu0 %v2861
      %v3358 = vpop.f32.mrf.mxu0
      %v3359 = vadd.f32 %v3270, %v3358
      %v3360 = vpop.f32.mrf.mxu0
      %v3361 = vadd.f32 %v3272, %v3360
      %3362 = vmatmul.bf16.gmra.mxu0 %v2866
      %v3363 = vpop.f32.mrf.mxu0
      %v3364 = vadd.f32 %v3275, %v3363
      %v3365 = vpop.f32.mrf.mxu0
      %v3366 = vadd.f32 %v3277, %v3365
      %3367 = vdwg.mxu0
      %3368 = vmatpush.bf16.msra.mxu0 %v3133
      %3369 = vmatpush.bf16.msra.mxu0 %v3132
      %3370 = vmatpush.bf16.msra.mxu0 %v3131
      %3371 = vmatpush.bf16.msra.mxu0 %v3130
      %3372 = vmatpush.bf16.msra.mxu0 %v3129
      %3373 = vmatpush.bf16.msra.mxu0 %v3128
      %3374 = vmatpush.bf16.msra.mxu0 %v3127
      %3375 = vmatpush.bf16.msra.mxu0 %v3126
      %3376 = vmatmul.bf16.gmra.mxu0 %v2792
      %v3377 = vpop.f32.mrf.mxu0
      %v3378 = vadd.f32 %v3289, %v3377
      %v3379 = vpop.f32.mrf.mxu0
      %v3380 = vadd.f32 %v3291, %v3379
      %3381 = vmatmul.bf16.gmra.mxu0 %v2797
      %v3382 = vpop.f32.mrf.mxu0
      %v3383 = vadd.f32 %v3294, %v3382
      %v3384 = vpop.f32.mrf.mxu0
      %v3385 = vadd.f32 %v3296, %v3384
      %3386 = vmatmul.bf16.gmra.mxu0 %v2802
      %v3387 = vpop.f32.mrf.mxu0
      %v3388 = vadd.f32 %v3299, %v3387
      %v3389 = vpop.f32.mrf.mxu0
      %v3390 = vadd.f32 %v3301, %v3389
      %3391 = vmatmul.bf16.gmra.mxu0 %v2807
      %v3392 = vpop.f32.mrf.mxu0
      %v3393 = vadd.f32 %v3304, %v3392
      %v3394 = vpop.f32.mrf.mxu0
      %v3395 = vadd.f32 %v3306, %v3394
      %3396 = vmatmul.bf16.gmra.mxu0 %v2812
      %v3397 = vpop.f32.mrf.mxu0
      %v3398 = vadd.f32 %v3309, %v3397
      %v3399 = vpop.f32.mrf.mxu0
      %v3400 = vadd.f32 %v3311, %v3399
      %3401 = vmatmul.bf16.gmra.mxu0 %v2817
      %v3402 = vpop.f32.mrf.mxu0
      %v3403 = vadd.f32 %v3314, %v3402
      %v3404 = vpop.f32.mrf.mxu0
      %v3405 = vadd.f32 %v3316, %v3404
      %3406 = vmatmul.bf16.gmra.mxu0 %v2822
      %v3407 = vpop.f32.mrf.mxu0
      %v3408 = vadd.f32 %v3319, %v3407
      %v3409 = vpop.f32.mrf.mxu0
      %v3410 = vadd.f32 %v3321, %v3409
      %3411 = vmatmul.bf16.gmra.mxu0 %v2827
      %v3412 = vpop.f32.mrf.mxu0
      %v3413 = vadd.f32 %v3324, %v3412
      %v3414 = vpop.f32.mrf.mxu0
      %v3415 = vadd.f32 %v3326, %v3414
      %3416 = vmatmul.bf16.gmra.mxu0 %v2832
      %v3417 = vpop.f32.mrf.mxu0
      %v3418 = vadd.f32 %v3329, %v3417
      %v3419 = vpop.f32.mrf.mxu0
      %v3420 = vadd.f32 %v3331, %v3419
      %3421 = vmatmul.bf16.gmra.mxu0 %v2837
      %v3422 = vpop.f32.mrf.mxu0
      %v3423 = vadd.f32 %v3334, %v3422
      %v3424 = vpop.f32.mrf.mxu0
      %v3425 = vadd.f32 %v3336, %v3424
      %3426 = vmatmul.bf16.gmra.mxu0 %v2842
      %v3427 = vpop.f32.mrf.mxu0
      %v3428 = vadd.f32 %v3339, %v3427
      %v3429 = vpop.f32.mrf.mxu0
      %v3430 = vadd.f32 %v3341, %v3429
      %3431 = vmatmul.bf16.gmra.mxu0 %v2847
      %v3432 = vpop.f32.mrf.mxu0
      %v3433 = vadd.f32 %v3344, %v3432
      %v3434 = vpop.f32.mrf.mxu0
      %v3435 = vadd.f32 %v3346, %v3434
      %3436 = vmatmul.bf16.gmra.mxu0 %v2852
      %v3437 = vpop.f32.mrf.mxu0
      %v3438 = vadd.f32 %v3349, %v3437
      %v3439 = vpop.f32.mrf.mxu0
      %v3440 = vadd.f32 %v3351, %v3439
      %3441 = vmatmul.bf16.gmra.mxu0 %v2857
      %v3442 = vpop.f32.mrf.mxu0
      %v3443 = vadd.f32 %v3354, %v3442
      %v3444 = vpop.f32.mrf.mxu0
      %v3445 = vadd.f32 %v3356, %v3444
      %3446 = vmatmul.bf16.gmra.mxu0 %v2862
      %v3447 = vpop.f32.mrf.mxu0
      %v3448 = vadd.f32 %v3359, %v3447
      %v3449 = vpop.f32.mrf.mxu0
      %v3450 = vadd.f32 %v3361, %v3449
      %3451 = vmatmul.bf16.gmra.mxu0 %v2867
      %v3452 = vpop.f32.mrf.mxu0
      %v3453 = vadd.f32 %v3364, %v3452
      %v3454 = vpop.f32.mrf.mxu0
      %v3455 = vadd.f32 %v3366, %v3454
      %3456 = vdwg.mxu0
      %3457 = vmatpush.bf16.msra.mxu0 %v3141
      %3458 = vmatpush.bf16.msra.mxu0 %v3140
      %3459 = vmatpush.bf16.msra.mxu0 %v3139
      %3460 = vmatpush.bf16.msra.mxu0 %v3138
      %3461 = vmatpush.bf16.msra.mxu0 %v3137
      %3462 = vmatpush.bf16.msra.mxu0 %v3136
      %3463 = vmatpush.bf16.msra.mxu0 %v3135
      %3464 = vmatpush.bf16.msra.mxu0 %v3134
      %3465 = vmatmul.bf16.gmra.mxu0 %v2793
      %v3466 = vpop.f32.mrf.mxu0
      %v3467 = vadd.f32 %v3378, %v3466
      %v3468 = vpop.f32.mrf.mxu0
      %v3469 = vadd.f32 %v3380, %v3468
      %3470 = vmatmul.bf16.gmra.mxu0 %v2798
      %v3471 = vpop.f32.mrf.mxu0
      %v3472 = vadd.f32 %v3383, %v3471
      %v3473 = vpop.f32.mrf.mxu0
      %v3474 = vadd.f32 %v3385, %v3473
      %3475 = vmatmul.bf16.gmra.mxu0 %v2803
      %v3476 = vpop.f32.mrf.mxu0
      %v3477 = vadd.f32 %v3388, %v3476
      %v3478 = vpop.f32.mrf.mxu0
      %v3479 = vadd.f32 %v3390, %v3478
      %3480 = vmatmul.bf16.gmra.mxu0 %v2808
      %v3481 = vpop.f32.mrf.mxu0
      %v3482 = vadd.f32 %v3393, %v3481
      %v3483 = vpop.f32.mrf.mxu0
      %v3484 = vadd.f32 %v3395, %v3483
      %3485 = vmatmul.bf16.gmra.mxu0 %v2813
      %v3486 = vpop.f32.mrf.mxu0
      %v3487 = vadd.f32 %v3398, %v3486
      %v3488 = vpop.f32.mrf.mxu0
      %v3489 = vadd.f32 %v3400, %v3488
      %3490 = vmatmul.bf16.gmra.mxu0 %v2818
      %v3491 = vpop.f32.mrf.mxu0
      %v3492 = vadd.f32 %v3403, %v3491
      %v3493 = vpop.f32.mrf.mxu0
      %v3494 = vadd.f32 %v3405, %v3493
      %3495 = vmatmul.bf16.gmra.mxu0 %v2823
      %v3496 = vpop.f32.mrf.mxu0
      %v3497 = vadd.f32 %v3408, %v3496
      %v3498 = vpop.f32.mrf.mxu0
      %v3499 = vadd.f32 %v3410, %v3498
      %3500 = vmatmul.bf16.gmra.mxu0 %v2828
      %v3501 = vpop.f32.mrf.mxu0
      %v3502 = vadd.f32 %v3413, %v3501
      %v3503 = vpop.f32.mrf.mxu0
      %v3504 = vadd.f32 %v3415, %v3503
      %3505 = vmatmul.bf16.gmra.mxu0 %v2833
      %v3506 = vpop.f32.mrf.mxu0
      %v3507 = vadd.f32 %v3418, %v3506
      %v3508 = vpop.f32.mrf.mxu0
      %v3509 = vadd.f32 %v3420, %v3508
      %3510 = vmatmul.bf16.gmra.mxu0 %v2838
      %v3511 = vpop.f32.mrf.mxu0
      %v3512 = vadd.f32 %v3423, %v3511
      %v3513 = vpop.f32.mrf.mxu0
      %v3514 = vadd.f32 %v3425, %v3513
      %3515 = vmatmul.bf16.gmra.mxu0 %v2843
      %v3516 = vpop.f32.mrf.mxu0
      %v3517 = vadd.f32 %v3428, %v3516
      %v3518 = vpop.f32.mrf.mxu0
      %v3519 = vadd.f32 %v3430, %v3518
      %3520 = vmatmul.bf16.gmra.mxu0 %v2848
      %v3521 = vpop.f32.mrf.mxu0
      %v3522 = vadd.f32 %v3433, %v3521
      %v3523 = vpop.f32.mrf.mxu0
      %v3524 = vadd.f32 %v3435, %v3523
      %3525 = vmatmul.bf16.gmra.mxu0 %v2853
      %v3526 = vpop.f32.mrf.mxu0
      %v3527 = vadd.f32 %v3438, %v3526
      %v3528 = vpop.f32.mrf.mxu0
      %v3529 = vadd.f32 %v3440, %v3528
      %3530 = vmatmul.bf16.gmra.mxu0 %v2858
      %v3531 = vpop.f32.mrf.mxu0
      %v3532 = vadd.f32 %v3443, %v3531
      %v3533 = vpop.f32.mrf.mxu0
      %v3534 = vadd.f32 %v3445, %v3533
      %3535 = vmatmul.bf16.gmra.mxu0 %v2863
      %v3536 = vpop.f32.mrf.mxu0
      %v3537 = vadd.f32 %v3448, %v3536
      %v3538 = vpop.f32.mrf.mxu0
      %v3539 = vadd.f32 %v3450, %v3538
      %3540 = vmatmul.bf16.gmra.mxu0 %v2868
      %v3541 = vpop.f32.mrf.mxu0
      %v3542 = vadd.f32 %v3453, %v3541
      %v3543 = vpop.f32.mrf.mxu0
      %v3544 = vadd.f32 %v3455, %v3543
      %3545 = vdwg.mxu0
      %3546 = vmatpush.bf16.msra.mxu0 %v3149
      %3547 = vmatpush.bf16.msra.mxu0 %v3148
      %3548 = vmatpush.bf16.msra.mxu0 %v3147
      %3549 = vmatpush.bf16.msra.mxu0 %v3146
      %3550 = vmatpush.bf16.msra.mxu0 %v3145
      %3551 = vmatpush.bf16.msra.mxu0 %v3144
      %3552 = vmatpush.bf16.msra.mxu0 %v3143
      %3553 = vmatpush.bf16.msra.mxu0 %v3142
      %3554 = vmatmul.bf16.gmra.mxu0 %v2794
      %v3555 = vpop.f32.mrf.mxu0
      %v3556 = vadd.f32 %v3467, %v3555
      %v3557 = vpop.f32.mrf.mxu0
      %v3558 = vadd.f32 %v3469, %v3557
      %3559 = vmatmul.bf16.gmra.mxu0 %v2799
      %v3560 = vpop.f32.mrf.mxu0
      %v3561 = vadd.f32 %v3472, %v3560
      %v3562 = vpop.f32.mrf.mxu0
      %v3563 = vadd.f32 %v3474, %v3562
      %3564 = vmatmul.bf16.gmra.mxu0 %v2804
      %v3565 = vpop.f32.mrf.mxu0
      %v3566 = vadd.f32 %v3477, %v3565
      %v3567 = vpop.f32.mrf.mxu0
      %v3568 = vadd.f32 %v3479, %v3567
      %3569 = vmatmul.bf16.gmra.mxu0 %v2809
      %v3570 = vpop.f32.mrf.mxu0
      %v3571 = vadd.f32 %v3482, %v3570
      %v3572 = vpop.f32.mrf.mxu0
      %v3573 = vadd.f32 %v3484, %v3572
      %3574 = vmatmul.bf16.gmra.mxu0 %v2814
      %v3575 = vpop.f32.mrf.mxu0
      %v3576 = vadd.f32 %v3487, %v3575
      %v3577 = vpop.f32.mrf.mxu0
      %v3578 = vadd.f32 %v3489, %v3577
      %3579 = vmatmul.bf16.gmra.mxu0 %v2819
      %v3580 = vpop.f32.mrf.mxu0
      %v3581 = vadd.f32 %v3492, %v3580
      %v3582 = vpop.f32.mrf.mxu0
      %v3583 = vadd.f32 %v3494, %v3582
      %3584 = vmatmul.bf16.gmra.mxu0 %v2824
      %v3585 = vpop.f32.mrf.mxu0
      %v3586 = vadd.f32 %v3497, %v3585
      %v3587 = vpop.f32.mrf.mxu0
      %v3588 = vadd.f32 %v3499, %v3587
      %3589 = vmatmul.bf16.gmra.mxu0 %v2829
      %v3590 = vpop.f32.mrf.mxu0
      %v3591 = vadd.f32 %v3502, %v3590
      %v3592 = vpop.f32.mrf.mxu0
      %v3593 = vadd.f32 %v3504, %v3592
      %3594 = vmatmul.bf16.gmra.mxu0 %v2834
      %v3595 = vpop.f32.mrf.mxu0
      %v3596 = vadd.f32 %v3507, %v3595
      %v3597 = vpop.f32.mrf.mxu0
      %v3598 = vadd.f32 %v3509, %v3597
      %3599 = vmatmul.bf16.gmra.mxu0 %v2839
      %v3600 = vpop.f32.mrf.mxu0
      %v3601 = vadd.f32 %v3512, %v3600
      %v3602 = vpop.f32.mrf.mxu0
      %v3603 = vadd.f32 %v3514, %v3602
      %3604 = vmatmul.bf16.gmra.mxu0 %v2844
      %v3605 = vpop.f32.mrf.mxu0
      %v3606 = vadd.f32 %v3517, %v3605
      %v3607 = vpop.f32.mrf.mxu0
      %v3608 = vadd.f32 %v3519, %v3607
      %3609 = vmatmul.bf16.gmra.mxu0 %v2849
      %v3610 = vpop.f32.mrf.mxu0
      %v3611 = vadd.f32 %v3522, %v3610
      %v3612 = vpop.f32.mrf.mxu0
      %v3613 = vadd.f32 %v3524, %v3612
      %3614 = vmatmul.bf16.gmra.mxu0 %v2854
      %v3615 = vpop.f32.mrf.mxu0
      %v3616 = vadd.f32 %v3527, %v3615
      %v3617 = vpop.f32.mrf.mxu0
      %v3618 = vadd.f32 %v3529, %v3617
      %3619 = vmatmul.bf16.gmra.mxu0 %v2859
      %v3620 = vpop.f32.mrf.mxu0
      %v3621 = vadd.f32 %v3532, %v3620
      %v3622 = vpop.f32.mrf.mxu0
      %v3623 = vadd.f32 %v3534, %v3622
      %3624 = vmatmul.bf16.gmra.mxu0 %v2864
      %v3625 = vpop.f32.mrf.mxu0
      %v3626 = vadd.f32 %v3537, %v3625
      %v3627 = vpop.f32.mrf.mxu0
      %v3628 = vadd.f32 %v3539, %v3627
      %3629 = vmatmul.bf16.gmra.mxu0 %v2869
      %v3630 = vpop.f32.mrf.mxu0
      %v3631 = vadd.f32 %v3542, %v3630
      %v3632 = vpop.f32.mrf.mxu0
      %v3633 = vadd.f32 %v3544, %v3632
      %3634 = vdwg.mxu0
      %v3635 = vmax.f32 %v3556, 0.0
      %v3636 = vmax.f32 %v3558, 0.0
      %v3637 = vmax.f32 %v3561, 0.0
      %v3638 = vmax.f32 %v3563, 0.0
      %v3639 = vmax.f32 %v3566, 0.0
      %v3640 = vmax.f32 %v3568, 0.0
      %v3641 = vmax.f32 %v3571, 0.0
      %v3642 = vmax.f32 %v3573, 0.0
      %v3643 = vmax.f32 %v3576, 0.0
      %v3644 = vmax.f32 %v3578, 0.0
      %v3645 = vmax.f32 %v3581, 0.0
      %v3646 = vmax.f32 %v3583, 0.0
      %v3647 = vmax.f32 %v3586, 0.0
      %v3648 = vmax.f32 %v3588, 0.0
      %v3649 = vmax.f32 %v3591, 0.0
      %v3650 = vmax.f32 %v3593, 0.0
      %v3651 = vmax.f32 %v3596, 0.0
      %v3652 = vmax.f32 %v3598, 0.0
      %v3653 = vmax.f32 %v3601, 0.0
      %v3654 = vmax.f32 %v3603, 0.0
      %v3655 = vmax.f32 %v3606, 0.0
      %v3656 = vmax.f32 %v3608, 0.0
      %v3657 = vmax.f32 %v3611, 0.0
      %v3658 = vmax.f32 %v3613, 0.0
      %v3659 = vmax.f32 %v3616, 0.0
      %v3660 = vmax.f32 %v3618, 0.0
      %v3661 = vmax.f32 %v3621, 0.0
      %v3662 = vmax.f32 %v3623, 0.0
      %v3663 = vmax.f32 %v3626, 0.0
      %v3664 = vmax.f32 %v3628, 0.0
      %v3665 = vmax.f32 %v3631, 0.0
      %v3666 = vmax.f32 %v3633, 0.0
      %v3667 = vpack.c.bf16 %v3635, %v3635
      %v3668 = vpack.c.bf16 %v3636, %v3636
      %v3669 = vpack.c.bf16 %v3637, %v3637
      %v3670 = vpack.c.bf16 %v3638, %v3638
      %v3671 = vpack.c.bf16 %v3639, %v3639
      %v3672 = vpack.c.bf16 %v3640, %v3640
      %v3673 = vpack.c.bf16 %v3641, %v3641
      %v3674 = vpack.c.bf16 %v3642, %v3642
      %v3675 = vpack.c.bf16 %v3643, %v3643
      %v3676 = vpack.c.bf16 %v3644, %v3644
      %v3677 = vpack.c.bf16 %v3645, %v3645
      %v3678 = vpack.c.bf16 %v3646, %v3646
      %v3679 = vpack.c.bf16 %v3647, %v3647
      %v3680 = vpack.c.bf16 %v3648, %v3648
      %v3681 = vpack.c.bf16 %v3649, %v3649
      %v3682 = vpack.c.bf16 %v3650, %v3650
      %v3683 = vpack.c.bf16 %v3651, %v3651
      %v3684 = vpack.c.bf16 %v3652, %v3652
      %v3685 = vpack.c.bf16 %v3653, %v3653
      %v3686 = vpack.c.bf16 %v3654, %v3654
      %v3687 = vpack.c.bf16 %v3655, %v3655
      %v3688 = vpack.c.bf16 %v3656, %v3656
      %v3689 = vpack.c.bf16 %v3657, %v3657
      %v3690 = vpack.c.bf16 %v3658, %v3658
      %v3691 = vpack.c.bf16 %v3659, %v3659
      %v3692 = vpack.c.bf16 %v3660, %v3660
      %v3693 = vpack.c.bf16 %v3661, %v3661
      %v3694 = vpack.c.bf16 %v3662, %v3662
      %v3695 = vpack.c.bf16 %v3663, %v3663
      %v3696 = vpack.c.bf16 %v3664, %v3664
      %v3697 = vpack.c.bf16 %v3665, %v3665
      %v3698 = vpack.c.bf16 %v3666, %v3666
      %v3700 = vshrl.u32 %v3667, 16
      %v3702 = vrot.slane %v3700, 7
      %v3703 = vshll.u32 %v3667, 16
      %v3705 = vor.u32 %v3702, %v3703
      %v3706 = vrot.slane %v3702, 4
      %v3708 = vshrl.u32 %v3668, 16
      %v3710 = vrot.slane %v3708, 7
      %v3711 = vshll.u32 %v3668, 16
      %v3713 = vor.u32 %v3710, %v3711
      %v3714 = vsel %vm518, %v3706, %v3713
      %v3715 = vrot.slane %v3710, 4
      %v3717 = vshrl.u32 %v3669, 16
      %v3719 = vrot.slane %v3717, 7
      %v3720 = vshll.u32 %v3669, 16
      %v3722 = vor.u32 %v3719, %v3720
      %v3723 = vrot.slane %v3719, 4
      %v3725 = vshrl.u32 %v3670, 16
      %v3727 = vrot.slane %v3725, 7
      %v3728 = vshll.u32 %v3670, 16
      %v3730 = vor.u32 %v3727, %v3728
      %v3731 = vsel %vm518, %v3723, %v3730
      %v3732 = vrot.slane %v3727, 4
      %v3734 = vshrl.u32 %v3671, 16
      %v3736 = vrot.slane %v3734, 7
      %v3737 = vshll.u32 %v3671, 16
      %v3739 = vor.u32 %v3736, %v3737
      %v3740 = vrot.slane %v3736, 4
      %v3742 = vshrl.u32 %v3672, 16
      %v3744 = vrot.slane %v3742, 7
      %v3745 = vshll.u32 %v3672, 16
      %v3747 = vor.u32 %v3744, %v3745
      %v3748 = vsel %vm518, %v3740, %v3747
      %v3749 = vrot.slane %v3744, 4
      %v3751 = vshrl.u32 %v3673, 16
      %v3753 = vrot.slane %v3751, 7
      %v3754 = vshll.u32 %v3673, 16
      %v3756 = vor.u32 %v3753, %v3754
      %v3757 = vrot.slane %v3753, 4
      %v3759 = vshrl.u32 %v3674, 16
      %v3761 = vrot.slane %v3759, 7
      %v3762 = vshll.u32 %v3674, 16
      %v3764 = vor.u32 %v3761, %v3762
      %v3765 = vsel %vm518, %v3757, %v3764
      %v3766 = vrot.slane %v3761, 4
      %v3768 = vshrl.u32 %v3675, 16
      %v3770 = vrot.slane %v3768, 7
      %v3771 = vshll.u32 %v3675, 16
      %v3773 = vor.u32 %v3770, %v3771
      %v3774 = vrot.slane %v3770, 4
      %v3776 = vshrl.u32 %v3676, 16
      %v3778 = vrot.slane %v3776, 7
      %v3779 = vshll.u32 %v3676, 16
      %v3781 = vor.u32 %v3778, %v3779
      %v3782 = vsel %vm518, %v3774, %v3781
      %v3783 = vrot.slane %v3778, 4
      %v3785 = vshrl.u32 %v3677, 16
      %v3787 = vrot.slane %v3785, 7
      %v3788 = vshll.u32 %v3677, 16
      %v3790 = vor.u32 %v3787, %v3788
      %v3791 = vrot.slane %v3787, 4
      %v3793 = vshrl.u32 %v3678, 16
      %v3795 = vrot.slane %v3793, 7
      %v3796 = vshll.u32 %v3678, 16
      %v3798 = vor.u32 %v3795, %v3796
      %v3799 = vsel %vm518, %v3791, %v3798
      %v3800 = vrot.slane %v3795, 4
      %v3802 = vshrl.u32 %v3679, 16
      %v3804 = vrot.slane %v3802, 7
      %v3805 = vshll.u32 %v3679, 16
      %v3807 = vor.u32 %v3804, %v3805
      %v3808 = vrot.slane %v3804, 4
      %v3810 = vshrl.u32 %v3680, 16
      %v3812 = vrot.slane %v3810, 7
      %v3813 = vshll.u32 %v3680, 16
      %v3815 = vor.u32 %v3812, %v3813
      %v3816 = vsel %vm518, %v3808, %v3815
      %v3817 = vrot.slane %v3812, 4
      %v3819 = vshrl.u32 %v3681, 16
      %v3821 = vrot.slane %v3819, 7
      %v3822 = vshll.u32 %v3681, 16
      %v3824 = vor.u32 %v3821, %v3822
      %v3825 = vrot.slane %v3821, 4
      %v3827 = vshrl.u32 %v3682, 16
      %v3829 = vrot.slane %v3827, 7
      %v3830 = vshll.u32 %v3682, 16
      %v3832 = vor.u32 %v3829, %v3830
      %v3833 = vsel %vm518, %v3825, %v3832
      %v3834 = vrot.slane %v3829, 4
      %v3836 = vshrl.u32 %v3683, 16
      %v3838 = vrot.slane %v3836, 7
      %v3839 = vshll.u32 %v3683, 16
      %v3841 = vor.u32 %v3838, %v3839
      %v3842 = vrot.slane %v3838, 4
      %v3844 = vshrl.u32 %v3684, 16
      %v3846 = vrot.slane %v3844, 7
      %v3847 = vshll.u32 %v3684, 16
      %v3849 = vor.u32 %v3846, %v3847
      %v3850 = vsel %vm518, %v3842, %v3849
      %v3851 = vrot.slane %v3846, 4
      %v3853 = vshrl.u32 %v3685, 16
      %v3855 = vrot.slane %v3853, 7
      %v3856 = vshll.u32 %v3685, 16
      %v3858 = vor.u32 %v3855, %v3856
      %v3859 = vrot.slane %v3855, 4
      %v3861 = vshrl.u32 %v3686, 16
      %v3863 = vrot.slane %v3861, 7
      %v3864 = vshll.u32 %v3686, 16
      %v3866 = vor.u32 %v3863, %v3864
      %v3867 = vsel %vm518, %v3859, %v3866
      %v3868 = vrot.slane %v3863, 4
      %v3870 = vshrl.u32 %v3687, 16
      %v3872 = vrot.slane %v3870, 7
      %v3873 = vshll.u32 %v3687, 16
      %v3875 = vor.u32 %v3872, %v3873
      %v3876 = vrot.slane %v3872, 4
      %v3878 = vshrl.u32 %v3688, 16
      %v3880 = vrot.slane %v3878, 7
      %v3881 = vshll.u32 %v3688, 16
      %v3883 = vor.u32 %v3880, %v3881
      %v3884 = vsel %vm518, %v3876, %v3883
      %v3885 = vrot.slane %v3880, 4
      %v3887 = vshrl.u32 %v3689, 16
      %v3889 = vrot.slane %v3887, 7
      %v3890 = vshll.u32 %v3689, 16
      %v3892 = vor.u32 %v3889, %v3890
      %v3893 = vrot.slane %v3889, 4
      %v3895 = vshrl.u32 %v3690, 16
      %v3897 = vrot.slane %v3895, 7
      %v3898 = vshll.u32 %v3690, 16
      %v3900 = vor.u32 %v3897, %v3898
      %v3901 = vsel %vm518, %v3893, %v3900
      %v3902 = vrot.slane %v3897, 4
      %v3904 = vshrl.u32 %v3691, 16
      %v3906 = vrot.slane %v3904, 7
      %v3907 = vshll.u32 %v3691, 16
      %v3909 = vor.u32 %v3906, %v3907
      %v3910 = vrot.slane %v3906, 4
      %v3912 = vshrl.u32 %v3692, 16
      %v3914 = vrot.slane %v3912, 7
      %v3915 = vshll.u32 %v3692, 16
      %v3917 = vor.u32 %v3914, %v3915
      %v3918 = vsel %vm518, %v3910, %v3917
      %v3919 = vrot.slane %v3914, 4
      %v3921 = vshrl.u32 %v3693, 16
      %v3923 = vrot.slane %v3921, 7
      %v3924 = vshll.u32 %v3693, 16
      %v3926 = vor.u32 %v3923, %v3924
      %v3927 = vrot.slane %v3923, 4
      %v3929 = vshrl.u32 %v3694, 16
      %v3931 = vrot.slane %v3929, 7
      %v3932 = vshll.u32 %v3694, 16
      %v3934 = vor.u32 %v3931, %v3932
      %v3935 = vsel %vm518, %v3927, %v3934
      %v3936 = vrot.slane %v3931, 4
      %v3938 = vshrl.u32 %v3695, 16
      %v3940 = vrot.slane %v3938, 7
      %v3941 = vshll.u32 %v3695, 16
      %v3943 = vor.u32 %v3940, %v3941
      %v3944 = vrot.slane %v3940, 4
      %v3946 = vshrl.u32 %v3696, 16
      %v3948 = vrot.slane %v3946, 7
      %v3949 = vshll.u32 %v3696, 16
      %v3951 = vor.u32 %v3948, %v3949
      %v3952 = vsel %vm518, %v3944, %v3951
      %v3953 = vrot.slane %v3948, 4
      %v3955 = vshrl.u32 %v3697, 16
      %v3957 = vrot.slane %v3955, 7
      %v3958 = vshll.u32 %v3697, 16
      %v3960 = vor.u32 %v3957, %v3958
      %v3961 = vrot.slane %v3957, 4
      %v3963 = vshrl.u32 %v3698, 16
      %v3965 = vrot.slane %v3963, 7
      %v3966 = vshll.u32 %v3698, 16
      %v3968 = vor.u32 %v3965, %v3966
      %v3969 = vsel %vm518, %v3961, %v3968
      %v3970 = vrot.slane %v3965, 4
      %v4019 = vld [vmem:[%s233] sm:$0xf]
      %v4020 = vsel %vm287, %v3705, %v4019
      %4021 = vst [vmem:[%s233] sm:$0xf] %v4020
      %4022 = vst [vmem:[%s233 + $0x4] sm:$0xf] %v3714
      %v4023 = vld [vmem:[%s233 + $0x8] sm:$0x1]
      %v4024 = vsel %vm236, %v3715, %v4023
      %4025 = vst [vmem:[%s233 + $0x8] sm:$0x1] %v4024
      %v4026 = vld [vmem:[%s233 + $0xc] sm:$0xf]
      %v4027 = vsel %vm287, %v3722, %v4026
      %4028 = vst [vmem:[%s233 + $0xc] sm:$0xf] %v4027
      %4029 = vst [vmem:[%s233 + $0x10] sm:$0xf] %v3731
      %v4030 = vld [vmem:[%s233 + $0x14] sm:$0x1]
      %v4031 = vsel %vm236, %v3732, %v4030
      %4032 = vst [vmem:[%s233 + $0x14] sm:$0x1] %v4031
      %v4033 = vld [vmem:[%s233 + $0x18] sm:$0xf]
      %v4034 = vsel %vm287, %v3739, %v4033
      %4035 = vst [vmem:[%s233 + $0x18] sm:$0xf] %v4034
      %4036 = vst [vmem:[%s233 + $0x1c] sm:$0xf] %v3748
      %v4037 = vld [vmem:[%s233 + $0x20] sm:$0x1]
      %v4038 = vsel %vm236, %v3749, %v4037
      %4039 = vst [vmem:[%s233 + $0x20] sm:$0x1] %v4038
      %v4040 = vld [vmem:[%s233 + $0x24] sm:$0xf]
      %v4041 = vsel %vm287, %v3756, %v4040
      %4042 = vst [vmem:[%s233 + $0x24] sm:$0xf] %v4041
      %4043 = vst [vmem:[%s233 + $0x28] sm:$0xf] %v3765
      %v4044 = vld [vmem:[%s233 + $0x2c] sm:$0x1]
      %v4045 = vsel %vm236, %v3766, %v4044
      %4046 = vst [vmem:[%s233 + $0x2c] sm:$0x1] %v4045
      %v4047 = vld [vmem:[%s233 + $0x30] sm:$0xf]
      %v4048 = vsel %vm287, %v3773, %v4047
      %4049 = vst [vmem:[%s233 + $0x30] sm:$0xf] %v4048
      %4050 = vst [vmem:[%s233 + $0x34] sm:$0xf] %v3782
      %v4051 = vld [vmem:[%s233 + $0x38] sm:$0x1]
      %v4052 = vsel %vm236, %v3783, %v4051
      %4053 = vst [vmem:[%s233 + $0x38] sm:$0x1] %v4052
      %v4054 = vld [vmem:[%s233 + $0x3c] sm:$0xf]
      %v4055 = vsel %vm287, %v3790, %v4054
      %4056 = vst [vmem:[%s233 + $0x3c] sm:$0xf] %v4055
      %4057 = vst [vmem:[%s233 + $0x40] sm:$0xf] %v3799
      %v4058 = vld [vmem:[%s233 + $0x44] sm:$0x1]
      %v4059 = vsel %vm236, %v3800, %v4058
      %4060 = vst [vmem:[%s233 + $0x44] sm:$0x1] %v4059
      %v4061 = vld [vmem:[%s233 + $0x48] sm:$0xf]
      %v4062 = vsel %vm287, %v3807, %v4061
      %4063 = vst [vmem:[%s233 + $0x48] sm:$0xf] %v4062
      %4064 = vst [vmem:[%s233 + $0x4c] sm:$0xf] %v3816
      %v4065 = vld [vmem:[%s233 + $0x50] sm:$0x1]
      %v4066 = vsel %vm236, %v3817, %v4065
      %4067 = vst [vmem:[%s233 + $0x50] sm:$0x1] %v4066
      %v4068 = vld [vmem:[%s233 + $0x54] sm:$0xf]
      %v4069 = vsel %vm287, %v3824, %v4068
      %4070 = vst [vmem:[%s233 + $0x54] sm:$0xf] %v4069
      %4071 = vst [vmem:[%s233 + $0x58] sm:$0xf] %v3833
      %v4072 = vld [vmem:[%s233 + $0x5c] sm:$0x1]
      %v4073 = vsel %vm236, %v3834, %v4072
      %4074 = vst [vmem:[%s233 + $0x5c] sm:$0x1] %v4073
      %v4075 = vld [vmem:[%s233 + $0x60] sm:$0xf]
      %v4076 = vsel %vm287, %v3841, %v4075
      %4077 = vst [vmem:[%s233 + $0x60] sm:$0xf] %v4076
      %4078 = vst [vmem:[%s233 + $0x64] sm:$0xf] %v3850
      %v4079 = vld [vmem:[%s233 + $0x68] sm:$0x1]
      %v4080 = vsel %vm236, %v3851, %v4079
      %4081 = vst [vmem:[%s233 + $0x68] sm:$0x1] %v4080
      %v4082 = vld [vmem:[%s233 + $0x6c] sm:$0xf]
      %v4083 = vsel %vm287, %v3858, %v4082
      %4084 = vst [vmem:[%s233 + $0x6c] sm:$0xf] %v4083
      %4085 = vst [vmem:[%s233 + $0x70] sm:$0xf] %v3867
      %v4086 = vld [vmem:[%s233 + $0x74] sm:$0x1]
      %v4087 = vsel %vm236, %v3868, %v4086
      %4088 = vst [vmem:[%s233 + $0x74] sm:$0x1] %v4087
      %v4089 = vld [vmem:[%s233 + $0x78] sm:$0xf]
      %v4090 = vsel %vm287, %v3875, %v4089
      %4091 = vst [vmem:[%s233 + $0x78] sm:$0xf] %v4090
      %4092 = vst [vmem:[%s233 + $0x7c] sm:$0xf] %v3884
      %v4093 = vld [vmem:[%s233 + $0x80] sm:$0x1]
      %v4094 = vsel %vm236, %v3885, %v4093
      %4095 = vst [vmem:[%s233 + $0x80] sm:$0x1] %v4094
      %v4096 = vld [vmem:[%s233 + $0x84] sm:$0xf]
      %v4097 = vsel %vm287, %v3892, %v4096
      %4098 = vst [vmem:[%s233 + $0x84] sm:$0xf] %v4097
      %4099 = vst [vmem:[%s233 + $0x88] sm:$0xf] %v3901
      %v4100 = vld [vmem:[%s233 + $0x8c] sm:$0x1]
      %v4101 = vsel %vm236, %v3902, %v4100
      %4102 = vst [vmem:[%s233 + $0x8c] sm:$0x1] %v4101
      %v4103 = vld [vmem:[%s233 + $0x90] sm:$0xf]
      %v4104 = vsel %vm287, %v3909, %v4103
      %4105 = vst [vmem:[%s233 + $0x90] sm:$0xf] %v4104
      %4106 = vst [vmem:[%s233 + $0x94] sm:$0xf] %v3918
      %v4107 = vld [vmem:[%s233 + $0x98] sm:$0x1]
      %v4108 = vsel %vm236, %v3919, %v4107
      %4109 = vst [vmem:[%s233 + $0x98] sm:$0x1] %v4108
      %v4110 = vld [vmem:[%s233 + $0x9c] sm:$0xf]
      %v4111 = vsel %vm287, %v3926, %v4110
      %4112 = vst [vmem:[%s233 + $0x9c] sm:$0xf] %v4111
      %4113 = vst [vmem:[%s233 + $0xa0] sm:$0xf] %v3935
      %v4114 = vld [vmem:[%s233 + $0xa4] sm:$0x1]
      %v4115 = vsel %vm236, %v3936, %v4114
      %4116 = vst [vmem:[%s233 + $0xa4] sm:$0x1] %v4115
      %v4117 = vld [vmem:[%s233 + $0xa8] sm:$0xf]
      %v4118 = vsel %vm287, %v3943, %v4117
      %4119 = vst [vmem:[%s233 + $0xa8] sm:$0xf] %v4118
      %4120 = vst [vmem:[%s233 + $0xac] sm:$0xf] %v3952
      %v4121 = vld [vmem:[%s233 + $0xb0] sm:$0x1]
      %v4122 = vsel %vm236, %v3953, %v4121
      %4123 = vst [vmem:[%s233 + $0xb0] sm:$0x1] %v4122
      %v4124 = vld [vmem:[%s233 + $0xb4] sm:$0xf]
      %v4125 = vsel %vm287, %v3960, %v4124
      %4126 = vst [vmem:[%s233 + $0xb4] sm:$0xf] %v4125
      %4127 = vst [vmem:[%s233 + $0xb8] sm:$0xf] %v3969
      %v4128 = vld [vmem:[%s233 + $0xbc] sm:$0x1]
      %v4129 = vsel %vm236, %v3970, %v4128
      %4130 = vst [vmem:[%s233 + $0xbc] sm:$0x1] %v4129
      %v4131 = vld [vmem:[#allocation2] sm:$0xf]
      %v4132 = vld [vmem:[#allocation2 + $0x4] sm:$0xf]
      %v4133 = vld [vmem:[#allocation2 + $0xc] sm:$0xf]
      %v4134 = vld [vmem:[#allocation2 + $0x10] sm:$0xf]
      %v4135 = vld [vmem:[#allocation2 + $0x18] sm:$0xf]
      %v4136 = vld [vmem:[#allocation2 + $0x1c] sm:$0xf]
      %v4137 = vld [vmem:[#allocation2 + $0x24] sm:$0xf]
      %v4138 = vld [vmem:[#allocation2 + $0x28] sm:$0xf]
      %v4139 = vld [vmem:[#allocation2 + $0x30] sm:$0xf]
      %v4140 = vld [vmem:[#allocation2 + $0x34] sm:$0xf]
      %v4141 = vld [vmem:[#allocation2 + $0x3c] sm:$0xf]
      %v4142 = vld [vmem:[#allocation2 + $0x40] sm:$0xf]
      %v4143 = vld [vmem:[#allocation2 + $0x48] sm:$0xf]
      %v4144 = vld [vmem:[#allocation2 + $0x4c] sm:$0xf]
      %v4145 = vld [vmem:[#allocation2 + $0x54] sm:$0xf]
      %v4146 = vld [vmem:[#allocation2 + $0x58] sm:$0xf]
      %v4147 = vld [vmem:[#allocation2 + $0x60] sm:$0xf]
      %v4148 = vld [vmem:[#allocation2 + $0x64] sm:$0xf]
      %v4149 = vld [vmem:[#allocation2 + $0x6c] sm:$0xf]
      %v4150 = vld [vmem:[#allocation2 + $0x70] sm:$0xf]
      %v4151 = vld [vmem:[#allocation2 + $0x78] sm:$0xf]
      %v4152 = vld [vmem:[#allocation2 + $0x7c] sm:$0xf]
      %v4153 = vld [vmem:[#allocation2 + $0x84] sm:$0xf]
      %v4154 = vld [vmem:[#allocation2 + $0x88] sm:$0xf]
      %v4155 = vld [vmem:[#allocation2 + $0x90] sm:$0xf]
      %v4156 = vld [vmem:[#allocation2 + $0x94] sm:$0xf]
      %v4157 = vld [vmem:[#allocation2 + $0x9c] sm:$0xf]
      %v4158 = vld [vmem:[#allocation2 + $0xa0] sm:$0xf]
      %v4159 = vld [vmem:[#allocation2 + $0xa8] sm:$0xf]
      %v4160 = vld [vmem:[#allocation2 + $0xac] sm:$0xf]
      %v4161 = vld [vmem:[#allocation2 + $0xb4] sm:$0xf]
      %v4162 = vld [vmem:[#allocation2 + $0xb8] sm:$0xf]
      %4163 = vst [vmem:[#allocation3] sm:$0xf] %v4131
      %4164 = vst [vmem:[#allocation3 + $0x14] sm:$0xf] %v4132
      %4165 = vst [vmem:[#allocation3 + $0x28] sm:$0xf] %v4133
      %4166 = vst [vmem:[#allocation3 + $0x3c] sm:$0xf] %v4134
      %4167 = vst [vmem:[#allocation3 + $0x50] sm:$0xf] %v4135
      %4168 = vst [vmem:[#allocation3 + $0x64] sm:$0xf] %v4136
      %4169 = vst [vmem:[#allocation3 + $0x78] sm:$0xf] %v4137
      %4170 = vst [vmem:[#allocation3 + $0x8c] sm:$0xf] %v4138
      %4171 = vst [vmem:[#allocation3 + $0xa0] sm:$0xf] %v4139
      %4172 = vst [vmem:[#allocation3 + $0xb4] sm:$0xf] %v4140
      %4173 = vst [vmem:[#allocation3 + $0xc8] sm:$0xf] %v4141
      %4174 = vst [vmem:[#allocation3 + $0xdc] sm:$0xf] %v4142
      %4175 = vst [vmem:[#allocation3 + $0xf0] sm:$0xf] %v4143
      %4176 = vst [vmem:[#allocation3 + $0x104] sm:$0xf] %v4144
      %4177 = vst [vmem:[#allocation3 + $0x118] sm:$0xf] %v4145
      %4178 = vst [vmem:[#allocation3 + $0x12c] sm:$0xf] %v4146
      %4179 = vst [vmem:[#allocation3 + $0x140] sm:$0xf] %v4147
      %4180 = vst [vmem:[#allocation3 + $0x154] sm:$0xf] %v4148
      %4181 = vst [vmem:[#allocation3 + $0x168] sm:$0xf] %v4149
      %4182 = vst [vmem:[#allocation3 + $0x17c] sm:$0xf] %v4150
      %4183 = vst [vmem:[#allocation3 + $0x190] sm:$0xf] %v4151
      %4184 = vst [vmem:[#allocation3 + $0x1a4] sm:$0xf] %v4152
      %4185 = vst [vmem:[#allocation3 + $0x1b8] sm:$0xf] %v4153
      %4186 = vst [vmem:[#allocation3 + $0x1cc] sm:$0xf] %v4154
      %4187 = vst [vmem:[#allocation3 + $0x1e0] sm:$0xf] %v4155
      %4188 = vst [vmem:[#allocation3 + $0x1f4] sm:$0xf] %v4156
      %4189 = vst [vmem:[#allocation3 + $0x208] sm:$0xf] %v4157
      %4190 = vst [vmem:[#allocation3 + $0x21c] sm:$0xf] %v4158
      %4191 = vst [vmem:[#allocation3 + $0x230] sm:$0xf] %v4159
      %4192 = vst [vmem:[#allocation3 + $0x244] sm:$0xf] %v4160
      %4193 = vst [vmem:[#allocation3 + $0x258] sm:$0xf] %v4161
      %4194 = vst [vmem:[#allocation3 + $0x26c] sm:$0xf] %v4162
      %v4195 = vld [vmem:[#allocation2] sm:$0xf]
      %v4196 = vld [vmem:[#allocation2 + $0x4] sm:$0xf]
      %v4197 = vld [vmem:[#allocation2 + $0x8] sm:$0x1]
      %v4198 = vld [vmem:[#allocation2 + $0xc] sm:$0xf]
      %v4199 = vld [vmem:[#allocation2 + $0x10] sm:$0xf]
      %v4200 = vld [vmem:[#allocation2 + $0x14] sm:$0x1]
      %v4201 = vld [vmem:[#allocation2 + $0x18] sm:$0xf]
      %v4202 = vld [vmem:[#allocation2 + $0x1c] sm:$0xf]
      %v4203 = vld [vmem:[#allocation2 + $0x20] sm:$0x1]
      %v4204 = vld [vmem:[#allocation2 + $0x24] sm:$0xf]
      %v4205 = vld [vmem:[#allocation2 + $0x28] sm:$0xf]
      %v4206 = vld [vmem:[#allocation2 + $0x2c] sm:$0x1]
      %v4207 = vld [vmem:[#allocation2 + $0x30] sm:$0xf]
      %v4208 = vld [vmem:[#allocation2 + $0x34] sm:$0xf]
      %v4209 = vld [vmem:[#allocation2 + $0x38] sm:$0x1]
      %v4210 = vld [vmem:[#allocation2 + $0x3c] sm:$0xf]
      %v4211 = vld [vmem:[#allocation2 + $0x40] sm:$0xf]
      %v4212 = vld [vmem:[#allocation2 + $0x44] sm:$0x1]
      %v4213 = vld [vmem:[#allocation2 + $0x48] sm:$0xf]
      %v4214 = vld [vmem:[#allocation2 + $0x4c] sm:$0xf]
      %v4215 = vld [vmem:[#allocation2 + $0x50] sm:$0x1]
      %v4216 = vld [vmem:[#allocation2 + $0x54] sm:$0xf]
      %v4217 = vld [vmem:[#allocation2 + $0x58] sm:$0xf]
      %v4218 = vld [vmem:[#allocation2 + $0x5c] sm:$0x1]
      %v4219 = vld [vmem:[#allocation2 + $0x60] sm:$0xf]
      %v4220 = vld [vmem:[#allocation2 + $0x64] sm:$0xf]
      %v4221 = vld [vmem:[#allocation2 + $0x68] sm:$0x1]
      %v4222 = vld [vmem:[#allocation2 + $0x6c] sm:$0xf]
      %v4223 = vld [vmem:[#allocation2 + $0x70] sm:$0xf]
      %v4224 = vld [vmem:[#allocation2 + $0x74] sm:$0x1]
      %v4225 = vld [vmem:[#allocation2 + $0x78] sm:$0xf]
      %v4226 = vld [vmem:[#allocation2 + $0x7c] sm:$0xf]
      %v4227 = vld [vmem:[#allocation2 + $0x80] sm:$0x1]
      %v4228 = vld [vmem:[#allocation2 + $0x84] sm:$0xf]
      %v4229 = vld [vmem:[#allocation2 + $0x88] sm:$0xf]
      %v4230 = vld [vmem:[#allocation2 + $0x8c] sm:$0x1]
      %v4231 = vld [vmem:[#allocation2 + $0x90] sm:$0xf]
      %v4232 = vld [vmem:[#allocation2 + $0x94] sm:$0xf]
      %v4233 = vld [vmem:[#allocation2 + $0x98] sm:$0x1]
      %v4234 = vld [vmem:[#allocation2 + $0x9c] sm:$0xf]
      %v4235 = vld [vmem:[#allocation2 + $0xa0] sm:$0xf]
      %v4236 = vld [vmem:[#allocation2 + $0xa4] sm:$0x1]
      %v4237 = vld [vmem:[#allocation2 + $0xa8] sm:$0xf]
      %v4238 = vld [vmem:[#allocation2 + $0xac] sm:$0xf]
      %v4239 = vld [vmem:[#allocation2 + $0xb0] sm:$0x1]
      %v4240 = vld [vmem:[#allocation2 + $0xb4] sm:$0xf]
      %v4241 = vld [vmem:[#allocation2 + $0xb8] sm:$0xf]
      %v4242 = vld [vmem:[#allocation2 + $0xbc] sm:$0x1]
      %v4244 = vshrl.u32 %v4195, 16
      %v4246 = vrot.slane %v4244, 4
      %v4247 = vshll.u32 %v4195, 16
      %v4249 = vrot.slane %v4247, 5
      %v4250 = vor.u32 %v4246, %v4249
      %v4251 = vrot.slane %v4250, 4
      %v4253 = vshll.u32 %v4196, 16
      %v4255 = vrot.slane %v4253, 5
      %v4256 = vsel %vm1070, %v4251, %v4255
      %v4257 = vshrl.u32 %v4196, 16
      %v4259 = vrot.slane %v4257, 4
      %v4260 = vor.u32 %v4259, %v4255
      %v4261 = vrot.slane %v4260, 4
      %v4263 = vshll.u32 %v4197, 16
      %v4265 = vrot.slane %v4263, 5
      %v4266 = vsel %vm1070, %v4261, %v4265
      %v4268 = vshrl.u32 %v4198, 16
      %v4270 = vrot.slane %v4268, 4
      %v4271 = vshll.u32 %v4198, 16
      %v4273 = vrot.slane %v4271, 5
      %v4274 = vor.u32 %v4270, %v4273
      %v4275 = vrot.slane %v4274, 4
      %v4277 = vshll.u32 %v4199, 16
      %v4279 = vrot.slane %v4277, 5
      %v4280 = vsel %vm1070, %v4275, %v4279
      %v4281 = vshrl.u32 %v4199, 16
      %v4283 = vrot.slane %v4281, 4
      %v4284 = vor.u32 %v4283, %v4279
      %v4285 = vrot.slane %v4284, 4
      %v4287 = vshll.u32 %v4200, 16
      %v4289 = vrot.slane %v4287, 5
      %v4290 = vsel %vm1070, %v4285, %v4289
      %v4292 = vshrl.u32 %v4201, 16
      %v4294 = vrot.slane %v4292, 4
      %v4295 = vshll.u32 %v4201, 16
      %v4297 = vrot.slane %v4295, 5
      %v4298 = vor.u32 %v4294, %v4297
      %v4299 = vrot.slane %v4298, 4
      %v4301 = vshll.u32 %v4202, 16
      %v4303 = vrot.slane %v4301, 5
      %v4304 = vsel %vm1070, %v4299, %v4303
      %v4305 = vshrl.u32 %v4202, 16
      %v4307 = vrot.slane %v4305, 4
      %v4308 = vor.u32 %v4307, %v4303
      %v4309 = vrot.slane %v4308, 4
      %v4311 = vshll.u32 %v4203, 16
      %v4313 = vrot.slane %v4311, 5
      %v4314 = vsel %vm1070, %v4309, %v4313
      %v4316 = vshrl.u32 %v4204, 16
      %v4318 = vrot.slane %v4316, 4
      %v4319 = vshll.u32 %v4204, 16
      %v4321 = vrot.slane %v4319, 5
      %v4322 = vor.u32 %v4318, %v4321
      %v4323 = vrot.slane %v4322, 4
      %v4325 = vshll.u32 %v4205, 16
      %v4327 = vrot.slane %v4325, 5
      %v4328 = vsel %vm1070, %v4323, %v4327
      %v4329 = vshrl.u32 %v4205, 16
      %v4331 = vrot.slane %v4329, 4
      %v4332 = vor.u32 %v4331, %v4327
      %v4333 = vrot.slane %v4332, 4
      %v4335 = vshll.u32 %v4206, 16
      %v4337 = vrot.slane %v4335, 5
      %v4338 = vsel %vm1070, %v4333, %v4337
      %v4340 = vshrl.u32 %v4207, 16
      %v4342 = vrot.slane %v4340, 4
      %v4343 = vshll.u32 %v4207, 16
      %v4345 = vrot.slane %v4343, 5
      %v4346 = vor.u32 %v4342, %v4345
      %v4347 = vrot.slane %v4346, 4
      %v4349 = vshll.u32 %v4208, 16
      %v4351 = vrot.slane %v4349, 5
      %v4352 = vsel %vm1070, %v4347, %v4351
      %v4353 = vshrl.u32 %v4208, 16
      %v4355 = vrot.slane %v4353, 4
      %v4356 = vor.u32 %v4355, %v4351
      %v4357 = vrot.slane %v4356, 4
      %v4359 = vshll.u32 %v4209, 16
      %v4361 = vrot.slane %v4359, 5
      %v4362 = vsel %vm1070, %v4357, %v4361
      %v4364 = vshrl.u32 %v4210, 16
      %v4366 = vrot.slane %v4364, 4
      %v4367 = vshll.u32 %v4210, 16
      %v4369 = vrot.slane %v4367, 5
      %v4370 = vor.u32 %v4366, %v4369
      %v4371 = vrot.slane %v4370, 4
      %v4373 = vshll.u32 %v4211, 16
      %v4375 = vrot.slane %v4373, 5
      %v4376 = vsel %vm1070, %v4371, %v4375
      %v4377 = vshrl.u32 %v4211, 16
      %v4379 = vrot.slane %v4377, 4
      %v4380 = vor.u32 %v4379, %v4375
      %v4381 = vrot.slane %v4380, 4
      %v4383 = vshll.u32 %v4212, 16
      %v4385 = vrot.slane %v4383, 5
      %v4386 = vsel %vm1070, %v4381, %v4385
      %v4388 = vshrl.u32 %v4213, 16
      %v4390 = vrot.slane %v4388, 4
      %v4391 = vshll.u32 %v4213, 16
      %v4393 = vrot.slane %v4391, 5
      %v4394 = vor.u32 %v4390, %v4393
      %v4395 = vrot.slane %v4394, 4
      %v4397 = vshll.u32 %v4214, 16
      %v4399 = vrot.slane %v4397, 5
      %v4400 = vsel %vm1070, %v4395, %v4399
      %v4401 = vshrl.u32 %v4214, 16
      %v4403 = vrot.slane %v4401, 4
      %v4404 = vor.u32 %v4403, %v4399
      %v4405 = vrot.slane %v4404, 4
      %v4407 = vshll.u32 %v4215, 16
      %v4409 = vrot.slane %v4407, 5
      %v4410 = vsel %vm1070, %v4405, %v4409
      %v4412 = vshrl.u32 %v4216, 16
      %v4414 = vrot.slane %v4412, 4
      %v4415 = vshll.u32 %v4216, 16
      %v4417 = vrot.slane %v4415, 5
      %v4418 = vor.u32 %v4414, %v4417
      %v4419 = vrot.slane %v4418, 4
      %v4421 = vshll.u32 %v4217, 16
      %v4423 = vrot.slane %v4421, 5
      %v4424 = vsel %vm1070, %v4419, %v4423
      %v4425 = vshrl.u32 %v4217, 16
      %v4427 = vrot.slane %v4425, 4
      %v4428 = vor.u32 %v4427, %v4423
      %v4429 = vrot.slane %v4428, 4
      %v4431 = vshll.u32 %v4218, 16
      %v4433 = vrot.slane %v4431, 5
      %v4434 = vsel %vm1070, %v4429, %v4433
      %v4436 = vshrl.u32 %v4219, 16
      %v4438 = vrot.slane %v4436, 4
      %v4439 = vshll.u32 %v4219, 16
      %v4441 = vrot.slane %v4439, 5
      %v4442 = vor.u32 %v4438, %v4441
      %v4443 = vrot.slane %v4442, 4
      %v4445 = vshll.u32 %v4220, 16
      %v4447 = vrot.slane %v4445, 5
      %v4448 = vsel %vm1070, %v4443, %v4447
      %v4449 = vshrl.u32 %v4220, 16
      %v4451 = vrot.slane %v4449, 4
      %v4452 = vor.u32 %v4451, %v4447
      %v4453 = vrot.slane %v4452, 4
      %v4455 = vshll.u32 %v4221, 16
      %v4457 = vrot.slane %v4455, 5
      %v4458 = vsel %vm1070, %v4453, %v4457
      %v4460 = vshrl.u32 %v4222, 16
      %v4462 = vrot.slane %v4460, 4
      %v4463 = vshll.u32 %v4222, 16
      %v4465 = vrot.slane %v4463, 5
      %v4466 = vor.u32 %v4462, %v4465
      %v4467 = vrot.slane %v4466, 4
      %v4469 = vshll.u32 %v4223, 16
      %v4471 = vrot.slane %v4469, 5
      %v4472 = vsel %vm1070, %v4467, %v4471
      %v4473 = vshrl.u32 %v4223, 16
      %v4475 = vrot.slane %v4473, 4
      %v4476 = vor.u32 %v4475, %v4471
      %v4477 = vrot.slane %v4476, 4
      %v4479 = vshll.u32 %v4224, 16
      %v4481 = vrot.slane %v4479, 5
      %v4482 = vsel %vm1070, %v4477, %v4481
      %v4484 = vshrl.u32 %v4225, 16
      %v4486 = vrot.slane %v4484, 4
      %v4487 = vshll.u32 %v4225, 16
      %v4489 = vrot.slane %v4487, 5
      %v4490 = vor.u32 %v4486, %v4489
      %v4491 = vrot.slane %v4490, 4
      %v4493 = vshll.u32 %v4226, 16
      %v4495 = vrot.slane %v4493, 5
      %v4496 = vsel %vm1070, %v4491, %v4495
      %v4497 = vshrl.u32 %v4226, 16
      %v4499 = vrot.slane %v4497, 4
      %v4500 = vor.u32 %v4499, %v4495
      %v4501 = vrot.slane %v4500, 4
      %v4503 = vshll.u32 %v4227, 16
      %v4505 = vrot.slane %v4503, 5
      %v4506 = vsel %vm1070, %v4501, %v4505
      %v4508 = vshrl.u32 %v4228, 16
      %v4510 = vrot.slane %v4508, 4
      %v4511 = vshll.u32 %v4228, 16
      %v4513 = vrot.slane %v4511, 5
      %v4514 = vor.u32 %v4510, %v4513
      %v4515 = vrot.slane %v4514, 4
      %v4517 = vshll.u32 %v4229, 16
      %v4519 = vrot.slane %v4517, 5
      %v4520 = vsel %vm1070, %v4515, %v4519
      %v4521 = vshrl.u32 %v4229, 16
      %v4523 = vrot.slane %v4521, 4
      %v4524 = vor.u32 %v4523, %v4519
      %v4525 = vrot.slane %v4524, 4
      %v4527 = vshll.u32 %v4230, 16
      %v4529 = vrot.slane %v4527, 5
      %v4530 = vsel %vm1070, %v4525, %v4529
      %v4532 = vshrl.u32 %v4231, 16
      %v4534 = vrot.slane %v4532, 4
      %v4535 = vshll.u32 %v4231, 16
      %v4537 = vrot.slane %v4535, 5
      %v4538 = vor.u32 %v4534, %v4537
      %v4539 = vrot.slane %v4538, 4
      %v4541 = vshll.u32 %v4232, 16
      %v4543 = vrot.slane %v4541, 5
      %v4544 = vsel %vm1070, %v4539, %v4543
      %v4545 = vshrl.u32 %v4232, 16
      %v4547 = vrot.slane %v4545, 4
      %v4548 = vor.u32 %v4547, %v4543
      %v4549 = vrot.slane %v4548, 4
      %v4551 = vshll.u32 %v4233, 16
      %v4553 = vrot.slane %v4551, 5
      %v4554 = vsel %vm1070, %v4549, %v4553
      %v4556 = vshrl.u32 %v4234, 16
      %v4558 = vrot.slane %v4556, 4
      %v4559 = vshll.u32 %v4234, 16
      %v4561 = vrot.slane %v4559, 5
      %v4562 = vor.u32 %v4558, %v4561
      %v4563 = vrot.slane %v4562, 4
      %v4565 = vshll.u32 %v4235, 16
      %v4567 = vrot.slane %v4565, 5
      %v4568 = vsel %vm1070, %v4563, %v4567
      %v4569 = vshrl.u32 %v4235, 16
      %v4571 = vrot.slane %v4569, 4
      %v4572 = vor.u32 %v4571, %v4567
      %v4573 = vrot.slane %v4572, 4
      %v4575 = vshll.u32 %v4236, 16
      %v4577 = vrot.slane %v4575, 5
      %v4578 = vsel %vm1070, %v4573, %v4577
      %v4580 = vshrl.u32 %v4237, 16
      %v4582 = vrot.slane %v4580, 4
      %v4583 = vshll.u32 %v4237, 16
      %v4585 = vrot.slane %v4583, 5
      %v4586 = vor.u32 %v4582, %v4585
      %v4587 = vrot.slane %v4586, 4
      %v4589 = vshll.u32 %v4238, 16
      %v4591 = vrot.slane %v4589, 5
      %v4592 = vsel %vm1070, %v4587, %v4591
      %v4593 = vshrl.u32 %v4238, 16
      %v4595 = vrot.slane %v4593, 4
      %v4596 = vor.u32 %v4595, %v4591
      %v4597 = vrot.slane %v4596, 4
      %v4599 = vshll.u32 %v4239, 16
      %v4601 = vrot.slane %v4599, 5
      %v4602 = vsel %vm1070, %v4597, %v4601
      %v4604 = vshrl.u32 %v4240, 16
      %v4606 = vrot.slane %v4604, 4
      %v4607 = vshll.u32 %v4240, 16
      %v4609 = vrot.slane %v4607, 5
      %v4610 = vor.u32 %v4606, %v4609
      %v4611 = vrot.slane %v4610, 4
      %v4613 = vshll.u32 %v4241, 16
      %v4615 = vrot.slane %v4613, 5
      %v4616 = vsel %vm1070, %v4611, %v4615
      %v4617 = vshrl.u32 %v4241, 16
      %v4619 = vrot.slane %v4617, 4
      %v4620 = vor.u32 %v4619, %v4615
      %v4621 = vrot.slane %v4620, 4
      %v4623 = vshll.u32 %v4242, 16
      %v4625 = vrot.slane %v4623, 5
      %v4626 = vsel %vm1070, %v4621, %v4625
      %4659 = vst [vmem:[#allocation3 + $0x4] sm:$0xf] %v4256
      %4660 = vst [vmem:[#allocation3 + $0x18] sm:$0xf] %v4266
      %4661 = vst [vmem:[#allocation3 + $0x2c] sm:$0xf] %v4280
      %4662 = vst [vmem:[#allocation3 + $0x40] sm:$0xf] %v4290
      %4663 = vst [vmem:[#allocation3 + $0x54] sm:$0xf] %v4304
      %4664 = vst [vmem:[#allocation3 + $0x68] sm:$0xf] %v4314
      %4665 = vst [vmem:[#allocation3 + $0x7c] sm:$0xf] %v4328
      %4666 = vst [vmem:[#allocation3 + $0x90] sm:$0xf] %v4338
      %4667 = vst [vmem:[#allocation3 + $0xa4] sm:$0xf] %v4352
      %4668 = vst [vmem:[#allocation3 + $0xb8] sm:$0xf] %v4362
      %4669 = vst [vmem:[#allocation3 + $0xcc] sm:$0xf] %v4376
      %4670 = vst [vmem:[#allocation3 + $0xe0] sm:$0xf] %v4386
      %4671 = vst [vmem:[#allocation3 + $0xf4] sm:$0xf] %v4400
      %4672 = vst [vmem:[#allocation3 + $0x108] sm:$0xf] %v4410
      %4673 = vst [vmem:[#allocation3 + $0x11c] sm:$0xf] %v4424
      %4674 = vst [vmem:[#allocation3 + $0x130] sm:$0xf] %v4434
      %4675 = vst [vmem:[#allocation3 + $0x144] sm:$0xf] %v4448
      %4676 = vst [vmem:[#allocation3 + $0x158] sm:$0xf] %v4458
      %4677 = vst [vmem:[#allocation3 + $0x16c] sm:$0xf] %v4472
      %4678 = vst [vmem:[#allocation3 + $0x180] sm:$0xf] %v4482
      %4679 = vst [vmem:[#allocation3 + $0x194] sm:$0xf] %v4496
      %4680 = vst [vmem:[#allocation3 + $0x1a8] sm:$0xf] %v4506
      %4681 = vst [vmem:[#allocation3 + $0x1bc] sm:$0xf] %v4520
      %4682 = vst [vmem:[#allocation3 + $0x1d0] sm:$0xf] %v4530
      %4683 = vst [vmem:[#allocation3 + $0x1e4] sm:$0xf] %v4544
      %4684 = vst [vmem:[#allocation3 + $0x1f8] sm:$0xf] %v4554
      %4685 = vst [vmem:[#allocation3 + $0x20c] sm:$0xf] %v4568
      %4686 = vst [vmem:[#allocation3 + $0x220] sm:$0xf] %v4578
      %4687 = vst [vmem:[#allocation3 + $0x234] sm:$0xf] %v4592
      %4688 = vst [vmem:[#allocation3 + $0x248] sm:$0xf] %v4602
      %4689 = vst [vmem:[#allocation3 + $0x25c] sm:$0xf] %v4616
      %4690 = vst [vmem:[#allocation3 + $0x270] sm:$0xf] %v4626
      %v4691 = vld [vmem:[#allocation2] sm:$0xe]
      %v4692 = vld [vmem:[#allocation2 + $0x4] sm:$0xf]
      %v4693 = vld [vmem:[#allocation2 + $0x8] sm:$0x1]
      %v4694 = vld [vmem:[#allocation2 + $0xc] sm:$0xe]
      %v4695 = vld [vmem:[#allocation2 + $0x10] sm:$0xf]
      %v4696 = vld [vmem:[#allocation2 + $0x14] sm:$0x1]
      %v4697 = vld [vmem:[#allocation2 + $0x18] sm:$0xe]
      %v4698 = vld [vmem:[#allocation2 + $0x1c] sm:$0xf]
      %v4699 = vld [vmem:[#allocation2 + $0x20] sm:$0x1]
      %v4700 = vld [vmem:[#allocation2 + $0x24] sm:$0xe]
      %v4701 = vld [vmem:[#allocation2 + $0x28] sm:$0xf]
      %v4702 = vld [vmem:[#allocation2 + $0x2c] sm:$0x1]
      %v4703 = vld [vmem:[#allocation2 + $0x30] sm:$0xe]
      %v4704 = vld [vmem:[#allocation2 + $0x34] sm:$0xf]
      %v4705 = vld [vmem:[#allocation2 + $0x38] sm:$0x1]
      %v4706 = vld [vmem:[#allocation2 + $0x3c] sm:$0xe]
      %v4707 = vld [vmem:[#allocation2 + $0x40] sm:$0xf]
      %v4708 = vld [vmem:[#allocation2 + $0x44] sm:$0x1]
      %v4709 = vld [vmem:[#allocation2 + $0x48] sm:$0xe]
      %v4710 = vld [vmem:[#allocation2 + $0x4c] sm:$0xf]
      %v4711 = vld [vmem:[#allocation2 + $0x50] sm:$0x1]
      %v4712 = vld [vmem:[#allocation2 + $0x54] sm:$0xe]
      %v4713 = vld [vmem:[#allocation2 + $0x58] sm:$0xf]
      %v4714 = vld [vmem:[#allocation2 + $0x5c] sm:$0x1]
      %v4715 = vld [vmem:[#allocation2 + $0x60] sm:$0xe]
      %v4716 = vld [vmem:[#allocation2 + $0x64] sm:$0xf]
      %v4717 = vld [vmem:[#allocation2 + $0x68] sm:$0x1]
      %v4718 = vld [vmem:[#allocation2 + $0x6c] sm:$0xe]
      %v4719 = vld [vmem:[#allocation2 + $0x70] sm:$0xf]
      %v4720 = vld [vmem:[#allocation2 + $0x74] sm:$0x1]
      %v4721 = vld [vmem:[#allocation2 + $0x78] sm:$0xe]
      %v4722 = vld [vmem:[#allocation2 + $0x7c] sm:$0xf]
      %v4723 = vld [vmem:[#allocation2 + $0x80] sm:$0x1]
      %v4724 = vld [vmem:[#allocation2 + $0x84] sm:$0xe]
      %v4725 = vld [vmem:[#allocation2 + $0x88] sm:$0xf]
      %v4726 = vld [vmem:[#allocation2 + $0x8c] sm:$0x1]
      %v4727 = vld [vmem:[#allocation2 + $0x90] sm:$0xe]
      %v4728 = vld [vmem:[#allocation2 + $0x94] sm:$0xf]
      %v4729 = vld [vmem:[#allocation2 + $0x98] sm:$0x1]
      %v4730 = vld [vmem:[#allocation2 + $0x9c] sm:$0xe]
      %v4731 = vld [vmem:[#allocation2 + $0xa0] sm:$0xf]
      %v4732 = vld [vmem:[#allocation2 + $0xa4] sm:$0x1]
      %v4733 = vld [vmem:[#allocation2 + $0xa8] sm:$0xe]
      %v4734 = vld [vmem:[#allocation2 + $0xac] sm:$0xf]
      %v4735 = vld [vmem:[#allocation2 + $0xb0] sm:$0x1]
      %v4736 = vld [vmem:[#allocation2 + $0xb4] sm:$0xe]
      %v4737 = vld [vmem:[#allocation2 + $0xb8] sm:$0xf]
      %v4738 = vld [vmem:[#allocation2 + $0xbc] sm:$0x1]
      %v4787 = vrot.slane %v4691, 5
      %v4788 = vrot.slane %v4787, 4
      %v4789 = vrot.slane %v4692, 5
      %v4790 = vsel %vm1617, %v4788, %v4789
      %v4791 = vrot.slane %v4789, 4
      %v4792 = vrot.slane %v4693, 5
      %v4793 = vsel %vm1617, %v4791, %v4792
      %v4794 = vrot.slane %v4694, 5
      %v4795 = vrot.slane %v4794, 4
      %v4796 = vrot.slane %v4695, 5
      %v4797 = vsel %vm1617, %v4795, %v4796
      %v4798 = vrot.slane %v4796, 4
      %v4799 = vrot.slane %v4696, 5
      %v4800 = vsel %vm1617, %v4798, %v4799
      %v4801 = vrot.slane %v4697, 5
      %v4802 = vrot.slane %v4801, 4
      %v4803 = vrot.slane %v4698, 5
      %v4804 = vsel %vm1617, %v4802, %v4803
      %v4805 = vrot.slane %v4803, 4
      %v4806 = vrot.slane %v4699, 5
      %v4807 = vsel %vm1617, %v4805, %v4806
      %v4808 = vrot.slane %v4700, 5
      %v4809 = vrot.slane %v4808, 4
      %v4810 = vrot.slane %v4701, 5
      %v4811 = vsel %vm1617, %v4809, %v4810
      %v4812 = vrot.slane %v4810, 4
      %v4813 = vrot.slane %v4702, 5
      %v4814 = vsel %vm1617, %v4812, %v4813
      %v4815 = vrot.slane %v4703, 5
      %v4816 = vrot.slane %v4815, 4
      %v4817 = vrot.slane %v4704, 5
      %v4818 = vsel %vm1617, %v4816, %v4817
      %v4819 = vrot.slane %v4817, 4
      %v4820 = vrot.slane %v4705, 5
      %v4821 = vsel %vm1617, %v4819, %v4820
      %v4822 = vrot.slane %v4706, 5
      %v4823 = vrot.slane %v4822, 4
      %v4824 = vrot.slane %v4707, 5
      %v4825 = vsel %vm1617, %v4823, %v4824
      %v4826 = vrot.slane %v4824, 4
      %v4827 = vrot.slane %v4708, 5
      %v4828 = vsel %vm1617, %v4826, %v4827
      %v4829 = vrot.slane %v4709, 5
      %v4830 = vrot.slane %v4829, 4
      %v4831 = vrot.slane %v4710, 5
      %v4832 = vsel %vm1617, %v4830, %v4831
      %v4833 = vrot.slane %v4831, 4
      %v4834 = vrot.slane %v4711, 5
      %v4835 = vsel %vm1617, %v4833, %v4834
      %v4836 = vrot.slane %v4712, 5
      %v4837 = vrot.slane %v4836, 4
      %v4838 = vrot.slane %v4713, 5
      %v4839 = vsel %vm1617, %v4837, %v4838
      %v4840 = vrot.slane %v4838, 4
      %v4841 = vrot.slane %v4714, 5
      %v4842 = vsel %vm1617, %v4840, %v4841
      %v4843 = vrot.slane %v4715, 5
      %v4844 = vrot.slane %v4843, 4
      %v4845 = vrot.slane %v4716, 5
      %v4846 = vsel %vm1617, %v4844, %v4845
      %v4847 = vrot.slane %v4845, 4
      %v4848 = vrot.slane %v4717, 5
      %v4849 = vsel %vm1617, %v4847, %v4848
      %v4850 = vrot.slane %v4718, 5
      %v4851 = vrot.slane %v4850, 4
      %v4852 = vrot.slane %v4719, 5
      %v4853 = vsel %vm1617, %v4851, %v4852
      %v4854 = vrot.slane %v4852, 4
      %v4855 = vrot.slane %v4720, 5
      %v4856 = vsel %vm1617, %v4854, %v4855
      %v4857 = vrot.slane %v4721, 5
      %v4858 = vrot.slane %v4857, 4
      %v4859 = vrot.slane %v4722, 5
      %v4860 = vsel %vm1617, %v4858, %v4859
      %v4861 = vrot.slane %v4859, 4
      %v4862 = vrot.slane %v4723, 5
      %v4863 = vsel %vm1617, %v4861, %v4862
      %v4864 = vrot.slane %v4724, 5
      %v4865 = vrot.slane %v4864, 4
      %v4866 = vrot.slane %v4725, 5
      %v4867 = vsel %vm1617, %v4865, %v4866
      %v4868 = vrot.slane %v4866, 4
      %v4869 = vrot.slane %v4726, 5
      %v4870 = vsel %vm1617, %v4868, %v4869
      %v4871 = vrot.slane %v4727, 5
      %v4872 = vrot.slane %v4871, 4
      %v4873 = vrot.slane %v4728, 5
      %v4874 = vsel %vm1617, %v4872, %v4873
      %v4875 = vrot.slane %v4873, 4
      %v4876 = vrot.slane %v4729, 5
      %v4877 = vsel %vm1617, %v4875, %v4876
      %v4878 = vrot.slane %v4730, 5
      %v4879 = vrot.slane %v4878, 4
      %v4880 = vrot.slane %v4731, 5
      %v4881 = vsel %vm1617, %v4879, %v4880
      %v4882 = vrot.slane %v4880, 4
      %v4883 = vrot.slane %v4732, 5
      %v4884 = vsel %vm1617, %v4882, %v4883
      %v4885 = vrot.slane %v4733, 5
      %v4886 = vrot.slane %v4885, 4
      %v4887 = vrot.slane %v4734, 5
      %v4888 = vsel %vm1617, %v4886, %v4887
      %v4889 = vrot.slane %v4887, 4
      %v4890 = vrot.slane %v4735, 5
      %v4891 = vsel %vm1617, %v4889, %v4890
      %v4892 = vrot.slane %v4736, 5
      %v4893 = vrot.slane %v4892, 4
      %v4894 = vrot.slane %v4737, 5
      %v4895 = vsel %vm1617, %v4893, %v4894
      %v4896 = vrot.slane %v4894, 4
      %v4897 = vrot.slane %v4738, 5
      %v4898 = vsel %vm1617, %v4896, %v4897
      %4931 = vst [vmem:[#allocation3 + $0x8] sm:$0xf] %v4790
      %4932 = vst [vmem:[#allocation3 + $0x1c] sm:$0xf] %v4793
      %4933 = vst [vmem:[#allocation3 + $0x30] sm:$0xf] %v4797
      %4934 = vst [vmem:[#allocation3 + $0x44] sm:$0xf] %v4800
      %4935 = vst [vmem:[#allocation3 + $0x58] sm:$0xf] %v4804
      %4936 = vst [vmem:[#allocation3 + $0x6c] sm:$0xf] %v4807
      %4937 = vst [vmem:[#allocation3 + $0x80] sm:$0xf] %v4811
      %4938 = vst [vmem:[#allocation3 + $0x94] sm:$0xf] %v4814
      %4939 = vst [vmem:[#allocation3 + $0xa8] sm:$0xf] %v4818
      %4940 = vst [vmem:[#allocation3 + $0xbc] sm:$0xf] %v4821
      %4941 = vst [vmem:[#allocation3 + $0xd0] sm:$0xf] %v4825
      %4942 = vst [vmem:[#allocation3 + $0xe4] sm:$0xf] %v4828
      %4943 = vst [vmem:[#allocation3 + $0xf8] sm:$0xf] %v4832
      %4944 = vst [vmem:[#allocation3 + $0x10c] sm:$0xf] %v4835
      %4945 = vst [vmem:[#allocation3 + $0x120] sm:$0xf] %v4839
      %4946 = vst [vmem:[#allocation3 + $0x134] sm:$0xf] %v4842
      %4947 = vst [vmem:[#allocation3 + $0x148] sm:$0xf] %v4846
      %4948 = vst [vmem:[#allocation3 + $0x15c] sm:$0xf] %v4849
      %4949 = vst [vmem:[#allocation3 + $0x170] sm:$0xf] %v4853
      %4950 = vst [vmem:[#allocation3 + $0x184] sm:$0xf] %v4856
      %4951 = vst [vmem:[#allocation3 + $0x198] sm:$0xf] %v4860
      %4952 = vst [vmem:[#allocation3 + $0x1ac] sm:$0xf] %v4863
      %4953 = vst [vmem:[#allocation3 + $0x1c0] sm:$0xf] %v4867
      %4954 = vst [vmem:[#allocation3 + $0x1d4] sm:$0xf] %v4870
      %4955 = vst [vmem:[#allocation3 + $0x1e8] sm:$0xf] %v4874
      %4956 = vst [vmem:[#allocation3 + $0x1fc] sm:$0xf] %v4877
      %4957 = vst [vmem:[#allocation3 + $0x210] sm:$0xf] %v4881
      %4958 = vst [vmem:[#allocation3 + $0x224] sm:$0xf] %v4884
      %4959 = vst [vmem:[#allocation3 + $0x238] sm:$0xf] %v4888
      %4960 = vst [vmem:[#allocation3 + $0x24c] sm:$0xf] %v4891
      %4961 = vst [vmem:[#allocation3 + $0x260] sm:$0xf] %v4895
      %4962 = vst [vmem:[#allocation3 + $0x274] sm:$0xf] %v4898
      %v4963 = vld [vmem:[%s233] sm:$0xf]
      %v4964 = vld [vmem:[%s233 + $0x4] sm:$0xf]
      %v4965 = vld [vmem:[%s233 + $0xc] sm:$0xf]
      %v4966 = vld [vmem:[%s233 + $0x10] sm:$0xf]
      %v4967 = vld [vmem:[%s233 + $0x18] sm:$0xf]
      %v4968 = vld [vmem:[%s233 + $0x1c] sm:$0xf]
      %v4969 = vld [vmem:[%s233 + $0x24] sm:$0xf]
      %v4970 = vld [vmem:[%s233 + $0x28] sm:$0xf]
      %v4971 = vld [vmem:[%s233 + $0x30] sm:$0xf]
      %v4972 = vld [vmem:[%s233 + $0x34] sm:$0xf]
      %v4973 = vld [vmem:[%s233 + $0x3c] sm:$0xf]
      %v4974 = vld [vmem:[%s233 + $0x40] sm:$0xf]
      %v4975 = vld [vmem:[%s233 + $0x48] sm:$0xf]
      %v4976 = vld [vmem:[%s233 + $0x4c] sm:$0xf]
      %v4977 = vld [vmem:[%s233 + $0x54] sm:$0xf]
      %v4978 = vld [vmem:[%s233 + $0x58] sm:$0xf]
      %v4979 = vld [vmem:[%s233 + $0x60] sm:$0xf]
      %v4980 = vld [vmem:[%s233 + $0x64] sm:$0xf]
      %v4981 = vld [vmem:[%s233 + $0x6c] sm:$0xf]
      %v4982 = vld [vmem:[%s233 + $0x70] sm:$0xf]
      %v4983 = vld [vmem:[%s233 + $0x78] sm:$0xf]
      %v4984 = vld [vmem:[%s233 + $0x7c] sm:$0xf]
      %v4985 = vld [vmem:[%s233 + $0x84] sm:$0xf]
      %v4986 = vld [vmem:[%s233 + $0x88] sm:$0xf]
      %v4987 = vld [vmem:[%s233 + $0x90] sm:$0xf]
      %v4988 = vld [vmem:[%s233 + $0x94] sm:$0xf]
      %v4989 = vld [vmem:[%s233 + $0x9c] sm:$0xf]
      %v4990 = vld [vmem:[%s233 + $0xa0] sm:$0xf]
      %v4991 = vld [vmem:[%s233 + $0xa8] sm:$0xf]
      %v4992 = vld [vmem:[%s233 + $0xac] sm:$0xf]
      %v4993 = vld [vmem:[%s233 + $0xb4] sm:$0xf]
      %v4994 = vld [vmem:[%s233 + $0xb8] sm:$0xf]
      %4995 = vst [vmem:[#allocation3 + $0xc] sm:$0xf] %v4963
      %4996 = vst [vmem:[#allocation3 + $0x20] sm:$0xf] %v4964
      %4997 = vst [vmem:[#allocation3 + $0x34] sm:$0xf] %v4965
      %4998 = vst [vmem:[#allocation3 + $0x48] sm:$0xf] %v4966
      %4999 = vst [vmem:[#allocation3 + $0x5c] sm:$0xf] %v4967
      %5000 = vst [vmem:[#allocation3 + $0x70] sm:$0xf] %v4968
      %5001 = vst [vmem:[#allocation3 + $0x84] sm:$0xf] %v4969
      %5002 = vst [vmem:[#allocation3 + $0x98] sm:$0xf] %v4970
      %5003 = vst [vmem:[#allocation3 + $0xac] sm:$0xf] %v4971
      %5004 = vst [vmem:[#allocation3 + $0xc0] sm:$0xf] %v4972
      %5005 = vst [vmem:[#allocation3 + $0xd4] sm:$0xf] %v4973
      %5006 = vst [vmem:[#allocation3 + $0xe8] sm:$0xf] %v4974
      %5007 = vst [vmem:[#allocation3 + $0xfc] sm:$0xf] %v4975
      %5008 = vst [vmem:[#allocation3 + $0x110] sm:$0xf] %v4976
      %5009 = vst [vmem:[#allocation3 + $0x124] sm:$0xf] %v4977
      %5010 = vst [vmem:[#allocation3 + $0x138] sm:$0xf] %v4978
      %5011 = vst [vmem:[#allocation3 + $0x14c] sm:$0xf] %v4979
      %5012 = vst [vmem:[#allocation3 + $0x160] sm:$0xf] %v4980
      %5013 = vst [vmem:[#allocation3 + $0x174] sm:$0xf] %v4981
      %5014 = vst [vmem:[#allocation3 + $0x188] sm:$0xf] %v4982
      %5015 = vst [vmem:[#allocation3 + $0x19c] sm:$0xf] %v4983
      %5016 = vst [vmem:[#allocation3 + $0x1b0] sm:$0xf] %v4984
      %5017 = vst [vmem:[#allocation3 + $0x1c4] sm:$0xf] %v4985
      %5018 = vst [vmem:[#allocation3 + $0x1d8] sm:$0xf] %v4986
      %5019 = vst [vmem:[#allocation3 + $0x1ec] sm:$0xf] %v4987
      %5020 = vst [vmem:[#allocation3 + $0x200] sm:$0xf] %v4988
      %5021 = vst [vmem:[#allocation3 + $0x214] sm:$0xf] %v4989
      %5022 = vst [vmem:[#allocation3 + $0x228] sm:$0xf] %v4990
      %5023 = vst [vmem:[#allocation3 + $0x23c] sm:$0xf] %v4991
      %5024 = vst [vmem:[#allocation3 + $0x250] sm:$0xf] %v4992
      %5025 = vst [vmem:[#allocation3 + $0x264] sm:$0xf] %v4993
      %5026 = vst [vmem:[#allocation3 + $0x278] sm:$0xf] %v4994
      %v5027 = vld [vmem:[%s233] sm:$0xf]
      %v5028 = vld [vmem:[%s233 + $0x4] sm:$0xf]
      %v5029 = vld [vmem:[%s233 + $0x8] sm:$0x1]
      %v5030 = vld [vmem:[%s233 + $0xc] sm:$0xf]
      %v5031 = vld [vmem:[%s233 + $0x10] sm:$0xf]
      %v5032 = vld [vmem:[%s233 + $0x14] sm:$0x1]
      %v5033 = vld [vmem:[%s233 + $0x18] sm:$0xf]
      %v5034 = vld [vmem:[%s233 + $0x1c] sm:$0xf]
      %v5035 = vld [vmem:[%s233 + $0x20] sm:$0x1]
      %v5036 = vld [vmem:[%s233 + $0x24] sm:$0xf]
      %v5037 = vld [vmem:[%s233 + $0x28] sm:$0xf]
      %v5038 = vld [vmem:[%s233 + $0x2c] sm:$0x1]
      %v5039 = vld [vmem:[%s233 + $0x30] sm:$0xf]
      %v5040 = vld [vmem:[%s233 + $0x34] sm:$0xf]
      %v5041 = vld [vmem:[%s233 + $0x38] sm:$0x1]
      %v5042 = vld [vmem:[%s233 + $0x3c] sm:$0xf]
      %v5043 = vld [vmem:[%s233 + $0x40] sm:$0xf]
      %v5044 = vld [vmem:[%s233 + $0x44] sm:$0x1]
      %v5045 = vld [vmem:[%s233 + $0x48] sm:$0xf]
      %v5046 = vld [vmem:[%s233 + $0x4c] sm:$0xf]
      %v5047 = vld [vmem:[%s233 + $0x50] sm:$0x1]
      %v5048 = vld [vmem:[%s233 + $0x54] sm:$0xf]
      %v5049 = vld [vmem:[%s233 + $0x58] sm:$0xf]
      %v5050 = vld [vmem:[%s233 + $0x5c] sm:$0x1]
      %v5051 = vld [vmem:[%s233 + $0x60] sm:$0xf]
      %v5052 = vld [vmem:[%s233 + $0x64] sm:$0xf]
      %v5053 = vld [vmem:[%s233 + $0x68] sm:$0x1]
      %v5054 = vld [vmem:[%s233 + $0x6c] sm:$0xf]
      %v5055 = vld [vmem:[%s233 + $0x70] sm:$0xf]
      %v5056 = vld [vmem:[%s233 + $0x74] sm:$0x1]
      %v5057 = vld [vmem:[%s233 + $0x78] sm:$0xf]
      %v5058 = vld [vmem:[%s233 + $0x7c] sm:$0xf]
      %v5059 = vld [vmem:[%s233 + $0x80] sm:$0x1]
      %v5060 = vld [vmem:[%s233 + $0x84] sm:$0xf]
      %v5061 = vld [vmem:[%s233 + $0x88] sm:$0xf]
      %v5062 = vld [vmem:[%s233 + $0x8c] sm:$0x1]
      %v5063 = vld [vmem:[%s233 + $0x90] sm:$0xf]
      %v5064 = vld [vmem:[%s233 + $0x94] sm:$0xf]
      %v5065 = vld [vmem:[%s233 + $0x98] sm:$0x1]
      %v5066 = vld [vmem:[%s233 + $0x9c] sm:$0xf]
      %v5067 = vld [vmem:[%s233 + $0xa0] sm:$0xf]
      %v5068 = vld [vmem:[%s233 + $0xa4] sm:$0x1]
      %v5069 = vld [vmem:[%s233 + $0xa8] sm:$0xf]
      %v5070 = vld [vmem:[%s233 + $0xac] sm:$0xf]
      %v5071 = vld [vmem:[%s233 + $0xb0] sm:$0x1]
      %v5072 = vld [vmem:[%s233 + $0xb4] sm:$0xf]
      %v5073 = vld [vmem:[%s233 + $0xb8] sm:$0xf]
      %v5074 = vld [vmem:[%s233 + $0xbc] sm:$0x1]
      %v5076 = vshrl.u32 %v5027, 16
      %v5078 = vrot.slane %v5076, 4
      %v5079 = vshll.u32 %v5027, 16
      %v5081 = vrot.slane %v5079, 5
      %v5082 = vor.u32 %v5078, %v5081
      %v5083 = vrot.slane %v5082, 4
      %v5085 = vshll.u32 %v5028, 16
      %v5087 = vrot.slane %v5085, 5
      %v5088 = vsel %vm1070, %v5083, %v5087
      %v5089 = vshrl.u32 %v5028, 16
      %v5091 = vrot.slane %v5089, 4
      %v5092 = vor.u32 %v5091, %v5087
      %v5093 = vrot.slane %v5092, 4
      %v5095 = vshll.u32 %v5029, 16
      %v5097 = vrot.slane %v5095, 5
      %v5098 = vsel %vm1070, %v5093, %v5097
      %v5100 = vshrl.u32 %v5030, 16
      %v5102 = vrot.slane %v5100, 4
      %v5103 = vshll.u32 %v5030, 16
      %v5105 = vrot.slane %v5103, 5
      %v5106 = vor.u32 %v5102, %v5105
      %v5107 = vrot.slane %v5106, 4
      %v5109 = vshll.u32 %v5031, 16
      %v5111 = vrot.slane %v5109, 5
      %v5112 = vsel %vm1070, %v5107, %v5111
      %v5113 = vshrl.u32 %v5031, 16
      %v5115 = vrot.slane %v5113, 4
      %v5116 = vor.u32 %v5115, %v5111
      %v5117 = vrot.slane %v5116, 4
      %v5119 = vshll.u32 %v5032, 16
      %v5121 = vrot.slane %v5119, 5
      %v5122 = vsel %vm1070, %v5117, %v5121
      %v5124 = vshrl.u32 %v5033, 16
      %v5126 = vrot.slane %v5124, 4
      %v5127 = vshll.u32 %v5033, 16
      %v5129 = vrot.slane %v5127, 5
      %v5130 = vor.u32 %v5126, %v5129
      %v5131 = vrot.slane %v5130, 4
      %v5133 = vshll.u32 %v5034, 16
      %v5135 = vrot.slane %v5133, 5
      %v5136 = vsel %vm1070, %v5131, %v5135
      %v5137 = vshrl.u32 %v5034, 16
      %v5139 = vrot.slane %v5137, 4
      %v5140 = vor.u32 %v5139, %v5135
      %v5141 = vrot.slane %v5140, 4
      %v5143 = vshll.u32 %v5035, 16
      %v5145 = vrot.slane %v5143, 5
      %v5146 = vsel %vm1070, %v5141, %v5145
      %v5148 = vshrl.u32 %v5036, 16
      %v5150 = vrot.slane %v5148, 4
      %v5151 = vshll.u32 %v5036, 16
      %v5153 = vrot.slane %v5151, 5
      %v5154 = vor.u32 %v5150, %v5153
      %v5155 = vrot.slane %v5154, 4
      %v5157 = vshll.u32 %v5037, 16
      %v5159 = vrot.slane %v5157, 5
      %v5160 = vsel %vm1070, %v5155, %v5159
      %v5161 = vshrl.u32 %v5037, 16
      %v5163 = vrot.slane %v5161, 4
      %v5164 = vor.u32 %v5163, %v5159
      %v5165 = vrot.slane %v5164, 4
      %v5167 = vshll.u32 %v5038, 16
      %v5169 = vrot.slane %v5167, 5
      %v5170 = vsel %vm1070, %v5165, %v5169
      %v5172 = vshrl.u32 %v5039, 16
      %v5174 = vrot.slane %v5172, 4
      %v5175 = vshll.u32 %v5039, 16
      %v5177 = vrot.slane %v5175, 5
      %v5178 = vor.u32 %v5174, %v5177
      %v5179 = vrot.slane %v5178, 4
      %v5181 = vshll.u32 %v5040, 16
      %v5183 = vrot.slane %v5181, 5
      %v5184 = vsel %vm1070, %v5179, %v5183
      %v5185 = vshrl.u32 %v5040, 16
      %v5187 = vrot.slane %v5185, 4
      %v5188 = vor.u32 %v5187, %v5183
      %v5189 = vrot.slane %v5188, 4
      %v5191 = vshll.u32 %v5041, 16
      %v5193 = vrot.slane %v5191, 5
      %v5194 = vsel %vm1070, %v5189, %v5193
      %v5196 = vshrl.u32 %v5042, 16
      %v5198 = vrot.slane %v5196, 4
      %v5199 = vshll.u32 %v5042, 16
      %v5201 = vrot.slane %v5199, 5
      %v5202 = vor.u32 %v5198, %v5201
      %v5203 = vrot.slane %v5202, 4
      %v5205 = vshll.u32 %v5043, 16
      %v5207 = vrot.slane %v5205, 5
      %v5208 = vsel %vm1070, %v5203, %v5207
      %v5209 = vshrl.u32 %v5043, 16
      %v5211 = vrot.slane %v5209, 4
      %v5212 = vor.u32 %v5211, %v5207
      %v5213 = vrot.slane %v5212, 4
      %v5215 = vshll.u32 %v5044, 16
      %v5217 = vrot.slane %v5215, 5
      %v5218 = vsel %vm1070, %v5213, %v5217
      %v5220 = vshrl.u32 %v5045, 16
      %v5222 = vrot.slane %v5220, 4
      %v5223 = vshll.u32 %v5045, 16
      %v5225 = vrot.slane %v5223, 5
      %v5226 = vor.u32 %v5222, %v5225
      %v5227 = vrot.slane %v5226, 4
      %v5229 = vshll.u32 %v5046, 16
      %v5231 = vrot.slane %v5229, 5
      %v5232 = vsel %vm1070, %v5227, %v5231
      %v5233 = vshrl.u32 %v5046, 16
      %v5235 = vrot.slane %v5233, 4
      %v5236 = vor.u32 %v5235, %v5231
      %v5237 = vrot.slane %v5236, 4
      %v5239 = vshll.u32 %v5047, 16
      %v5241 = vrot.slane %v5239, 5
      %v5242 = vsel %vm1070, %v5237, %v5241
      %v5244 = vshrl.u32 %v5048, 16
      %v5246 = vrot.slane %v5244, 4
      %v5247 = vshll.u32 %v5048, 16
      %v5249 = vrot.slane %v5247, 5
      %v5250 = vor.u32 %v5246, %v5249
      %v5251 = vrot.slane %v5250, 4
      %v5253 = vshll.u32 %v5049, 16
      %v5255 = vrot.slane %v5253, 5
      %v5256 = vsel %vm1070, %v5251, %v5255
      %v5257 = vshrl.u32 %v5049, 16
      %v5259 = vrot.slane %v5257, 4
      %v5260 = vor.u32 %v5259, %v5255
      %v5261 = vrot.slane %v5260, 4
      %v5263 = vshll.u32 %v5050, 16
      %v5265 = vrot.slane %v5263, 5
      %v5266 = vsel %vm1070, %v5261, %v5265
      %v5268 = vshrl.u32 %v5051, 16
      %v5270 = vrot.slane %v5268, 4
      %v5271 = vshll.u32 %v5051, 16
      %v5273 = vrot.slane %v5271, 5
      %v5274 = vor.u32 %v5270, %v5273
      %v5275 = vrot.slane %v5274, 4
      %v5277 = vshll.u32 %v5052, 16
      %v5279 = vrot.slane %v5277, 5
      %v5280 = vsel %vm1070, %v5275, %v5279
      %v5281 = vshrl.u32 %v5052, 16
      %v5283 = vrot.slane %v5281, 4
      %v5284 = vor.u32 %v5283, %v5279
      %v5285 = vrot.slane %v5284, 4
      %v5287 = vshll.u32 %v5053, 16
      %v5289 = vrot.slane %v5287, 5
      %v5290 = vsel %vm1070, %v5285, %v5289
      %v5292 = vshrl.u32 %v5054, 16
      %v5294 = vrot.slane %v5292, 4
      %v5295 = vshll.u32 %v5054, 16
      %v5297 = vrot.slane %v5295, 5
      %v5298 = vor.u32 %v5294, %v5297
      %v5299 = vrot.slane %v5298, 4
      %v5301 = vshll.u32 %v5055, 16
      %v5303 = vrot.slane %v5301, 5
      %v5304 = vsel %vm1070, %v5299, %v5303
      %v5305 = vshrl.u32 %v5055, 16
      %v5307 = vrot.slane %v5305, 4
      %v5308 = vor.u32 %v5307, %v5303
      %v5309 = vrot.slane %v5308, 4
      %v5311 = vshll.u32 %v5056, 16
      %v5313 = vrot.slane %v5311, 5
      %v5314 = vsel %vm1070, %v5309, %v5313
      %v5316 = vshrl.u32 %v5057, 16
      %v5318 = vrot.slane %v5316, 4
      %v5319 = vshll.u32 %v5057, 16
      %v5321 = vrot.slane %v5319, 5
      %v5322 = vor.u32 %v5318, %v5321
      %v5323 = vrot.slane %v5322, 4
      %v5325 = vshll.u32 %v5058, 16
      %v5327 = vrot.slane %v5325, 5
      %v5328 = vsel %vm1070, %v5323, %v5327
      %v5329 = vshrl.u32 %v5058, 16
      %v5331 = vrot.slane %v5329, 4
      %v5332 = vor.u32 %v5331, %v5327
      %v5333 = vrot.slane %v5332, 4
      %v5335 = vshll.u32 %v5059, 16
      %v5337 = vrot.slane %v5335, 5
      %v5338 = vsel %vm1070, %v5333, %v5337
      %v5340 = vshrl.u32 %v5060, 16
      %v5342 = vrot.slane %v5340, 4
      %v5343 = vshll.u32 %v5060, 16
      %v5345 = vrot.slane %v5343, 5
      %v5346 = vor.u32 %v5342, %v5345
      %v5347 = vrot.slane %v5346, 4
      %v5349 = vshll.u32 %v5061, 16
      %v5351 = vrot.slane %v5349, 5
      %v5352 = vsel %vm1070, %v5347, %v5351
      %v5353 = vshrl.u32 %v5061, 16
      %v5355 = vrot.slane %v5353, 4
      %v5356 = vor.u32 %v5355, %v5351
      %v5357 = vrot.slane %v5356, 4
      %v5359 = vshll.u32 %v5062, 16
      %v5361 = vrot.slane %v5359, 5
      %v5362 = vsel %vm1070, %v5357, %v5361
      %v5364 = vshrl.u32 %v5063, 16
      %v5366 = vrot.slane %v5364, 4
      %v5367 = vshll.u32 %v5063, 16
      %v5369 = vrot.slane %v5367, 5
      %v5370 = vor.u32 %v5366, %v5369
      %v5371 = vrot.slane %v5370, 4
      %v5373 = vshll.u32 %v5064, 16
      %v5375 = vrot.slane %v5373, 5
      %v5376 = vsel %vm1070, %v5371, %v5375
      %v5377 = vshrl.u32 %v5064, 16
      %v5379 = vrot.slane %v5377, 4
      %v5380 = vor.u32 %v5379, %v5375
      %v5381 = vrot.slane %v5380, 4
      %v5383 = vshll.u32 %v5065, 16
      %v5385 = vrot.slane %v5383, 5
      %v5386 = vsel %vm1070, %v5381, %v5385
      %v5388 = vshrl.u32 %v5066, 16
      %v5390 = vrot.slane %v5388, 4
      %v5391 = vshll.u32 %v5066, 16
      %v5393 = vrot.slane %v5391, 5
      %v5394 = vor.u32 %v5390, %v5393
      %v5395 = vrot.slane %v5394, 4
      %v5397 = vshll.u32 %v5067, 16
      %v5399 = vrot.slane %v5397, 5
      %v5400 = vsel %vm1070, %v5395, %v5399
      %v5401 = vshrl.u32 %v5067, 16
      %v5403 = vrot.slane %v5401, 4
      %v5404 = vor.u32 %v5403, %v5399
      %v5405 = vrot.slane %v5404, 4
      %v5407 = vshll.u32 %v5068, 16
      %v5409 = vrot.slane %v5407, 5
      %v5410 = vsel %vm1070, %v5405, %v5409
      %v5412 = vshrl.u32 %v5069, 16
      %v5414 = vrot.slane %v5412, 4
      %v5415 = vshll.u32 %v5069, 16
      %v5417 = vrot.slane %v5415, 5
      %v5418 = vor.u32 %v5414, %v5417
      %v5419 = vrot.slane %v5418, 4
      %v5421 = vshll.u32 %v5070, 16
      %v5423 = vrot.slane %v5421, 5
      %v5424 = vsel %vm1070, %v5419, %v5423
      %v5425 = vshrl.u32 %v5070, 16
      %v5427 = vrot.slane %v5425, 4
      %v5428 = vor.u32 %v5427, %v5423
      %v5429 = vrot.slane %v5428, 4
      %v5431 = vshll.u32 %v5071, 16
      %v5433 = vrot.slane %v5431, 5
      %v5434 = vsel %vm1070, %v5429, %v5433
      %v5436 = vshrl.u32 %v5072, 16
      %v5438 = vrot.slane %v5436, 4
      %v5439 = vshll.u32 %v5072, 16
      %v5441 = vrot.slane %v5439, 5
      %v5442 = vor.u32 %v5438, %v5441
      %v5443 = vrot.slane %v5442, 4
      %v5445 = vshll.u32 %v5073, 16
      %v5447 = vrot.slane %v5445, 5
      %v5448 = vsel %vm1070, %v5443, %v5447
      %v5449 = vshrl.u32 %v5073, 16
      %v5451 = vrot.slane %v5449, 4
      %v5452 = vor.u32 %v5451, %v5447
      %v5453 = vrot.slane %v5452, 4
      %v5455 = vshll.u32 %v5074, 16
      %v5457 = vrot.slane %v5455, 5
      %v5458 = vsel %vm1070, %v5453, %v5457
      %5491 = vst [vmem:[#allocation3 + $0x10] sm:$0xf] %v5088
      %5492 = vst [vmem:[#allocation3 + $0x24] sm:$0xf] %v5098
      %5493 = vst [vmem:[#allocation3 + $0x38] sm:$0xf] %v5112
      %5494 = vst [vmem:[#allocation3 + $0x4c] sm:$0xf] %v5122
      %5495 = vst [vmem:[#allocation3 + $0x60] sm:$0xf] %v5136
      %5496 = vst [vmem:[#allocation3 + $0x74] sm:$0xf] %v5146
      %5497 = vst [vmem:[#allocation3 + $0x88] sm:$0xf] %v5160
      %5498 = vst [vmem:[#allocation3 + $0x9c] sm:$0xf] %v5170
      %5499 = vst [vmem:[#allocation3 + $0xb0] sm:$0xf] %v5184
      %5500 = vst [vmem:[#allocation3 + $0xc4] sm:$0xf] %v5194
      %5501 = vst [vmem:[#allocation3 + $0xd8] sm:$0xf] %v5208
      %5502 = vst [vmem:[#allocation3 + $0xec] sm:$0xf] %v5218
      %5503 = vst [vmem:[#allocation3 + $0x100] sm:$0xf] %v5232
      %5504 = vst [vmem:[#allocation3 + $0x114] sm:$0xf] %v5242
      %5505 = vst [vmem:[#allocation3 + $0x128] sm:$0xf] %v5256
      %5506 = vst [vmem:[#allocation3 + $0x13c] sm:$0xf] %v5266
      %5507 = vst [vmem:[#allocation3 + $0x150] sm:$0xf] %v5280
      %5508 = vst [vmem:[#allocation3 + $0x164] sm:$0xf] %v5290
      %5509 = vst [vmem:[#allocation3 + $0x178] sm:$0xf] %v5304
      %5510 = vst [vmem:[#allocation3 + $0x18c] sm:$0xf] %v5314
      %5511 = vst [vmem:[#allocation3 + $0x1a0] sm:$0xf] %v5328
      %5512 = vst [vmem:[#allocation3 + $0x1b4] sm:$0xf] %v5338
      %5513 = vst [vmem:[#allocation3 + $0x1c8] sm:$0xf] %v5352
      %5514 = vst [vmem:[#allocation3 + $0x1dc] sm:$0xf] %v5362
      %5515 = vst [vmem:[#allocation3 + $0x1f0] sm:$0xf] %v5376
      %5516 = vst [vmem:[#allocation3 + $0x204] sm:$0xf] %v5386
      %5517 = vst [vmem:[#allocation3 + $0x218] sm:$0xf] %v5400
      %5518 = vst [vmem:[#allocation3 + $0x22c] sm:$0xf] %v5410
      %5519 = vst [vmem:[#allocation3 + $0x240] sm:$0xf] %v5424
      %5520 = vst [vmem:[#allocation3 + $0x254] sm:$0xf] %v5434
      %5521 = vst [vmem:[#allocation3 + $0x268] sm:$0xf] %v5448
      %5522 = vst [vmem:[#allocation3 + $0x27c] sm:$0xf] %v5458
      %v5523 = vld [vmem:[#allocation3] sm:$0xff]
      %v5524 = vld [vmem:[#allocation3 + $0x8] sm:$0xff]
      %v5525 = vld [vmem:[#allocation3 + $0x10] sm:$0xf]
      %v5526 = vld [vmem:[#allocation3 + $0x14] sm:$0xff]
      %v5527 = vld [vmem:[#allocation3 + $0x1c] sm:$0xff]
      %v5528 = vld [vmem:[#allocation3 + $0x24] sm:$0xf]
      %v5529 = vld [vmem:[#allocation3 + $0x28] sm:$0xff]
      %v5530 = vld [vmem:[#allocation3 + $0x30] sm:$0xff]
      %v5531 = vld [vmem:[#allocation3 + $0x38] sm:$0xf]
      %v5532 = vld [vmem:[#allocation3 + $0x3c] sm:$0xff]
      %v5533 = vld [vmem:[#allocation3 + $0x44] sm:$0xff]
      %v5534 = vld [vmem:[#allocation3 + $0x4c] sm:$0xf]
      %v5535 = vld [vmem:[#allocation3 + $0x50] sm:$0xff]
      %v5536 = vld [vmem:[#allocation3 + $0x58] sm:$0xff]
      %v5537 = vld [vmem:[#allocation3 + $0x60] sm:$0xf]
      %v5538 = vld [vmem:[#allocation3 + $0x64] sm:$0xff]
      %v5539 = vld [vmem:[#allocation3 + $0x6c] sm:$0xff]
      %v5540 = vld [vmem:[#allocation3 + $0x74] sm:$0xf]
      %v5541 = vld [vmem:[#allocation3 + $0x78] sm:$0xff]
      %v5542 = vld [vmem:[#allocation3 + $0x80] sm:$0xff]
      %v5543 = vld [vmem:[#allocation3 + $0x88] sm:$0xf]
      %v5544 = vld [vmem:[#allocation3 + $0x8c] sm:$0xff]
      %v5545 = vld [vmem:[#allocation3 + $0x94] sm:$0xff]
      %v5546 = vld [vmem:[#allocation3 + $0x9c] sm:$0xf]
      %v5547 = vld [vmem:[#allocation3 + $0xa0] sm:$0xff]
      %v5548 = vld [vmem:[#allocation3 + $0xa8] sm:$0xff]
      %v5549 = vld [vmem:[#allocation3 + $0xb0] sm:$0xf]
      %v5550 = vld [vmem:[#allocation3 + $0xb4] sm:$0xff]
      %v5551 = vld [vmem:[#allocation3 + $0xbc] sm:$0xff]
      %v5552 = vld [vmem:[#allocation3 + $0xc4] sm:$0xf]
      %v5553 = vld [vmem:[#allocation3 + $0xc8] sm:$0xff]
      %v5554 = vld [vmem:[#allocation3 + $0xd0] sm:$0xff]
      %v5555 = vld [vmem:[#allocation3 + $0xd8] sm:$0xf]
      %v5556 = vld [vmem:[#allocation3 + $0xdc] sm:$0xff]
      %v5557 = vld [vmem:[#allocation3 + $0xe4] sm:$0xff]
      %v5558 = vld [vmem:[#allocation3 + $0xec] sm:$0xf]
      %v5559 = vld [vmem:[#allocation3 + $0xf0] sm:$0xff]
      %v5560 = vld [vmem:[#allocation3 + $0xf8] sm:$0xff]
      %v5561 = vld [vmem:[#allocation3 + $0x100] sm:$0xf]
      %v5562 = vld [vmem:[#allocation3 + $0x104] sm:$0xff]
      %v5563 = vld [vmem:[#allocation3 + $0x10c] sm:$0xff]
      %v5564 = vld [vmem:[#allocation3 + $0x114] sm:$0xf]
      %v5565 = vld [vmem:[#allocation3 + $0x118] sm:$0xff]
      %v5566 = vld [vmem:[#allocation3 + $0x120] sm:$0xff]
      %v5567 = vld [vmem:[#allocation3 + $0x128] sm:$0xf]
      %v5568 = vld [vmem:[#allocation3 + $0x12c] sm:$0xff]
      %v5569 = vld [vmem:[#allocation3 + $0x134] sm:$0xff]
      %v5570 = vld [vmem:[#allocation3 + $0x13c] sm:$0xf]
      %v5571 = vld [vmem:[#allocation3 + $0x140] sm:$0xff]
      %v5572 = vld [vmem:[#allocation3 + $0x148] sm:$0xff]
      %v5573 = vld [vmem:[#allocation3 + $0x150] sm:$0xf]
      %v5574 = vld [vmem:[#allocation3 + $0x154] sm:$0xff]
      %v5575 = vld [vmem:[#allocation3 + $0x15c] sm:$0xff]
      %v5576 = vld [vmem:[#allocation3 + $0x164] sm:$0xf]
      %v5577 = vld [vmem:[#allocation3 + $0x168] sm:$0xff]
      %v5578 = vld [vmem:[#allocation3 + $0x170] sm:$0xff]
      %v5579 = vld [vmem:[#allocation3 + $0x178] sm:$0xf]
      %v5580 = vld [vmem:[#allocation3 + $0x17c] sm:$0xff]
      %v5581 = vld [vmem:[#allocation3 + $0x184] sm:$0xff]
      %v5582 = vld [vmem:[#allocation3 + $0x18c] sm:$0xf]
      %v5583 = vld [vmem:[#allocation3 + $0x190] sm:$0xff]
      %v5584 = vld [vmem:[#allocation3 + $0x198] sm:$0xff]
      %v5585 = vld [vmem:[#allocation3 + $0x1a0] sm:$0xf]
      %v5586 = vld [vmem:[#allocation3 + $0x1a4] sm:$0xff]
      %v5587 = vld [vmem:[#allocation3 + $0x1ac] sm:$0xff]
      %v5588 = vld [vmem:[#allocation3 + $0x1b4] sm:$0xf]
      %v5589 = vld [vmem:[#allocation3 + $0x1b8] sm:$0xff]
      %v5590 = vld [vmem:[#allocation3 + $0x1c0] sm:$0xff]
      %v5591 = vld [vmem:[#allocation3 + $0x1c8] sm:$0xf]
      %v5592 = vld [vmem:[#allocation3 + $0x1cc] sm:$0xff]
      %v5593 = vld [vmem:[#allocation3 + $0x1d4] sm:$0xff]
      %v5594 = vld [vmem:[#allocation3 + $0x1dc] sm:$0xf]
      %v5595 = vld [vmem:[#allocation3 + $0x1e0] sm:$0xff]
      %v5596 = vld [vmem:[#allocation3 + $0x1e8] sm:$0xff]
      %v5597 = vld [vmem:[#allocation3 + $0x1f0] sm:$0xf]
      %v5598 = vld [vmem:[#allocation3 + $0x1f4] sm:$0xff]
      %v5599 = vld [vmem:[#allocation3 + $0x1fc] sm:$0xff]
      %v5600 = vld [vmem:[#allocation3 + $0x204] sm:$0xf]
      %v5601 = vld [vmem:[#allocation3 + $0x208] sm:$0xff]
      %v5602 = vld [vmem:[#allocation3 + $0x210] sm:$0xff]
      %v5603 = vld [vmem:[#allocation3 + $0x218] sm:$0xf]
      %v5604 = vld [vmem:[#allocation3 + $0x21c] sm:$0xff]
      %v5605 = vld [vmem:[#allocation3 + $0x224] sm:$0xff]
      %v5606 = vld [vmem:[#allocation3 + $0x22c] sm:$0xf]
      %v5607 = vld [vmem:[#allocation3 + $0x230] sm:$0xff]
      %v5608 = vld [vmem:[#allocation3 + $0x238] sm:$0xff]
      %v5609 = vld [vmem:[#allocation3 + $0x240] sm:$0xf]
      %v5610 = vld [vmem:[#allocation3 + $0x244] sm:$0xff]
      %v5611 = vld [vmem:[#allocation3 + $0x24c] sm:$0xff]
      %v5612 = vld [vmem:[#allocation3 + $0x254] sm:$0xf]
      %v5613 = vld [vmem:[#allocation3 + $0x258] sm:$0xff]
      %v5614 = vld [vmem:[#allocation3 + $0x260] sm:$0xff]
      %v5615 = vld [vmem:[#allocation3 + $0x268] sm:$0xf]
      %v5616 = vld [vmem:[#allocation3 + $0x26c] sm:$0xff]
      %v5617 = vld [vmem:[#allocation3 + $0x274] sm:$0xff]
      %v5618 = vld [vmem:[#allocation3 + $0x27c] sm:$0xf]
      %v5619 = vld [vmem:[%s3] sm:$0xf]
      %v5620 = vld [vmem:[%s3 + $0x4] sm:$0xf]
      %v5621 = vld [vmem:[%s3 + $0x8] sm:$0xf]
      %v5622 = vld [vmem:[%s3 + $0xc] sm:$0xf]
      %v5623 = vld [vmem:[%s3 + $0x10] sm:$0xf]
      %v5624 = vld [vmem:[%s3 + $0x14] sm:$0xf]
      %v5625 = vld [vmem:[%s3 + $0x18] sm:$0xf]
      %v5626 = vld [vmem:[%s3 + $0x1c] sm:$0xf]
      %v5627 = vld [vmem:[%s3 + $0x20] sm:$0xf]
      %v5628 = vld [vmem:[%s3 + $0x24] sm:$0xf]
      %v5629 = vld [vmem:[%s3 + $0x28] sm:$0xf]
      %v5630 = vld [vmem:[%s3 + $0x2c] sm:$0xf]
      %v5631 = vld [vmem:[%s3 + $0x30] sm:$0xf]
      %v5632 = vld [vmem:[%s3 + $0x34] sm:$0xf]
      %v5633 = vld [vmem:[%s3 + $0x38] sm:$0xf]
      %v5634 = vld [vmem:[%s3 + $0x3c] sm:$0xf]
      %v5635 = vld [vmem:[%s3 + $0x40] sm:$0xf]
      %v5636 = vld [vmem:[%s3 + $0x44] sm:$0xf]
      %v5637 = vld [vmem:[%s3 + $0x48] sm:$0xf]
      %v5638 = vld [vmem:[%s3 + $0x4c] sm:$0xf]
      %v5639 = vld [vmem:[%s3 + $0x50] sm:$0xf]
      %v5640 = vld [vmem:[%s3 + $0x54] sm:$0xf]
      %v5641 = vld [vmem:[%s3 + $0x58] sm:$0xf]
      %v5642 = vld [vmem:[%s3 + $0x5c] sm:$0xf]
      %v5643 = vld [vmem:[%s3 + $0x60] sm:$0xf]
      %v5644 = vld [vmem:[%s3 + $0x64] sm:$0xf]
      %v5645 = vld [vmem:[%s3 + $0x68] sm:$0xf]
      %v5646 = vld [vmem:[%s3 + $0x6c] sm:$0xf]
      %v5647 = vld [vmem:[%s3 + $0x70] sm:$0xf]
      %v5648 = vld [vmem:[%s3 + $0x74] sm:$0xf]
      %v5649 = vld [vmem:[%s3 + $0x78] sm:$0xf]
      %v5650 = vld [vmem:[%s3 + $0x7c] sm:$0xf]
      %v5651 = vld [vmem:[%s3 + $0x80] sm:$0xf]
      %v5652 = vld [vmem:[%s3 + $0x84] sm:$0xf]
      %v5653 = vld [vmem:[%s3 + $0x88] sm:$0xf]
      %v5654 = vld [vmem:[%s3 + $0x8c] sm:$0xf]
      %v5655 = vld [vmem:[%s3 + $0x90] sm:$0xf]
      %v5656 = vld [vmem:[%s3 + $0x94] sm:$0xf]
      %v5657 = vld [vmem:[%s3 + $0x98] sm:$0xf]
      %v5658 = vld [vmem:[%s3 + $0x9c] sm:$0xf]
      %v5659 = vld [vmem:[%s3 + $0xa0] sm:$0xf]
      %v5660 = vld [vmem:[%s3 + $0xa4] sm:$0xf]
      %v5661 = vld [vmem:[%s3 + $0xa8] sm:$0xf]
      %v5662 = vld [vmem:[%s3 + $0xac] sm:$0xf]
      %v5663 = vld [vmem:[%s3 + $0xb0] sm:$0xf]
      %v5664 = vld [vmem:[%s3 + $0xb4] sm:$0xf]
      %v5665 = vld [vmem:[%s3 + $0xb8] sm:$0xf]
      %v5666 = vld [vmem:[%s3 + $0xbc] sm:$0xf]
      %v5667 = vld [vmem:[%s3 + $0xc0] sm:$0xf]
      %v5668 = vld [vmem:[%s3 + $0xc4] sm:$0xf]
      %v5669 = vld [vmem:[%s3 + $0xc8] sm:$0xf]
      %v5670 = vld [vmem:[%s3 + $0xcc] sm:$0xf]
      %v5671 = vld [vmem:[%s3 + $0xd0] sm:$0xf]
      %v5672 = vld [vmem:[%s3 + $0xd4] sm:$0xf]
      %v5673 = vld [vmem:[%s3 + $0xd8] sm:$0xf]
      %v5674 = vld [vmem:[%s3 + $0xdc] sm:$0xf]
      %v5675 = vld [vmem:[%s3 + $0xe0] sm:$0xf]
      %v5676 = vld [vmem:[%s3 + $0xe4] sm:$0xf]
      %v5677 = vld [vmem:[%s3 + $0xe8] sm:$0xf]
      %v5678 = vld [vmem:[%s3 + $0xec] sm:$0xf]
      %v5679 = vld [vmem:[%s3 + $0xf0] sm:$0xf]
      %v5680 = vld [vmem:[%s3 + $0xf4] sm:$0xf]
      %v5681 = vld [vmem:[%s3 + $0xf8] sm:$0xf]
      %v5682 = vld [vmem:[%s3 + $0xfc] sm:$0xf]
      %v5683 = vld [vmem:[%s3 + $0x100] sm:$0xf]
      %v5684 = vld [vmem:[%s3 + $0x104] sm:$0xf]
      %v5685 = vld [vmem:[%s3 + $0x108] sm:$0xf]
      %v5686 = vld [vmem:[%s3 + $0x10c] sm:$0xf]
      %v5687 = vld [vmem:[%s3 + $0x110] sm:$0xf]
      %v5688 = vld [vmem:[%s3 + $0x114] sm:$0xf]
      %v5689 = vld [vmem:[%s3 + $0x118] sm:$0xf]
      %v5690 = vld [vmem:[%s3 + $0x11c] sm:$0xf]
      %v5691 = vld [vmem:[%s3 + $0x120] sm:$0xf]
      %v5692 = vld [vmem:[%s3 + $0x124] sm:$0xf]
      %v5693 = vld [vmem:[%s3 + $0x128] sm:$0xf]
      %v5694 = vld [vmem:[%s3 + $0x12c] sm:$0xf]
      %v5695 = vld [vmem:[%s3 + $0x130] sm:$0xf]
      %v5696 = vld [vmem:[%s3 + $0x134] sm:$0xf]
      %v5697 = vld [vmem:[%s3 + $0x138] sm:$0xf]
      %v5698 = vld [vmem:[%s3 + $0x13c] sm:$0xf]
      %v5699 = vld [vmem:[%s4] sm:$0x1]
      %v5701 = vperm.slane %v5699, 0
      %v5799 = vunpack.c.l.b16 %v5523
      %v5800 = vunpack.c.h.b16 %v5523
      %v5801 = vunpack.c.l.b16 %v5524
      %v5802 = vunpack.c.h.b16 %v5524
      %v5803 = vunpack.c.l.b16 %v5525
      %v5804 = vunpack.c.l.b16 %v5526
      %v5805 = vunpack.c.h.b16 %v5526
      %v5806 = vunpack.c.l.b16 %v5527
      %v5807 = vunpack.c.h.b16 %v5527
      %v5808 = vunpack.c.l.b16 %v5528
      %v5809 = vunpack.c.l.b16 %v5529
      %v5810 = vunpack.c.h.b16 %v5529
      %v5811 = vunpack.c.l.b16 %v5530
      %v5812 = vunpack.c.h.b16 %v5530
      %v5813 = vunpack.c.l.b16 %v5531
      %v5814 = vunpack.c.l.b16 %v5532
      %v5815 = vunpack.c.h.b16 %v5532
      %v5816 = vunpack.c.l.b16 %v5533
      %v5817 = vunpack.c.h.b16 %v5533
      %v5818 = vunpack.c.l.b16 %v5534
      %v5819 = vunpack.c.l.b16 %v5535
      %v5820 = vunpack.c.h.b16 %v5535
      %v5821 = vunpack.c.l.b16 %v5536
      %v5822 = vunpack.c.h.b16 %v5536
      %v5823 = vunpack.c.l.b16 %v5537
      %v5824 = vunpack.c.l.b16 %v5538
      %v5825 = vunpack.c.h.b16 %v5538
      %v5826 = vunpack.c.l.b16 %v5539
      %v5827 = vunpack.c.h.b16 %v5539
      %v5828 = vunpack.c.l.b16 %v5540
      %v5829 = vunpack.c.l.b16 %v5541
      %v5830 = vunpack.c.h.b16 %v5541
      %v5831 = vunpack.c.l.b16 %v5542
      %v5832 = vunpack.c.h.b16 %v5542
      %v5833 = vunpack.c.l.b16 %v5543
      %v5834 = vunpack.c.l.b16 %v5544
      %v5835 = vunpack.c.h.b16 %v5544
      %v5836 = vunpack.c.l.b16 %v5545
      %v5837 = vunpack.c.h.b16 %v5545
      %v5838 = vunpack.c.l.b16 %v5546
      %v5839 = vunpack.c.l.b16 %v5547
      %v5840 = vunpack.c.h.b16 %v5547
      %v5841 = vunpack.c.l.b16 %v5548
      %v5842 = vunpack.c.h.b16 %v5548
      %v5843 = vunpack.c.l.b16 %v5549
      %v5844 = vunpack.c.l.b16 %v5550
      %v5845 = vunpack.c.h.b16 %v5550
      %v5846 = vunpack.c.l.b16 %v5551
      %v5847 = vunpack.c.h.b16 %v5551
      %v5848 = vunpack.c.l.b16 %v5552
      %v5849 = vunpack.c.l.b16 %v5553
      %v5850 = vunpack.c.h.b16 %v5553
      %v5851 = vunpack.c.l.b16 %v5554
      %v5852 = vunpack.c.h.b16 %v5554
      %v5853 = vunpack.c.l.b16 %v5555
      %v5854 = vunpack.c.l.b16 %v5556
      %v5855 = vunpack.c.h.b16 %v5556
      %v5856 = vunpack.c.l.b16 %v5557
      %v5857 = vunpack.c.h.b16 %v5557
      %v5858 = vunpack.c.l.b16 %v5558
      %v5859 = vunpack.c.l.b16 %v5559
      %v5860 = vunpack.c.h.b16 %v5559
      %v5861 = vunpack.c.l.b16 %v5560
      %v5862 = vunpack.c.h.b16 %v5560
      %v5863 = vunpack.c.l.b16 %v5561
      %v5864 = vunpack.c.l.b16 %v5562
      %v5865 = vunpack.c.h.b16 %v5562
      %v5866 = vunpack.c.l.b16 %v5563
      %v5867 = vunpack.c.h.b16 %v5563
      %v5868 = vunpack.c.l.b16 %v5564
      %v5869 = vunpack.c.l.b16 %v5565
      %v5870 = vunpack.c.h.b16 %v5565
      %v5871 = vunpack.c.l.b16 %v5566
      %v5872 = vunpack.c.h.b16 %v5566
      %v5873 = vunpack.c.l.b16 %v5567
      %v5874 = vunpack.c.l.b16 %v5568
      %v5875 = vunpack.c.h.b16 %v5568
      %v5876 = vunpack.c.l.b16 %v5569
      %v5877 = vunpack.c.h.b16 %v5569
      %v5878 = vunpack.c.l.b16 %v5570
      %v5879 = vunpack.c.l.b16 %v5571
      %v5880 = vunpack.c.h.b16 %v5571
      %v5881 = vunpack.c.l.b16 %v5572
      %v5882 = vunpack.c.h.b16 %v5572
      %v5883 = vunpack.c.l.b16 %v5573
      %v5884 = vunpack.c.l.b16 %v5574
      %v5885 = vunpack.c.h.b16 %v5574
      %v5886 = vunpack.c.l.b16 %v5575
      %v5887 = vunpack.c.h.b16 %v5575
      %v5888 = vunpack.c.l.b16 %v5576
      %v5889 = vunpack.c.l.b16 %v5577
      %v5890 = vunpack.c.h.b16 %v5577
      %v5891 = vunpack.c.l.b16 %v5578
      %v5892 = vunpack.c.h.b16 %v5578
      %v5893 = vunpack.c.l.b16 %v5579
      %v5894 = vunpack.c.l.b16 %v5580
      %v5895 = vunpack.c.h.b16 %v5580
      %v5896 = vunpack.c.l.b16 %v5581
      %v5897 = vunpack.c.h.b16 %v5581
      %v5898 = vunpack.c.l.b16 %v5582
      %v5899 = vunpack.c.l.b16 %v5583
      %v5900 = vunpack.c.h.b16 %v5583
      %v5901 = vunpack.c.l.b16 %v5584
      %v5902 = vunpack.c.h.b16 %v5584
      %v5903 = vunpack.c.l.b16 %v5585
      %v5904 = vunpack.c.l.b16 %v5586
      %v5905 = vunpack.c.h.b16 %v5586
      %v5906 = vunpack.c.l.b16 %v5587
      %v5907 = vunpack.c.h.b16 %v5587
      %v5908 = vunpack.c.l.b16 %v5588
      %v5909 = vunpack.c.l.b16 %v5589
      %v5910 = vunpack.c.h.b16 %v5589
      %v5911 = vunpack.c.l.b16 %v5590
      %v5912 = vunpack.c.h.b16 %v5590
      %v5913 = vunpack.c.l.b16 %v5591
      %v5914 = vunpack.c.l.b16 %v5592
      %v5915 = vunpack.c.h.b16 %v5592
      %v5916 = vunpack.c.l.b16 %v5593
      %v5917 = vunpack.c.h.b16 %v5593
      %v5918 = vunpack.c.l.b16 %v5594
      %v5919 = vunpack.c.l.b16 %v5595
      %v5920 = vunpack.c.h.b16 %v5595
      %v5921 = vunpack.c.l.b16 %v5596
      %v5922 = vunpack.c.h.b16 %v5596
      %v5923 = vunpack.c.l.b16 %v5597
      %v5924 = vunpack.c.l.b16 %v5598
      %v5925 = vunpack.c.h.b16 %v5598
      %v5926 = vunpack.c.l.b16 %v5599
      %v5927 = vunpack.c.h.b16 %v5599
      %v5928 = vunpack.c.l.b16 %v5600
      %v5929 = vunpack.c.l.b16 %v5601
      %v5930 = vunpack.c.h.b16 %v5601
      %v5931 = vunpack.c.l.b16 %v5602
      %v5932 = vunpack.c.h.b16 %v5602
      %v5933 = vunpack.c.l.b16 %v5603
      %v5934 = vunpack.c.l.b16 %v5604
      %v5935 = vunpack.c.h.b16 %v5604
      %v5936 = vunpack.c.l.b16 %v5605
      %v5937 = vunpack.c.h.b16 %v5605
      %v5938 = vunpack.c.l.b16 %v5606
      %v5939 = vunpack.c.l.b16 %v5607
      %v5940 = vunpack.c.h.b16 %v5607
      %v5941 = vunpack.c.l.b16 %v5608
      %v5942 = vunpack.c.h.b16 %v5608
      %v5943 = vunpack.c.l.b16 %v5609
      %v5944 = vunpack.c.l.b16 %v5610
      %v5945 = vunpack.c.h.b16 %v5610
      %v5946 = vunpack.c.l.b16 %v5611
      %v5947 = vunpack.c.h.b16 %v5611
      %v5948 = vunpack.c.l.b16 %v5612
      %v5949 = vunpack.c.l.b16 %v5613
      %v5950 = vunpack.c.h.b16 %v5613
      %v5951 = vunpack.c.l.b16 %v5614
      %v5952 = vunpack.c.h.b16 %v5614
      %v5953 = vunpack.c.l.b16 %v5615
      %v5954 = vunpack.c.l.b16 %v5616
      %v5955 = vunpack.c.h.b16 %v5616
      %v5956 = vunpack.c.l.b16 %v5617
      %v5957 = vunpack.c.h.b16 %v5617
      %v5958 = vunpack.c.l.b16 %v5618
      %v5959 = vpack.c.b16 %v5804, %v5799
      %v5960 = vpack.c.b16 %v5805, %v5800
      %v5961 = vpack.c.b16 %v5806, %v5801
      %v5962 = vpack.c.b16 %v5807, %v5802
      %v5963 = vpack.c.b16 %v5808, %v5803
      %v5964 = vpack.c.b16 %v5814, %v5809
      %v5965 = vpack.c.b16 %v5815, %v5810
      %v5966 = vpack.c.b16 %v5816, %v5811
      %v5967 = vpack.c.b16 %v5817, %v5812
      %v5968 = vpack.c.b16 %v5818, %v5813
      %v5969 = vpack.c.b16 %v5824, %v5819
      %v5970 = vpack.c.b16 %v5825, %v5820
      %v5971 = vpack.c.b16 %v5826, %v5821
      %v5972 = vpack.c.b16 %v5827, %v5822
      %v5973 = vpack.c.b16 %v5828, %v5823
      %v5974 = vpack.c.b16 %v5834, %v5829
      %v5975 = vpack.c.b16 %v5835, %v5830
      %v5976 = vpack.c.b16 %v5836, %v5831
      %v5977 = vpack.c.b16 %v5837, %v5832
      %v5978 = vpack.c.b16 %v5838, %v5833
      %v5979 = vpack.c.b16 %v5844, %v5839
      %v5980 = vpack.c.b16 %v5845, %v5840
      %v5981 = vpack.c.b16 %v5846, %v5841
      %v5982 = vpack.c.b16 %v5847, %v5842
      %v5983 = vpack.c.b16 %v5848, %v5843
      %v5984 = vpack.c.b16 %v5854, %v5849
      %v5985 = vpack.c.b16 %v5855, %v5850
      %v5986 = vpack.c.b16 %v5856, %v5851
      %v5987 = vpack.c.b16 %v5857, %v5852
      %v5988 = vpack.c.b16 %v5858, %v5853
      %v5989 = vpack.c.b16 %v5864, %v5859
      %v5990 = vpack.c.b16 %v5865, %v5860
      %v5991 = vpack.c.b16 %v5866, %v5861
      %v5992 = vpack.c.b16 %v5867, %v5862
      %v5993 = vpack.c.b16 %v5868, %v5863
      %v5994 = vpack.c.b16 %v5874, %v5869
      %v5995 = vpack.c.b16 %v5875, %v5870
      %v5996 = vpack.c.b16 %v5876, %v5871
      %v5997 = vpack.c.b16 %v5877, %v5872
      %v5998 = vpack.c.b16 %v5878, %v5873
      %v5999 = vpack.c.b16 %v5884, %v5879
      %v6000 = vpack.c.b16 %v5885, %v5880
      %v6001 = vpack.c.b16 %v5886, %v5881
      %v6002 = vpack.c.b16 %v5887, %v5882
      %v6003 = vpack.c.b16 %v5888, %v5883
      %v6004 = vpack.c.b16 %v5894, %v5889
      %v6005 = vpack.c.b16 %v5895, %v5890
      %v6006 = vpack.c.b16 %v5896, %v5891
      %v6007 = vpack.c.b16 %v5897, %v5892
      %v6008 = vpack.c.b16 %v5898, %v5893
      %v6009 = vpack.c.b16 %v5904, %v5899
      %v6010 = vpack.c.b16 %v5905, %v5900
      %v6011 = vpack.c.b16 %v5906, %v5901
      %v6012 = vpack.c.b16 %v5907, %v5902
      %v6013 = vpack.c.b16 %v5908, %v5903
      %v6014 = vpack.c.b16 %v5914, %v5909
      %v6015 = vpack.c.b16 %v5915, %v5910
      %v6016 = vpack.c.b16 %v5916, %v5911
      %v6017 = vpack.c.b16 %v5917, %v5912
      %v6018 = vpack.c.b16 %v5918, %v5913
      %v6019 = vpack.c.b16 %v5924, %v5919
      %v6020 = vpack.c.b16 %v5925, %v5920
      %v6021 = vpack.c.b16 %v5926, %v5921
      %v6022 = vpack.c.b16 %v5927, %v5922
      %v6023 = vpack.c.b16 %v5928, %v5923
      %v6024 = vpack.c.b16 %v5934, %v5929
      %v6025 = vpack.c.b16 %v5935, %v5930
      %v6026 = vpack.c.b16 %v5936, %v5931
      %v6027 = vpack.c.b16 %v5937, %v5932
      %v6028 = vpack.c.b16 %v5938, %v5933
      %v6029 = vpack.c.b16 %v5944, %v5939
      %v6030 = vpack.c.b16 %v5945, %v5940
      %v6031 = vpack.c.b16 %v5946, %v5941
      %v6032 = vpack.c.b16 %v5947, %v5942
      %v6033 = vpack.c.b16 %v5948, %v5943
      %v6034 = vpack.c.b16 %v5954, %v5949
      %v6035 = vpack.c.b16 %v5955, %v5950
      %v6036 = vpack.c.b16 %v5956, %v5951
      %v6037 = vpack.c.b16 %v5957, %v5952
      %v6038 = vpack.c.b16 %v5958, %v5953
      %v6199 = vunpack.c.l.b16 %v5619
      %v6200 = vunpack.c.l.b16 %v5620
      %v6201 = vunpack.c.l.b16 %v5621
      %v6202 = vunpack.c.l.b16 %v5622
      %v6203 = vunpack.c.l.b16 %v5623
      %v6204 = vunpack.c.l.b16 %v5624
      %v6205 = vunpack.c.l.b16 %v5625
      %v6206 = vunpack.c.l.b16 %v5626
      %v6207 = vunpack.c.l.b16 %v5627
      %v6208 = vunpack.c.l.b16 %v5628
      %v6209 = vunpack.c.l.b16 %v5629
      %v6210 = vunpack.c.l.b16 %v5630
      %v6211 = vunpack.c.l.b16 %v5631
      %v6212 = vunpack.c.l.b16 %v5632
      %v6213 = vunpack.c.l.b16 %v5633
      %v6214 = vunpack.c.l.b16 %v5634
      %v6215 = vunpack.c.l.b16 %v5635
      %v6216 = vunpack.c.l.b16 %v5636
      %v6217 = vunpack.c.l.b16 %v5637
      %v6218 = vunpack.c.l.b16 %v5638
      %v6219 = vunpack.c.l.b16 %v5639
      %v6220 = vunpack.c.l.b16 %v5640
      %v6221 = vunpack.c.l.b16 %v5641
      %v6222 = vunpack.c.l.b16 %v5642
      %v6223 = vunpack.c.l.b16 %v5643
      %v6224 = vunpack.c.l.b16 %v5644
      %v6225 = vunpack.c.l.b16 %v5645
      %v6226 = vunpack.c.l.b16 %v5646
      %v6227 = vunpack.c.l.b16 %v5647
      %v6228 = vunpack.c.l.b16 %v5648
      %v6229 = vunpack.c.l.b16 %v5649
      %v6230 = vunpack.c.l.b16 %v5650
      %v6231 = vunpack.c.l.b16 %v5651
      %v6232 = vunpack.c.l.b16 %v5652
      %v6233 = vunpack.c.l.b16 %v5653
      %v6234 = vunpack.c.l.b16 %v5654
      %v6235 = vunpack.c.l.b16 %v5655
      %v6236 = vunpack.c.l.b16 %v5656
      %v6237 = vunpack.c.l.b16 %v5657
      %v6238 = vunpack.c.l.b16 %v5658
      %v6239 = vunpack.c.l.b16 %v5659
      %v6240 = vunpack.c.l.b16 %v5660
      %v6241 = vunpack.c.l.b16 %v5661
      %v6242 = vunpack.c.l.b16 %v5662
      %v6243 = vunpack.c.l.b16 %v5663
      %v6244 = vunpack.c.l.b16 %v5664
      %v6245 = vunpack.c.l.b16 %v5665
      %v6246 = vunpack.c.l.b16 %v5666
      %v6247 = vunpack.c.l.b16 %v5667
      %v6248 = vunpack.c.l.b16 %v5668
      %v6249 = vunpack.c.l.b16 %v5669
      %v6250 = vunpack.c.l.b16 %v5670
      %v6251 = vunpack.c.l.b16 %v5671
      %v6252 = vunpack.c.l.b16 %v5672
      %v6253 = vunpack.c.l.b16 %v5673
      %v6254 = vunpack.c.l.b16 %v5674
      %v6255 = vunpack.c.l.b16 %v5675
      %v6256 = vunpack.c.l.b16 %v5676
      %v6257 = vunpack.c.l.b16 %v5677
      %v6258 = vunpack.c.l.b16 %v5678
      %v6259 = vunpack.c.l.b16 %v5679
      %v6260 = vunpack.c.l.b16 %v5680
      %v6261 = vunpack.c.l.b16 %v5681
      %v6262 = vunpack.c.l.b16 %v5682
      %v6263 = vunpack.c.l.b16 %v5683
      %v6264 = vunpack.c.l.b16 %v5684
      %v6265 = vunpack.c.l.b16 %v5685
      %v6266 = vunpack.c.l.b16 %v5686
      %v6267 = vunpack.c.l.b16 %v5687
      %v6268 = vunpack.c.l.b16 %v5688
      %v6269 = vunpack.c.l.b16 %v5689
      %v6270 = vunpack.c.l.b16 %v5690
      %v6271 = vunpack.c.l.b16 %v5691
      %v6272 = vunpack.c.l.b16 %v5692
      %v6273 = vunpack.c.l.b16 %v5693
      %v6274 = vunpack.c.l.b16 %v5694
      %v6275 = vunpack.c.l.b16 %v5695
      %v6276 = vunpack.c.l.b16 %v5696
      %v6277 = vunpack.c.l.b16 %v5697
      %v6278 = vunpack.c.l.b16 %v5698
      %v6279 = vpack.c.b16 %v6200, %v6199
      %v6280 = vpack.c.b16 %v6202, %v6201
      %v6281 = vpack.c.b16 %v6204, %v6203
      %v6282 = vpack.c.b16 %v6206, %v6205
      %v6283 = vpack.c.b16 %v6208, %v6207
      %v6284 = vpack.c.b16 %v6210, %v6209
      %v6285 = vpack.c.b16 %v6212, %v6211
      %v6286 = vpack.c.b16 %v6214, %v6213
      %v6287 = vpack.c.b16 %v6216, %v6215
      %v6288 = vpack.c.b16 %v6218, %v6217
      %v6289 = vpack.c.b16 %v6220, %v6219
      %v6290 = vpack.c.b16 %v6222, %v6221
      %v6291 = vpack.c.b16 %v6224, %v6223
      %v6292 = vpack.c.b16 %v6226, %v6225
      %v6293 = vpack.c.b16 %v6228, %v6227
      %v6294 = vpack.c.b16 %v6230, %v6229
      %v6295 = vpack.c.b16 %v6232, %v6231
      %v6296 = vpack.c.b16 %v6234, %v6233
      %v6297 = vpack.c.b16 %v6236, %v6235
      %v6298 = vpack.c.b16 %v6238, %v6237
      %v6299 = vpack.c.b16 %v6240, %v6239
      %v6300 = vpack.c.b16 %v6242, %v6241
      %v6301 = vpack.c.b16 %v6244, %v6243
      %v6302 = vpack.c.b16 %v6246, %v6245
      %v6303 = vpack.c.b16 %v6248, %v6247
      %v6304 = vpack.c.b16 %v6250, %v6249
      %v6305 = vpack.c.b16 %v6252, %v6251
      %v6306 = vpack.c.b16 %v6254, %v6253
      %v6307 = vpack.c.b16 %v6256, %v6255
      %v6308 = vpack.c.b16 %v6258, %v6257
      %v6309 = vpack.c.b16 %v6260, %v6259
      %v6310 = vpack.c.b16 %v6262, %v6261
      %v6311 = vpack.c.b16 %v6264, %v6263
      %v6312 = vpack.c.b16 %v6266, %v6265
      %v6313 = vpack.c.b16 %v6268, %v6267
      %v6314 = vpack.c.b16 %v6270, %v6269
      %v6315 = vpack.c.b16 %v6272, %v6271
      %v6316 = vpack.c.b16 %v6274, %v6273
      %v6317 = vpack.c.b16 %v6276, %v6275
      %v6318 = vpack.c.b16 %v6278, %v6277
      %6359 = vmatpush.bf16.msra.mxu0 %v6286
      %6360 = vmatpush.bf16.msra.mxu0 %v6285
      %6361 = vmatpush.bf16.msra.mxu0 %v6284
      %6362 = vmatpush.bf16.msra.mxu0 %v6283
      %6363 = vmatpush.bf16.msra.mxu0 %v6282
      %6364 = vmatpush.bf16.msra.mxu0 %v6281
      %6365 = vmatpush.bf16.msra.mxu0 %v6280
      %6366 = vmatpush.bf16.msra.mxu0 %v6279
      %6367 = vmatmul.bf16.gmra.mxu0 %v5959
      %v6368 = vpop.f32.mrf.mxu0
      %v6369 = vadd.f32 %v5701, %v6368
      %v6370 = vpop.f32.mrf.mxu0
      %v6371 = vadd.f32 %v5701, %v6370
      %6372 = vmatmul.bf16.gmra.mxu0 %v5964
      %v6373 = vpop.f32.mrf.mxu0
      %v6374 = vadd.f32 %v5701, %v6373
      %v6375 = vpop.f32.mrf.mxu0
      %v6376 = vadd.f32 %v5701, %v6375
      %6377 = vmatmul.bf16.gmra.mxu0 %v5969
      %v6378 = vpop.f32.mrf.mxu0
      %v6379 = vadd.f32 %v5701, %v6378
      %v6380 = vpop.f32.mrf.mxu0
      %v6381 = vadd.f32 %v5701, %v6380
      %6382 = vmatmul.bf16.gmra.mxu0 %v5974
      %v6383 = vpop.f32.mrf.mxu0
      %v6384 = vadd.f32 %v5701, %v6383
      %v6385 = vpop.f32.mrf.mxu0
      %v6386 = vadd.f32 %v5701, %v6385
      %6387 = vmatmul.bf16.gmra.mxu0 %v5979
      %v6388 = vpop.f32.mrf.mxu0
      %v6389 = vadd.f32 %v5701, %v6388
      %v6390 = vpop.f32.mrf.mxu0
      %v6391 = vadd.f32 %v5701, %v6390
      %6392 = vmatmul.bf16.gmra.mxu0 %v5984
      %v6393 = vpop.f32.mrf.mxu0
      %v6394 = vadd.f32 %v5701, %v6393
      %v6395 = vpop.f32.mrf.mxu0
      %v6396 = vadd.f32 %v5701, %v6395
      %6397 = vmatmul.bf16.gmra.mxu0 %v5989
      %v6398 = vpop.f32.mrf.mxu0
      %v6399 = vadd.f32 %v5701, %v6398
      %v6400 = vpop.f32.mrf.mxu0
      %v6401 = vadd.f32 %v5701, %v6400
      %6402 = vmatmul.bf16.gmra.mxu0 %v5994
      %v6403 = vpop.f32.mrf.mxu0
      %v6404 = vadd.f32 %v5701, %v6403
      %v6405 = vpop.f32.mrf.mxu0
      %v6406 = vadd.f32 %v5701, %v6405
      %6407 = vmatmul.bf16.gmra.mxu0 %v5999
      %v6408 = vpop.f32.mrf.mxu0
      %v6409 = vadd.f32 %v5701, %v6408
      %v6410 = vpop.f32.mrf.mxu0
      %v6411 = vadd.f32 %v5701, %v6410
      %6412 = vmatmul.bf16.gmra.mxu0 %v6004
      %v6413 = vpop.f32.mrf.mxu0
      %v6414 = vadd.f32 %v5701, %v6413
      %v6415 = vpop.f32.mrf.mxu0
      %v6416 = vadd.f32 %v5701, %v6415
      %6417 = vmatmul.bf16.gmra.mxu0 %v6009
      %v6418 = vpop.f32.mrf.mxu0
      %v6419 = vadd.f32 %v5701, %v6418
      %v6420 = vpop.f32.mrf.mxu0
      %v6421 = vadd.f32 %v5701, %v6420
      %6422 = vmatmul.bf16.gmra.mxu0 %v6014
      %v6423 = vpop.f32.mrf.mxu0
      %v6424 = vadd.f32 %v5701, %v6423
      %v6425 = vpop.f32.mrf.mxu0
      %v6426 = vadd.f32 %v5701, %v6425
      %6427 = vmatmul.bf16.gmra.mxu0 %v6019
      %v6428 = vpop.f32.mrf.mxu0
      %v6429 = vadd.f32 %v5701, %v6428
      %v6430 = vpop.f32.mrf.mxu0
      %v6431 = vadd.f32 %v5701, %v6430
      %6432 = vmatmul.bf16.gmra.mxu0 %v6024
      %v6433 = vpop.f32.mrf.mxu0
      %v6434 = vadd.f32 %v5701, %v6433
      %v6435 = vpop.f32.mrf.mxu0
      %v6436 = vadd.f32 %v5701, %v6435
      %6437 = vmatmul.bf16.gmra.mxu0 %v6029
      %v6438 = vpop.f32.mrf.mxu0
      %v6439 = vadd.f32 %v5701, %v6438
      %v6440 = vpop.f32.mrf.mxu0
      %v6441 = vadd.f32 %v5701, %v6440
      %6442 = vmatmul.bf16.gmra.mxu0 %v6034
      %v6443 = vpop.f32.mrf.mxu0
      %v6444 = vadd.f32 %v5701, %v6443
      %v6445 = vpop.f32.mrf.mxu0
      %v6446 = vadd.f32 %v5701, %v6445
      %6447 = vdwg.mxu0
      %6448 = vmatpush.bf16.msra.mxu0 %v6294
      %6449 = vmatpush.bf16.msra.mxu0 %v6293
      %6450 = vmatpush.bf16.msra.mxu0 %v6292
      %6451 = vmatpush.bf16.msra.mxu0 %v6291
      %6452 = vmatpush.bf16.msra.mxu0 %v6290
      %6453 = vmatpush.bf16.msra.mxu0 %v6289
      %6454 = vmatpush.bf16.msra.mxu0 %v6288
      %6455 = vmatpush.bf16.msra.mxu0 %v6287
      %6456 = vmatmul.bf16.gmra.mxu0 %v5960
      %v6457 = vpop.f32.mrf.mxu0
      %v6458 = vadd.f32 %v6369, %v6457
      %v6459 = vpop.f32.mrf.mxu0
      %v6460 = vadd.f32 %v6371, %v6459
      %6461 = vmatmul.bf16.gmra.mxu0 %v5965
      %v6462 = vpop.f32.mrf.mxu0
      %v6463 = vadd.f32 %v6374, %v6462
      %v6464 = vpop.f32.mrf.mxu0
      %v6465 = vadd.f32 %v6376, %v6464
      %6466 = vmatmul.bf16.gmra.mxu0 %v5970
      %v6467 = vpop.f32.mrf.mxu0
      %v6468 = vadd.f32 %v6379, %v6467
      %v6469 = vpop.f32.mrf.mxu0
      %v6470 = vadd.f32 %v6381, %v6469
      %6471 = vmatmul.bf16.gmra.mxu0 %v5975
      %v6472 = vpop.f32.mrf.mxu0
      %v6473 = vadd.f32 %v6384, %v6472
      %v6474 = vpop.f32.mrf.mxu0
      %v6475 = vadd.f32 %v6386, %v6474
      %6476 = vmatmul.bf16.gmra.mxu0 %v5980
      %v6477 = vpop.f32.mrf.mxu0
      %v6478 = vadd.f32 %v6389, %v6477
      %v6479 = vpop.f32.mrf.mxu0
      %v6480 = vadd.f32 %v6391, %v6479
      %6481 = vmatmul.bf16.gmra.mxu0 %v5985
      %v6482 = vpop.f32.mrf.mxu0
      %v6483 = vadd.f32 %v6394, %v6482
      %v6484 = vpop.f32.mrf.mxu0
      %v6485 = vadd.f32 %v6396, %v6484
      %6486 = vmatmul.bf16.gmra.mxu0 %v5990
      %v6487 = vpop.f32.mrf.mxu0
      %v6488 = vadd.f32 %v6399, %v6487
      %v6489 = vpop.f32.mrf.mxu0
      %v6490 = vadd.f32 %v6401, %v6489
      %6491 = vmatmul.bf16.gmra.mxu0 %v5995
      %v6492 = vpop.f32.mrf.mxu0
      %v6493 = vadd.f32 %v6404, %v6492
      %v6494 = vpop.f32.mrf.mxu0
      %v6495 = vadd.f32 %v6406, %v6494
      %6496 = vmatmul.bf16.gmra.mxu0 %v6000
      %v6497 = vpop.f32.mrf.mxu0
      %v6498 = vadd.f32 %v6409, %v6497
      %v6499 = vpop.f32.mrf.mxu0
      %v6500 = vadd.f32 %v6411, %v6499
      %6501 = vmatmul.bf16.gmra.mxu0 %v6005
      %v6502 = vpop.f32.mrf.mxu0
      %v6503 = vadd.f32 %v6414, %v6502
      %v6504 = vpop.f32.mrf.mxu0
      %v6505 = vadd.f32 %v6416, %v6504
      %6506 = vmatmul.bf16.gmra.mxu0 %v6010
      %v6507 = vpop.f32.mrf.mxu0
      %v6508 = vadd.f32 %v6419, %v6507
      %v6509 = vpop.f32.mrf.mxu0
      %v6510 = vadd.f32 %v6421, %v6509
      %6511 = vmatmul.bf16.gmra.mxu0 %v6015
      %v6512 = vpop.f32.mrf.mxu0
      %v6513 = vadd.f32 %v6424, %v6512
      %v6514 = vpop.f32.mrf.mxu0
      %v6515 = vadd.f32 %v6426, %v6514
      %6516 = vmatmul.bf16.gmra.mxu0 %v6020
      %v6517 = vpop.f32.mrf.mxu0
      %v6518 = vadd.f32 %v6429, %v6517
      %v6519 = vpop.f32.mrf.mxu0
      %v6520 = vadd.f32 %v6431, %v6519
      %6521 = vmatmul.bf16.gmra.mxu0 %v6025
      %v6522 = vpop.f32.mrf.mxu0
      %v6523 = vadd.f32 %v6434, %v6522
      %v6524 = vpop.f32.mrf.mxu0
      %v6525 = vadd.f32 %v6436, %v6524
      %6526 = vmatmul.bf16.gmra.mxu0 %v6030
      %v6527 = vpop.f32.mrf.mxu0
      %v6528 = vadd.f32 %v6439, %v6527
      %v6529 = vpop.f32.mrf.mxu0
      %v6530 = vadd.f32 %v6441, %v6529
      %6531 = vmatmul.bf16.gmra.mxu0 %v6035
      %v6532 = vpop.f32.mrf.mxu0
      %v6533 = vadd.f32 %v6444, %v6532
      %v6534 = vpop.f32.mrf.mxu0
      %v6535 = vadd.f32 %v6446, %v6534
      %6536 = vdwg.mxu0
      %6537 = vmatpush.bf16.msra.mxu0 %v6302
      %6538 = vmatpush.bf16.msra.mxu0 %v6301
      %6539 = vmatpush.bf16.msra.mxu0 %v6300
      %6540 = vmatpush.bf16.msra.mxu0 %v6299
      %6541 = vmatpush.bf16.msra.mxu0 %v6298
      %6542 = vmatpush.bf16.msra.mxu0 %v6297
      %6543 = vmatpush.bf16.msra.mxu0 %v6296
      %6544 = vmatpush.bf16.msra.mxu0 %v6295
      %6545 = vmatmul.bf16.gmra.mxu0 %v5961
      %v6546 = vpop.f32.mrf.mxu0
      %v6547 = vadd.f32 %v6458, %v6546
      %v6548 = vpop.f32.mrf.mxu0
      %v6549 = vadd.f32 %v6460, %v6548
      %6550 = vmatmul.bf16.gmra.mxu0 %v5966
      %v6551 = vpop.f32.mrf.mxu0
      %v6552 = vadd.f32 %v6463, %v6551
      %v6553 = vpop.f32.mrf.mxu0
      %v6554 = vadd.f32 %v6465, %v6553
      %6555 = vmatmul.bf16.gmra.mxu0 %v5971
      %v6556 = vpop.f32.mrf.mxu0
      %v6557 = vadd.f32 %v6468, %v6556
      %v6558 = vpop.f32.mrf.mxu0
      %v6559 = vadd.f32 %v6470, %v6558
      %6560 = vmatmul.bf16.gmra.mxu0 %v5976
      %v6561 = vpop.f32.mrf.mxu0
      %v6562 = vadd.f32 %v6473, %v6561
      %v6563 = vpop.f32.mrf.mxu0
      %v6564 = vadd.f32 %v6475, %v6563
      %6565 = vmatmul.bf16.gmra.mxu0 %v5981
      %v6566 = vpop.f32.mrf.mxu0
      %v6567 = vadd.f32 %v6478, %v6566
      %v6568 = vpop.f32.mrf.mxu0
      %v6569 = vadd.f32 %v6480, %v6568
      %6570 = vmatmul.bf16.gmra.mxu0 %v5986
      %v6571 = vpop.f32.mrf.mxu0
      %v6572 = vadd.f32 %v6483, %v6571
      %v6573 = vpop.f32.mrf.mxu0
      %v6574 = vadd.f32 %v6485, %v6573
      %6575 = vmatmul.bf16.gmra.mxu0 %v5991
      %v6576 = vpop.f32.mrf.mxu0
      %v6577 = vadd.f32 %v6488, %v6576
      %v6578 = vpop.f32.mrf.mxu0
      %v6579 = vadd.f32 %v6490, %v6578
      %6580 = vmatmul.bf16.gmra.mxu0 %v5996
      %v6581 = vpop.f32.mrf.mxu0
      %v6582 = vadd.f32 %v6493, %v6581
      %v6583 = vpop.f32.mrf.mxu0
      %v6584 = vadd.f32 %v6495, %v6583
      %6585 = vmatmul.bf16.gmra.mxu0 %v6001
      %v6586 = vpop.f32.mrf.mxu0
      %v6587 = vadd.f32 %v6498, %v6586
      %v6588 = vpop.f32.mrf.mxu0
      %v6589 = vadd.f32 %v6500, %v6588
      %6590 = vmatmul.bf16.gmra.mxu0 %v6006
      %v6591 = vpop.f32.mrf.mxu0
      %v6592 = vadd.f32 %v6503, %v6591
      %v6593 = vpop.f32.mrf.mxu0
      %v6594 = vadd.f32 %v6505, %v6593
      %6595 = vmatmul.bf16.gmra.mxu0 %v6011
      %v6596 = vpop.f32.mrf.mxu0
      %v6597 = vadd.f32 %v6508, %v6596
      %v6598 = vpop.f32.mrf.mxu0
      %v6599 = vadd.f32 %v6510, %v6598
      %6600 = vmatmul.bf16.gmra.mxu0 %v6016
      %v6601 = vpop.f32.mrf.mxu0
      %v6602 = vadd.f32 %v6513, %v6601
      %v6603 = vpop.f32.mrf.mxu0
      %v6604 = vadd.f32 %v6515, %v6603
      %6605 = vmatmul.bf16.gmra.mxu0 %v6021
      %v6606 = vpop.f32.mrf.mxu0
      %v6607 = vadd.f32 %v6518, %v6606
      %v6608 = vpop.f32.mrf.mxu0
      %v6609 = vadd.f32 %v6520, %v6608
      %6610 = vmatmul.bf16.gmra.mxu0 %v6026
      %v6611 = vpop.f32.mrf.mxu0
      %v6612 = vadd.f32 %v6523, %v6611
      %v6613 = vpop.f32.mrf.mxu0
      %v6614 = vadd.f32 %v6525, %v6613
      %6615 = vmatmul.bf16.gmra.mxu0 %v6031
      %v6616 = vpop.f32.mrf.mxu0
      %v6617 = vadd.f32 %v6528, %v6616
      %v6618 = vpop.f32.mrf.mxu0
      %v6619 = vadd.f32 %v6530, %v6618
      %6620 = vmatmul.bf16.gmra.mxu0 %v6036
      %v6621 = vpop.f32.mrf.mxu0
      %v6622 = vadd.f32 %v6533, %v6621
      %v6623 = vpop.f32.mrf.mxu0
      %v6624 = vadd.f32 %v6535, %v6623
      %6625 = vdwg.mxu0
      %6626 = vmatpush.bf16.msra.mxu0 %v6310
      %6627 = vmatpush.bf16.msra.mxu0 %v6309
      %6628 = vmatpush.bf16.msra.mxu0 %v6308
      %6629 = vmatpush.bf16.msra.mxu0 %v6307
      %6630 = vmatpush.bf16.msra.mxu0 %v6306
      %6631 = vmatpush.bf16.msra.mxu0 %v6305
      %6632 = vmatpush.bf16.msra.mxu0 %v6304
      %6633 = vmatpush.bf16.msra.mxu0 %v6303
      %6634 = vmatmul.bf16.gmra.mxu0 %v5962
      %v6635 = vpop.f32.mrf.mxu0
      %v6636 = vadd.f32 %v6547, %v6635
      %v6637 = vpop.f32.mrf.mxu0
      %v6638 = vadd.f32 %v6549, %v6637
      %6639 = vmatmul.bf16.gmra.mxu0 %v5967
      %v6640 = vpop.f32.mrf.mxu0
      %v6641 = vadd.f32 %v6552, %v6640
      %v6642 = vpop.f32.mrf.mxu0
      %v6643 = vadd.f32 %v6554, %v6642
      %6644 = vmatmul.bf16.gmra.mxu0 %v5972
      %v6645 = vpop.f32.mrf.mxu0
      %v6646 = vadd.f32 %v6557, %v6645
      %v6647 = vpop.f32.mrf.mxu0
      %v6648 = vadd.f32 %v6559, %v6647
      %6649 = vmatmul.bf16.gmra.mxu0 %v5977
      %v6650 = vpop.f32.mrf.mxu0
      %v6651 = vadd.f32 %v6562, %v6650
      %v6652 = vpop.f32.mrf.mxu0
      %v6653 = vadd.f32 %v6564, %v6652
      %6654 = vmatmul.bf16.gmra.mxu0 %v5982
      %v6655 = vpop.f32.mrf.mxu0
      %v6656 = vadd.f32 %v6567, %v6655
      %v6657 = vpop.f32.mrf.mxu0
      %v6658 = vadd.f32 %v6569, %v6657
      %6659 = vmatmul.bf16.gmra.mxu0 %v5987
      %v6660 = vpop.f32.mrf.mxu0
      %v6661 = vadd.f32 %v6572, %v6660
      %v6662 = vpop.f32.mrf.mxu0
      %v6663 = vadd.f32 %v6574, %v6662
      %6664 = vmatmul.bf16.gmra.mxu0 %v5992
      %v6665 = vpop.f32.mrf.mxu0
      %v6666 = vadd.f32 %v6577, %v6665
      %v6667 = vpop.f32.mrf.mxu0
      %v6668 = vadd.f32 %v6579, %v6667
      %6669 = vmatmul.bf16.gmra.mxu0 %v5997
      %v6670 = vpop.f32.mrf.mxu0
      %v6671 = vadd.f32 %v6582, %v6670
      %v6672 = vpop.f32.mrf.mxu0
      %v6673 = vadd.f32 %v6584, %v6672
      %6674 = vmatmul.bf16.gmra.mxu0 %v6002
      %v6675 = vpop.f32.mrf.mxu0
      %v6676 = vadd.f32 %v6587, %v6675
      %v6677 = vpop.f32.mrf.mxu0
      %v6678 = vadd.f32 %v6589, %v6677
      %6679 = vmatmul.bf16.gmra.mxu0 %v6007
      %v6680 = vpop.f32.mrf.mxu0
      %v6681 = vadd.f32 %v6592, %v6680
      %v6682 = vpop.f32.mrf.mxu0
      %v6683 = vadd.f32 %v6594, %v6682
      %6684 = vmatmul.bf16.gmra.mxu0 %v6012
      %v6685 = vpop.f32.mrf.mxu0
      %v6686 = vadd.f32 %v6597, %v6685
      %v6687 = vpop.f32.mrf.mxu0
      %v6688 = vadd.f32 %v6599, %v6687
      %6689 = vmatmul.bf16.gmra.mxu0 %v6017
      %v6690 = vpop.f32.mrf.mxu0
      %v6691 = vadd.f32 %v6602, %v6690
      %v6692 = vpop.f32.mrf.mxu0
      %v6693 = vadd.f32 %v6604, %v6692
      %6694 = vmatmul.bf16.gmra.mxu0 %v6022
      %v6695 = vpop.f32.mrf.mxu0
      %v6696 = vadd.f32 %v6607, %v6695
      %v6697 = vpop.f32.mrf.mxu0
      %v6698 = vadd.f32 %v6609, %v6697
      %6699 = vmatmul.bf16.gmra.mxu0 %v6027
      %v6700 = vpop.f32.mrf.mxu0
      %v6701 = vadd.f32 %v6612, %v6700
      %v6702 = vpop.f32.mrf.mxu0
      %v6703 = vadd.f32 %v6614, %v6702
      %6704 = vmatmul.bf16.gmra.mxu0 %v6032
      %v6705 = vpop.f32.mrf.mxu0
      %v6706 = vadd.f32 %v6617, %v6705
      %v6707 = vpop.f32.mrf.mxu0
      %v6708 = vadd.f32 %v6619, %v6707
      %6709 = vmatmul.bf16.gmra.mxu0 %v6037
      %v6710 = vpop.f32.mrf.mxu0
      %v6711 = vadd.f32 %v6622, %v6710
      %v6712 = vpop.f32.mrf.mxu0
      %v6713 = vadd.f32 %v6624, %v6712
      %6714 = vdwg.mxu0
      %6715 = vmatpush.bf16.msra.mxu0 %v6318
      %6716 = vmatpush.bf16.msra.mxu0 %v6317
      %6717 = vmatpush.bf16.msra.mxu0 %v6316
      %6718 = vmatpush.bf16.msra.mxu0 %v6315
      %6719 = vmatpush.bf16.msra.mxu0 %v6314
      %6720 = vmatpush.bf16.msra.mxu0 %v6313
      %6721 = vmatpush.bf16.msra.mxu0 %v6312
      %6722 = vmatpush.bf16.msra.mxu0 %v6311
      %6723 = vmatmul.bf16.gmra.mxu0 %v5963
      %v6724 = vpop.f32.mrf.mxu0
      %v6725 = vadd.f32 %v6636, %v6724
      %v6726 = vpop.f32.mrf.mxu0
      %v6727 = vadd.f32 %v6638, %v6726
      %6728 = vmatmul.bf16.gmra.mxu0 %v5968
      %v6729 = vpop.f32.mrf.mxu0
      %v6730 = vadd.f32 %v6641, %v6729
      %v6731 = vpop.f32.mrf.mxu0
      %v6732 = vadd.f32 %v6643, %v6731
      %6733 = vmatmul.bf16.gmra.mxu0 %v5973
      %v6734 = vpop.f32.mrf.mxu0
      %v6735 = vadd.f32 %v6646, %v6734
      %v6736 = vpop.f32.mrf.mxu0
      %v6737 = vadd.f32 %v6648, %v6736
      %6738 = vmatmul.bf16.gmra.mxu0 %v5978
      %v6739 = vpop.f32.mrf.mxu0
      %v6740 = vadd.f32 %v6651, %v6739
      %v6741 = vpop.f32.mrf.mxu0
      %v6742 = vadd.f32 %v6653, %v6741
      %6743 = vmatmul.bf16.gmra.mxu0 %v5983
      %v6744 = vpop.f32.mrf.mxu0
      %v6745 = vadd.f32 %v6656, %v6744
      %v6746 = vpop.f32.mrf.mxu0
      %v6747 = vadd.f32 %v6658, %v6746
      %6748 = vmatmul.bf16.gmra.mxu0 %v5988
      %v6749 = vpop.f32.mrf.mxu0
      %v6750 = vadd.f32 %v6661, %v6749
      %v6751 = vpop.f32.mrf.mxu0
      %v6752 = vadd.f32 %v6663, %v6751
      %6753 = vmatmul.bf16.gmra.mxu0 %v5993
      %v6754 = vpop.f32.mrf.mxu0
      %v6755 = vadd.f32 %v6666, %v6754
      %v6756 = vpop.f32.mrf.mxu0
      %v6757 = vadd.f32 %v6668, %v6756
      %6758 = vmatmul.bf16.gmra.mxu0 %v5998
      %v6759 = vpop.f32.mrf.mxu0
      %v6760 = vadd.f32 %v6671, %v6759
      %v6761 = vpop.f32.mrf.mxu0
      %v6762 = vadd.f32 %v6673, %v6761
      %6763 = vmatmul.bf16.gmra.mxu0 %v6003
      %v6764 = vpop.f32.mrf.mxu0
      %v6765 = vadd.f32 %v6676, %v6764
      %v6766 = vpop.f32.mrf.mxu0
      %v6767 = vadd.f32 %v6678, %v6766
      %6768 = vmatmul.bf16.gmra.mxu0 %v6008
      %v6769 = vpop.f32.mrf.mxu0
      %v6770 = vadd.f32 %v6681, %v6769
      %v6771 = vpop.f32.mrf.mxu0
      %v6772 = vadd.f32 %v6683, %v6771
      %6773 = vmatmul.bf16.gmra.mxu0 %v6013
      %v6774 = vpop.f32.mrf.mxu0
      %v6775 = vadd.f32 %v6686, %v6774
      %v6776 = vpop.f32.mrf.mxu0
      %v6777 = vadd.f32 %v6688, %v6776
      %6778 = vmatmul.bf16.gmra.mxu0 %v6018
      %v6779 = vpop.f32.mrf.mxu0
      %v6780 = vadd.f32 %v6691, %v6779
      %v6781 = vpop.f32.mrf.mxu0
      %v6782 = vadd.f32 %v6693, %v6781
      %6783 = vmatmul.bf16.gmra.mxu0 %v6023
      %v6784 = vpop.f32.mrf.mxu0
      %v6785 = vadd.f32 %v6696, %v6784
      %v6786 = vpop.f32.mrf.mxu0
      %v6787 = vadd.f32 %v6698, %v6786
      %6788 = vmatmul.bf16.gmra.mxu0 %v6028
      %v6789 = vpop.f32.mrf.mxu0
      %v6790 = vadd.f32 %v6701, %v6789
      %v6791 = vpop.f32.mrf.mxu0
      %v6792 = vadd.f32 %v6703, %v6791
      %6793 = vmatmul.bf16.gmra.mxu0 %v6033
      %v6794 = vpop.f32.mrf.mxu0
      %v6795 = vadd.f32 %v6706, %v6794
      %v6796 = vpop.f32.mrf.mxu0
      %v6797 = vadd.f32 %v6708, %v6796
      %6798 = vmatmul.bf16.gmra.mxu0 %v6038
      %v6799 = vpop.f32.mrf.mxu0
      %v6800 = vadd.f32 %v6711, %v6799
      %v6801 = vpop.f32.mrf.mxu0
      %v6802 = vadd.f32 %v6713, %v6801
      %6803 = vdwg.mxu0
      %v6804 = vmax.f32 %v6725, 0.0
      %v6805 = vmax.f32 %v6727, 0.0
      %v6806 = vmax.f32 %v6730, 0.0
      %v6807 = vmax.f32 %v6732, 0.0
      %v6808 = vmax.f32 %v6735, 0.0
      %v6809 = vmax.f32 %v6737, 0.0
      %v6810 = vmax.f32 %v6740, 0.0
      %v6811 = vmax.f32 %v6742, 0.0
      %v6812 = vmax.f32 %v6745, 0.0
      %v6813 = vmax.f32 %v6747, 0.0
      %v6814 = vmax.f32 %v6750, 0.0
      %v6815 = vmax.f32 %v6752, 0.0
      %v6816 = vmax.f32 %v6755, 0.0
      %v6817 = vmax.f32 %v6757, 0.0
      %v6818 = vmax.f32 %v6760, 0.0
      %v6819 = vmax.f32 %v6762, 0.0
      %v6820 = vmax.f32 %v6765, 0.0
      %v6821 = vmax.f32 %v6767, 0.0
      %v6822 = vmax.f32 %v6770, 0.0
      %v6823 = vmax.f32 %v6772, 0.0
      %v6824 = vmax.f32 %v6775, 0.0
      %v6825 = vmax.f32 %v6777, 0.0
      %v6826 = vmax.f32 %v6780, 0.0
      %v6827 = vmax.f32 %v6782, 0.0
      %v6828 = vmax.f32 %v6785, 0.0
      %v6829 = vmax.f32 %v6787, 0.0
      %v6830 = vmax.f32 %v6790, 0.0
      %v6831 = vmax.f32 %v6792, 0.0
      %v6832 = vmax.f32 %v6795, 0.0
      %v6833 = vmax.f32 %v6797, 0.0
      %v6834 = vmax.f32 %v6800, 0.0
      %v6835 = vmax.f32 %v6802, 0.0
      %v6836 = vld [vmem:[%s219] sm:$0xff]
      %v6837 = vld [vmem:[%s219 + $0x8] sm:$0xff]
      %v6838 = vld [vmem:[%s219 + $0x10] sm:$0xff]
      %v6839 = vld [vmem:[%s219 + $0x18] sm:$0xff]
      %v6840 = vld [vmem:[%s219 + $0x20] sm:$0xff]
      %v6841 = vld [vmem:[%s219 + $0x28] sm:$0xff]
      %v6842 = vld [vmem:[%s219 + $0x30] sm:$0xff]
      %v6843 = vld [vmem:[%s219 + $0x38] sm:$0xff]
      %v6844 = vld [vmem:[%s219 + $0x40] sm:$0xff]
      %v6845 = vld [vmem:[%s219 + $0x48] sm:$0xff]
      %v6846 = vld [vmem:[%s219 + $0x50] sm:$0xff]
      %v6847 = vld [vmem:[%s219 + $0x58] sm:$0xff]
      %v6848 = vld [vmem:[%s219 + $0x60] sm:$0xff]
      %v6849 = vld [vmem:[%s219 + $0x68] sm:$0xff]
      %v6850 = vld [vmem:[%s219 + $0x70] sm:$0xff]
      %v6851 = vld [vmem:[%s219 + $0x78] sm:$0xff]
      %v6852 = vld [vmem:[%s219 + $0x80] sm:$0xff]
      %v6853 = vld [vmem:[%s219 + $0x88] sm:$0xff]
      %v6854 = vld [vmem:[%s219 + $0x90] sm:$0xff]
      %v6855 = vld [vmem:[%s219 + $0x98] sm:$0xff]
      %v6856 = vld [vmem:[%s219 + $0xa0] sm:$0xff]
      %v6857 = vld [vmem:[%s219 + $0xa8] sm:$0xff]
      %v6858 = vld [vmem:[%s219 + $0xb0] sm:$0xff]
      %v6859 = vld [vmem:[%s219 + $0xb8] sm:$0xff]
      %v6860 = vld [vmem:[%s219 + $0xc0] sm:$0xff]
      %v6861 = vld [vmem:[%s219 + $0xc8] sm:$0xff]
      %v6862 = vld [vmem:[%s219 + $0xd0] sm:$0xff]
      %v6863 = vld [vmem:[%s219 + $0xd8] sm:$0xff]
      %v6864 = vld [vmem:[%s219 + $0xe0] sm:$0xff]
      %v6865 = vld [vmem:[%s219 + $0xe8] sm:$0xff]
      %v6866 = vld [vmem:[%s219 + $0xf0] sm:$0xff]
      %v6867 = vld [vmem:[%s219 + $0xf8] sm:$0xff]
      %v6868 = vadd.f32 %v6804, %v6836
      %v6869 = vadd.f32 %v6805, %v6837
      %v6870 = vadd.f32 %v6806, %v6838
      %v6871 = vadd.f32 %v6807, %v6839
      %v6872 = vadd.f32 %v6808, %v6840
      %v6873 = vadd.f32 %v6809, %v6841
      %v6874 = vadd.f32 %v6810, %v6842
      %v6875 = vadd.f32 %v6811, %v6843
      %v6876 = vadd.f32 %v6812, %v6844
      %v6877 = vadd.f32 %v6813, %v6845
      %v6878 = vadd.f32 %v6814, %v6846
      %v6879 = vadd.f32 %v6815, %v6847
      %v6880 = vadd.f32 %v6816, %v6848
      %v6881 = vadd.f32 %v6817, %v6849
      %v6882 = vadd.f32 %v6818, %v6850
      %v6883 = vadd.f32 %v6819, %v6851
      %v6884 = vadd.f32 %v6820, %v6852
      %v6885 = vadd.f32 %v6821, %v6853
      %v6886 = vadd.f32 %v6822, %v6854
      %v6887 = vadd.f32 %v6823, %v6855
      %v6888 = vadd.f32 %v6824, %v6856
      %v6889 = vadd.f32 %v6825, %v6857
      %v6890 = vadd.f32 %v6826, %v6858
      %v6891 = vadd.f32 %v6827, %v6859
      %v6892 = vadd.f32 %v6828, %v6860
      %v6893 = vadd.f32 %v6829, %v6861
      %v6894 = vadd.f32 %v6830, %v6862
      %v6895 = vadd.f32 %v6831, %v6863
      %v6896 = vadd.f32 %v6832, %v6864
      %v6897 = vadd.f32 %v6833, %v6865
      %v6898 = vadd.f32 %v6834, %v6866
      %v6899 = vadd.f32 %v6835, %v6867
      %vm6900 = vcmask 64512
      %6901 = vst.msk [vmem:[%s224] sm:$0xff] %vm6900, %v6868
      %6902 = vst.msk [vmem:[%s224 + $0x8] sm:$0xff] %vm6900, %v6869
      %6903 = vst.msk [vmem:[%s224 + $0x10] sm:$0xff] %vm6900, %v6870
      %6904 = vst.msk [vmem:[%s224 + $0x18] sm:$0xff] %vm6900, %v6871
      %6905 = vst.msk [vmem:[%s224 + $0x20] sm:$0xff] %vm6900, %v6872
      %6906 = vst.msk [vmem:[%s224 + $0x28] sm:$0xff] %vm6900, %v6873
      %6907 = vst.msk [vmem:[%s224 + $0x30] sm:$0xff] %vm6900, %v6874
      %6908 = vst.msk [vmem:[%s224 + $0x38] sm:$0xff] %vm6900, %v6875
      %6909 = vst.msk [vmem:[%s224 + $0x40] sm:$0xff] %vm6900, %v6876
      %6910 = vst.msk [vmem:[%s224 + $0x48] sm:$0xff] %vm6900, %v6877
      %6911 = vst.msk [vmem:[%s224 + $0x50] sm:$0xff] %vm6900, %v6878
      %6912 = vst.msk [vmem:[%s224 + $0x58] sm:$0xff] %vm6900, %v6879
      %6913 = vst.msk [vmem:[%s224 + $0x60] sm:$0xff] %vm6900, %v6880
      %6914 = vst.msk [vmem:[%s224 + $0x68] sm:$0xff] %vm6900, %v6881
      %6915 = vst.msk [vmem:[%s224 + $0x70] sm:$0xff] %vm6900, %v6882
      %6916 = vst.msk [vmem:[%s224 + $0x78] sm:$0xff] %vm6900, %v6883
      %6917 = vst.msk [vmem:[%s224 + $0x80] sm:$0xff] %vm6900, %v6884
      %6918 = vst.msk [vmem:[%s224 + $0x88] sm:$0xff] %vm6900, %v6885
      %6919 = vst.msk [vmem:[%s224 + $0x90] sm:$0xff] %vm6900, %v6886
      %6920 = vst.msk [vmem:[%s224 + $0x98] sm:$0xff] %vm6900, %v6887
      %6921 = vst.msk [vmem:[%s224 + $0xa0] sm:$0xff] %vm6900, %v6888
      %6922 = vst.msk [vmem:[%s224 + $0xa8] sm:$0xff] %vm6900, %v6889
      %6923 = vst.msk [vmem:[%s224 + $0xb0] sm:$0xff] %vm6900, %v6890
      %6924 = vst.msk [vmem:[%s224 + $0xb8] sm:$0xff] %vm6900, %v6891
      %6925 = vst.msk [vmem:[%s224 + $0xc0] sm:$0xff] %vm6900, %v6892
      %6926 = vst.msk [vmem:[%s224 + $0xc8] sm:$0xff] %vm6900, %v6893
      %6927 = vst.msk [vmem:[%s224 + $0xd0] sm:$0xff] %vm6900, %v6894
      %6928 = vst.msk [vmem:[%s224 + $0xd8] sm:$0xff] %vm6900, %v6895
      %6929 = vst.msk [vmem:[%s224 + $0xe0] sm:$0xff] %vm6900, %v6896
      %6930 = vst.msk [vmem:[%s224 + $0xe8] sm:$0xff] %vm6900, %v6897
      %6931 = vst.msk [vmem:[%s224 + $0xf0] sm:$0xff] %vm6900, %v6898
      %6932 = vst.msk [vmem:[%s224 + $0xf8] sm:$0xff] %vm6900, %v6899
      %p6933 = scmp.lt.s32.totalorder %s16, 1
      %s6934 = scalar_select %p6933, %s16, 1
      %s6935 = smul.addr %s6934, 32
      %s6936 = smul.addr %s6935, 8
      %s6937 = scalar_lea.vmem %s5, %s6936
      // Predicated region
      $region41: #{tpu_custom_call.1} parent=39 // pred_check
        %p6938 = pneg %p144
      $region42: #{tpu_custom_call.1} parent=39 // pred_check_branch
        %6940 = sbr.rel (%p6938) target = $region44
      $region43: #{tpu_custom_call.1} parent=39 // pred_region
        _
      $region44: #{tpu_custom_call.1} parent=39 // pred_fallthru
        _
    $region40: #{tpu_custom_call.1} parent=5 // pred_fallthru
      _
    %p6941 = scmp.le.s32.totalorder 2, %s11
    // Predicated region
    $region45: #{tpu_custom_call.1} parent=5 // pred_check
      %p6942 = pneg %p6941
    $region46: #{tpu_custom_call.1} parent=5 // pred_check_branch
      %6944 = sbr.rel (%p6942) target = $region48
    $region47: #{tpu_custom_call.1} parent=5 // pred_region
      %s6945 = ssub.s32 %s11, 2
      // Predicated region
      $region49: #{tpu_custom_call.1} parent=47 // pred_check
        %p6946 = pneg %p150
      $region50: #{tpu_custom_call.1} parent=47 // pred_check_branch
        %6948 = sbr.rel (%p6946) target = $region52
      $region51: #{tpu_custom_call.1} parent=47 // pred_region
        %p6949 = scmp.lt.s32.totalorder %s17, 1
        %s6950 = scalar_select %p6949, %s17, 1
        %s6951 = smul.addr %s6950, 32
        %s6952 = smul.addr %s6951, 8
        %s6953 = scalar_lea.vmem %s5, %s6952
      $region52: #{tpu_custom_call.1} parent=47 // pred_fallthru
        _
    $region48: #{tpu_custom_call.1} parent=5 // pred_fallthru
      _
  $region6: #{tpu_custom_call.1} parent=0 // loop_footer
    %s15 = sadd.s32 1, %s11
  $region7: #{tpu_custom_call.1} parent=0 // loop_footer_branch
    %10 = sbr.rel target = $region3
  $region8: #{tpu_custom_call.1} parent=0 // loop_exit
    _

</llo_original>
